<compile_context>
chip_gen: v6e
topology: v6e:2x2x1
jax: 0.10.0
libtpu: 0.0.40
codegen_flags: <defaults>
</compile_context>

<pallas_src>
import functools
import math

import jax
import jax.numpy as jnp
from jax.experimental import pallas as pl
from jax.experimental.pallas import tpu as pltpu

FEATURES = 512


def fc_layers_kernel(x_ref, w_ref, b_ref, o_ref, *, n_layers):
    """Fused MLP: all n_layers matmuls + bias + lrelu run inside one kernel.

    w_ref: [L, in, out] with all constant gains pre-folded (see prepare_params).
    b_ref: [L, 1, out], already scaled by lr_mul.
    """
    # Single cast to the matmul operand dtype (bf16 in the fast path, f32 in
    # the exact path).
    h = x_ref[...].astype(w_ref.dtype)
    # n_layers is small & static -> unrolled Python loop (visible to scheduler).
    for layer in range(n_layers):
        # f32 MXU accumulation regardless of the stored weight dtype.
        s = jnp.dot(h, w_ref[layer], preferred_element_type=jnp.float32)
        s = s + b_ref[layer]                      # bias pre-scaled by lr_mul
        if layer != n_layers - 1:
            # leaky_relu(0.2); the sqrt(2) act gain lives in the next layer's
            # weights.  Select stays in f32 (v5e VPU has no bf16 VALU); cast
            # once for the next matmul so no extra f32 copy stays live.
            h = jnp.where(s >= 0.0, s, 0.2 * s).astype(w_ref.dtype)
        else:
            h = s                                 # last layer: 'linear'
    o_ref[...] = h.astype(o_ref.dtype)


def prepare_params(weights, biases, *, lr_mul, weight_dtype=jnp.bfloat16):
    """One-time parameter prep (outside the per-call hot path).

    weights: [L, out, in] (PyTorch nn.Linear layout); biases: [L, out].

    Folds into the stored parameters (scalar scales, numerically lossless):
      * per-layer weight gain  lr_mul / sqrt(in_features)
      * the previous layer's sqrt(2) 'lrelu' gain for layers 1..L-1
      * the lr_mul bias gain.

    Returns w_t: [L, in, out] in weight_dtype, b: [L, 1, out] f32.
    """
    L, f_out, f_in = weights.shape
    assert f_out == FEATURES and f_in == FEATURES
    assert biases.shape == (L, FEATURES)
    weight_gain = lr_mul / math.sqrt(f_in)
    act_gain = math.sqrt(2.0)
    gains = jnp.array([weight_gain] + [weight_gain * act_gain] * (L - 1),
                      dtype=jnp.float32).reshape(L, 1, 1)
    w_t = jnp.transpose(weights.astype(jnp.float32), (0, 2, 1)) * gains
    w_t = w_t.astype(weight_dtype)
    b = (biases.astype(jnp.float32) * lr_mul).reshape(L, 1, FEATURES)
    return w_t, b


def _round_up(x, m):
    return -(-x // m) * m


def _vmem_cap_bytes():
    # Generation-aware physical VMEM (per TensorCore); fall back to the most
    # conservative value (v7x: 64 MiB) if the query is unavailable.
    try:
        return int(pltpu.get_tpu_info().vmem_capacity_bytes)
    except Exception:
        return 64 << 20


def _pallas_forward(x_in, w_t, b, *, tile, vmem_limit, weight_pipeline):
    B_pad, F = x_in.shape
    L = w_t.shape[0]
    kernel = functools.partial(fc_layers_kernel, n_layers=L)
    extra = {} if weight_pipeline is None else {"pipeline_mode": weight_pipeline}
    return pl.pallas_call(
        kernel,
        out_shape=jax.ShapeDtypeStruct((B_pad, F), x_in.dtype),
        grid_spec=pltpu.PrefetchScalarGridSpec(
            num_scalar_prefetch=0,
            grid=(B_pad // tile,),
            in_specs=[
                pl.BlockSpec((tile, F), lambda i: (i, 0)),
                # Constant index maps: weights/biases are fetched once and stay
                # resident in VMEM across all batch tiles (no re-DMA per tile).
                pl.BlockSpec((L, F, F), lambda i: (0, 0, 0), **extra),
                pl.BlockSpec((L, 1, F), lambda i: (0, 0, 0), **extra),
            ],
            out_specs=pl.BlockSpec((tile, F), lambda i: (i, 0)),
        ),
        compiler_params=pltpu.CompilerParams(
            dimension_semantics=("parallel",),
            vmem_limit_bytes=vmem_limit,
        ),
    )(x_in, w_t, b)


def fc_layers(x, w_t, b, *, batch_tile=512):
    """x: [B, 512]; w_t: [L, 512, 512] ([in, out], gains folded, see
    prepare_params); b: [L, 1, 512] (already scaled by lr_mul)."""
    B, F = x.shape
    L = w_t.shape[0]
    assert F == FEATURES and w_t.shape[1:] == (F, F) and b.shape == (L, 1, F)

    if B <= batch_tile:
        # Single block covering the whole batch (full-dim blocks are legal).
        tile = B
        num_tiles = 1
        x_in = x
    else:
        # Large batches: even number of tiles so both v7x TensorCores get
        # equal work ("parallel" grid axis shards tiles across cores), each
        # tile <= batch_tile rows and a multiple of 8.
        num_tiles = pl.cdiv(B, batch_tile)
        if num_tiles % 2:
            num_tiles += 1
        tile = _round_up(pl.cdiv(B, num_tiles), 8)
        pad = num_tiles * tile - B
        x_in = jnp.pad(x, ((0, pad), (0, 0))) if pad else x
    B_pad = x_in.shape[0]

    # VMEM budget: weight/bias stack (worst case double-buffered), double
    # buffered in/out activation tiles, in-kernel f32 intermediates
    # (h, s, matmul-operand copy) plus headroom; clamped to 75% of the
    # generation's physical per-core VMEM (v7x only has 64 MiB).
    w_bytes = L * F * F * w_t.dtype.itemsize
    b_bytes = L * F * 4
    act_bytes = tile * F * 4
    budget = 2 * (w_bytes + b_bytes) + 4 * act_bytes + 3 * act_bytes + (4 << 20)
    cap = max(int(0.75 * _vmem_cap_bytes()), 16 << 20)
    vmem_limit = int(min(max(budget, 16 << 20), cap))

    try:
        # Weights/biases never change across the grid -> single-buffer them
        # (no point double-buffering a constant resident block).
        out = _pallas_forward(x_in, w_t, b, tile=tile, vmem_limit=vmem_limit,
                              weight_pipeline=pl.Buffered(1))
    except Exception:
        # Fallback if this JAX build rejects single-buffering on these specs.
        out = _pallas_forward(x_in, w_t, b, tile=tile, vmem_limit=vmem_limit,
                              weight_pipeline=None)
    return out[:B] if B_pad != B else out


def fc_layers_ref(x, weights, biases, *, lr_mul):
    """Pure-JAX reference mirroring the PyTorch module (f32 throughout)."""
    weight_gain = lr_mul / math.sqrt(FEATURES)
    h = x.astype(jnp.float32)
    L = weights.shape[0]
    for layer in range(L):
        w = weights[layer].astype(jnp.float32) * weight_gain  # [out, in]
        b = biases[layer].astype(jnp.float32) * lr_mul
        h = h @ w.T + b[None, :]
        if layer != L - 1:
            h = jnp.where(h >= 0.0, h, 0.2 * h) * math.sqrt(2.0)
    return h.astype(x.dtype)


if __name__ == "__main__":
    n_layers = 4
    lr_mul = 0.01
    B_small = 8      # small demo batch; the module fixes features at 512
    B_large = 1100   # exercises the multi-tile / even-grid / padding path

    key = jax.random.PRNGKey(0)
    kx, kxl, kw = jax.random.split(key, 3)

    # Module __init__: weight = randn([out, in]) / lr_multiplier; bias = zeros.
    x_small = jax.random.normal(kx, (B_small, FEATURES), dtype=jnp.float32)
    x_large = jax.random.normal(kxl, (B_large, FEATURES), dtype=jnp.float32)
    weights = (
        jax.random.normal(kw, (n_layers, FEATURES, FEATURES), dtype=jnp.float32)
        / lr_mul
    )
    biases = jnp.zeros((n_layers, FEATURES), dtype=jnp.float32)

    ref_small = fc_layers_ref(x_small, weights, biases, lr_mul=lr_mul)
    ref_large = fc_layers_ref(x_large, weights, biases, lr_mul=lr_mul)

    # Exact-precision path (f32 weights): tight check vs the reference.
    w32, b32 = prepare_params(weights, biases, lr_mul=lr_mul,
                              weight_dtype=jnp.float32)
    out32 = jax.block_until_ready(fc_layers(x_small, w32, b32))
    assert out32.shape == (B_small, FEATURES)
    assert jnp.allclose(out32, ref_small, atol=1e-3, rtol=1e-3), \
        "f32 mismatch vs ref"

    # Performance path (bf16 weights/activations, f32 MXU accumulation):
    # deliberate precision trade -> looser tolerance.
    wbf, bbf = prepare_params(weights, biases, lr_mul=lr_mul,
                              weight_dtype=jnp.bfloat16)
    outbf = jax.block_until_ready(fc_layers(x_small, wbf, bbf))
    assert outbf.shape == (B_small, FEATURES)
    assert jnp.allclose(outbf, ref_small, atol=1e-1, rtol=1e-1), \
        "bf16 mismatch vs ref (small batch)"

    # Large batch: multi-tile grid (even tile count for v7x megacore) + pad.
    outbf_l = jax.block_until_ready(fc_layers(x_large, wbf, bbf))
    assert outbf_l.shape == (B_large, FEATURES)
    assert jnp.allclose(outbf_l, ref_large, atol=1e-1, rtol=1e-1), \
        "bf16 mismatch vs ref (large batch)"

    print("KERNEL_OK")
</pallas_src>

<mosaic_0001>
module attributes {stable_mosaic.version = 11 : i64} {
  func.func @fc_layers_kernel(%arg0: i32, %arg1: memref<8x512xf32, #tpu.memory_space<vmem>>, %arg2: memref<4x512x512xf32, #tpu.memory_space<vmem>>, %arg3: memref<4x1x512xf32, #tpu.memory_space<vmem>>, %arg4: memref<8x512xf32, #tpu.memory_space<vmem>>) attributes {dimension_semantics = [#tpu.dimension_semantics<parallel>], iteration_bounds = array<i64: 1>, scalar_prefetch = 0 : i64, scratch_operands = 0 : i64, tpu.core_type = #tpu.core_type<tc>, window_params = [{transform_indices = @transform_0, window_bounds = array<i64: 8, 512>}, {pipeline_mode = #tpu.pipeline_mode<synchronous>, transform_indices = @transform_1, window_bounds = array<i64: 4, 512, 512>}, {pipeline_mode = #tpu.pipeline_mode<synchronous>, transform_indices = @transform_2, window_bounds = array<i64: 4, 1, 512>}, {transform_indices = @transform_3, window_bounds = array<i64: 8, 512>}]} {
    %c0 = arith.constant 0 : index
    %c0_0 = arith.constant 0 : index
    %0 = vector.load %arg1[%c0, %c0_0] : memref<8x512xf32, #tpu.memory_space<vmem>>, vector<8x512xf32>
    %c0_1 = arith.constant 0 : index
    %c0_2 = arith.constant 0 : index
    %c0_3 = arith.constant 0 : index
    %1 = vector.load %arg2[%c0_1, %c0_2, %c0_3] : memref<4x512x512xf32, #tpu.memory_space<vmem>>, vector<1x512x512xf32>
    %2 = vector.shape_cast %1 : vector<1x512x512xf32> to vector<512x512xf32>
    %cst = arith.constant dense<0.000000e+00> : vector<8x512xf32>
    %3 = tpu.matmul %0, %2, %cst {dimension_numbers = #tpu.dot_dimension_numbers<[1], [0], [0], [1], [0, 0, 1, 1], [], []>} : vector<8x512xf32>, vector<512x512xf32>, vector<8x512xf32> -> vector<8x512xf32>
    %c0_4 = arith.constant 0 : index
    %c0_5 = arith.constant 0 : index
    %c0_6 = arith.constant 0 : index
    %4 = vector.load %arg3[%c0_4, %c0_5, %c0_6] : memref<4x1x512xf32, #tpu.memory_space<vmem>>, vector<1x1x512xf32>
    %5 = vector.shape_cast %4 : vector<1x1x512xf32> to vector<1x512xf32>
    %6 = vector.broadcast %5 : vector<1x512xf32> to vector<8x512xf32>
    %7 = arith.addf %3, %6 : vector<8x512xf32>
    %cst_7 = arith.constant 0.000000e+00 : f32
    %8 = vector.broadcast %cst_7 : f32 to vector<8x512xf32>
    %9 = arith.cmpf oge, %7, %8 : vector<8x512xf32>
    %cst_8 = arith.constant 2.000000e-01 : f32
    %10 = vector.broadcast %cst_8 : f32 to vector<8x512xf32>
    %11 = arith.mulf %10, %7 : vector<8x512xf32>
    %12 = arith.select %9, %7, %11 : vector<8x512xi1>, vector<8x512xf32>
    %c1 = arith.constant 1 : index
    %c0_9 = arith.constant 0 : index
    %c0_10 = arith.constant 0 : index
    %13 = vector.load %arg2[%c1, %c0_9, %c0_10] : memref<4x512x512xf32, #tpu.memory_space<vmem>>, vector<1x512x512xf32>
    %14 = vector.shape_cast %13 : vector<1x512x512xf32> to vector<512x512xf32>
    %cst_11 = arith.constant dense<0.000000e+00> : vector<8x512xf32>
    %15 = tpu.matmul %12, %14, %cst_11 {dimension_numbers = #tpu.dot_dimension_numbers<[1], [0], [0], [1], [0, 0, 1, 1], [], []>} : vector<8x512xf32>, vector<512x512xf32>, vector<8x512xf32> -> vector<8x512xf32>
    %c1_12 = arith.constant 1 : index
    %c0_13 = arith.constant 0 : index
    %c0_14 = arith.constant 0 : index
    %16 = vector.load %arg3[%c1_12, %c0_13, %c0_14] : memref<4x1x512xf32, #tpu.memory_space<vmem>>, vector<1x1x512xf32>
    %17 = vector.shape_cast %16 : vector<1x1x512xf32> to vector<1x512xf32>
    %18 = vector.broadcast %17 : vector<1x512xf32> to vector<8x512xf32>
    %19 = arith.addf %15, %18 : vector<8x512xf32>
    %cst_15 = arith.constant 0.000000e+00 : f32
    %20 = vector.broadcast %cst_15 : f32 to vector<8x512xf32>
    %21 = arith.cmpf oge, %19, %20 : vector<8x512xf32>
    %cst_16 = arith.constant 2.000000e-01 : f32
    %22 = vector.broadcast %cst_16 : f32 to vector<8x512xf32>
    %23 = arith.mulf %22, %19 : vector<8x512xf32>
    %24 = arith.select %21, %19, %23 : vector<8x512xi1>, vector<8x512xf32>
    %c2 = arith.constant 2 : index
    %c0_17 = arith.constant 0 : index
    %c0_18 = arith.constant 0 : index
    %25 = vector.load %arg2[%c2, %c0_17, %c0_18] : memref<4x512x512xf32, #tpu.memory_space<vmem>>, vector<1x512x512xf32>
    %26 = vector.shape_cast %25 : vector<1x512x512xf32> to vector<512x512xf32>
    %cst_19 = arith.constant dense<0.000000e+00> : vector<8x512xf32>
    %27 = tpu.matmul %24, %26, %cst_19 {dimension_numbers = #tpu.dot_dimension_numbers<[1], [0], [0], [1], [0, 0, 1, 1], [], []>} : vector<8x512xf32>, vector<512x512xf32>, vector<8x512xf32> -> vector<8x512xf32>
    %c2_20 = arith.constant 2 : index
    %c0_21 = arith.constant 0 : index
    %c0_22 = arith.constant 0 : index
    %28 = vector.load %arg3[%c2_20, %c0_21, %c0_22] : memref<4x1x512xf32, #tpu.memory_space<vmem>>, vector<1x1x512xf32>
    %29 = vector.shape_cast %28 : vector<1x1x512xf32> to vector<1x512xf32>
    %30 = vector.broadcast %29 : vector<1x512xf32> to vector<8x512xf32>
    %31 = arith.addf %27, %30 : vector<8x512xf32>
    %cst_23 = arith.constant 0.000000e+00 : f32
    %32 = vector.broadcast %cst_23 : f32 to vector<8x512xf32>
    %33 = arith.cmpf oge, %31, %32 : vector<8x512xf32>
    %cst_24 = arith.constant 2.000000e-01 : f32
    %34 = vector.broadcast %cst_24 : f32 to vector<8x512xf32>
    %35 = arith.mulf %34, %31 : vector<8x512xf32>
    %36 = arith.select %33, %31, %35 : vector<8x512xi1>, vector<8x512xf32>
    %c3 = arith.constant 3 : index
    %c0_25 = arith.constant 0 : index
    %c0_26 = arith.constant 0 : index
    %37 = vector.load %arg2[%c3, %c0_25, %c0_26] : memref<4x512x512xf32, #tpu.memory_space<vmem>>, vector<1x512x512xf32>
    %38 = vector.shape_cast %37 : vector<1x512x512xf32> to vector<512x512xf32>
    %cst_27 = arith.constant dense<0.000000e+00> : vector<8x512xf32>
    %39 = tpu.matmul %36, %38, %cst_27 {dimension_numbers = #tpu.dot_dimension_numbers<[1], [0], [0], [1], [0, 0, 1, 1], [], []>} : vector<8x512xf32>, vector<512x512xf32>, vector<8x512xf32> -> vector<8x512xf32>
    %c3_28 = arith.constant 3 : index
    %c0_29 = arith.constant 0 : index
    %c0_30 = arith.constant 0 : index
    %40 = vector.load %arg3[%c3_28, %c0_29, %c0_30] : memref<4x1x512xf32, #tpu.memory_space<vmem>>, vector<1x1x512xf32>
    %41 = vector.shape_cast %40 : vector<1x1x512xf32> to vector<1x512xf32>
    %42 = vector.broadcast %41 : vector<1x512xf32> to vector<8x512xf32>
    %43 = arith.addf %39, %42 : vector<8x512xf32>
    %c0_31 = arith.constant 0 : index
    %c0_32 = arith.constant 0 : index
    %44 = vector.load %arg4[%c0_31, %c0_32] : memref<8x512xf32, #tpu.memory_space<vmem>>, vector<8x512xf32>
    tpu.vector_store %arg4[%c0_31, %c0_32], %43 {strides = array<i32>} : memref<8x512xf32, #tpu.memory_space<vmem>>, vector<8x512xf32>,
    return
  }
  func.func @transform_0(%arg0: i32) -> (i32, i32) {
    %c0_i32 = arith.constant 0 : i32
    %c0_i32_0 = arith.constant 0 : i32
    return %arg0, %c0_i32 : i32, i32
  }
  func.func @transform_1(%arg0: i32) -> (i32, i32, i32) {
    %c0_i32 = arith.constant 0 : i32
    %c0_i32_0 = arith.constant 0 : i32
    %c0_i32_1 = arith.constant 0 : i32
    %c0_i32_2 = arith.constant 0 : i32
    return %c0_i32, %c0_i32_0, %c0_i32_1 : i32, i32, i32
  }
  func.func @transform_2(%arg0: i32) -> (i32, i32, i32) {
    %c0_i32 = arith.constant 0 : i32
    %c0_i32_0 = arith.constant 0 : i32
    %c0_i32_1 = arith.constant 0 : i32
    %c0_i32_2 = arith.constant 0 : i32
    return %c0_i32, %c0_i32_0, %c0_i32_1 : i32, i32, i32
  }
  func.func @transform_3(%arg0: i32) -> (i32, i32) {
    %c0_i32 = arith.constant 0 : i32
    %c0_i32_0 = arith.constant 0 : i32
    return %arg0, %c0_i32 : i32, i32
  }
}

module attributes {stable_mosaic.version = 11 : i64} {
  func.func @fc_layers_kernel(%arg0: i32, %arg1: memref<8x512xf32, #tpu.memory_space<vmem>>, %arg2: memref<4x512x512xf32, #tpu.memory_space<vmem>>, %arg3: memref<4x1x512xf32, #tpu.memory_space<vmem>>, %arg4: memref<8x512xf32, #tpu.memory_space<vmem>>) attributes {dimension_semantics = [#tpu.dimension_semantics<parallel>], iteration_bounds = array<i64: 1>, scalar_prefetch = 0 : i64, scratch_operands = 0 : i64, tpu.core_type = #tpu.core_type<tc>, window_params = [{transform_indices = @transform_0, window_bounds = array<i64: 8, 512>}, {pipeline_mode = #tpu.pipeline_mode<synchronous>, transform_indices = @transform_1, window_bounds = array<i64: 4, 512, 512>}, {pipeline_mode = #tpu.pipeline_mode<synchronous>, transform_indices = @transform_2, window_bounds = array<i64: 4, 1, 512>}, {transform_indices = @transform_3, window_bounds = array<i64: 8, 512>}]} {
    %c0 = arith.constant 0 : index
    %c0_0 = arith.constant 0 : index
    %0 = vector.load %arg1[%c0, %c0_0] : memref<8x512xf32, #tpu.memory_space<vmem>>, vector<8x512xf32>
    %c0_1 = arith.constant 0 : index
    %c0_2 = arith.constant 0 : index
    %c0_3 = arith.constant 0 : index
    %1 = vector.load %arg2[%c0_1, %c0_2, %c0_3] : memref<4x512x512xf32, #tpu.memory_space<vmem>>, vector<1x512x512xf32>
    %2 = vector.shape_cast %1 : vector<1x512x512xf32> to vector<512x512xf32>
    %cst = arith.constant dense<0.000000e+00> : vector<8x512xf32>
    %3 = tpu.matmul %0, %2, %cst {dimension_numbers = #tpu.dot_dimension_numbers<[1], [0], [0], [1], [0, 0, 1, 1], [], []>} : vector<8x512xf32>, vector<512x512xf32>, vector<8x512xf32> -> vector<8x512xf32>
    %c0_4 = arith.constant 0 : index
    %c0_5 = arith.constant 0 : index
    %c0_6 = arith.constant 0 : index
    %4 = vector.load %arg3[%c0_4, %c0_5, %c0_6] : memref<4x1x512xf32, #tpu.memory_space<vmem>>, vector<1x1x512xf32>
    %5 = vector.shape_cast %4 : vector<1x1x512xf32> to vector<1x512xf32>
    %6 = vector.broadcast %5 : vector<1x512xf32> to vector<8x512xf32>
    %7 = arith.addf %3, %6 : vector<8x512xf32>
    %cst_7 = arith.constant 0.000000e+00 : f32
    %8 = vector.broadcast %cst_7 : f32 to vector<8x512xf32>
    %9 = arith.cmpf oge, %7, %8 : vector<8x512xf32>
    %cst_8 = arith.constant 2.000000e-01 : f32
    %10 = vector.broadcast %cst_8 : f32 to vector<8x512xf32>
    %11 = arith.mulf %10, %7 : vector<8x512xf32>
    %12 = arith.select %9, %7, %11 : vector<8x512xi1>, vector<8x512xf32>
    %c1 = arith.constant 1 : index
    %c0_9 = arith.constant 0 : index
    %c0_10 = arith.constant 0 : index
    %13 = vector.load %arg2[%c1, %c0_9, %c0_10] : memref<4x512x512xf32, #tpu.memory_space<vmem>>, vector<1x512x512xf32>
    %14 = vector.shape_cast %13 : vector<1x512x512xf32> to vector<512x512xf32>
    %cst_11 = arith.constant dense<0.000000e+00> : vector<8x512xf32>
    %15 = tpu.matmul %12, %14, %cst_11 {dimension_numbers = #tpu.dot_dimension_numbers<[1], [0], [0], [1], [0, 0, 1, 1], [], []>} : vector<8x512xf32>, vector<512x512xf32>, vector<8x512xf32> -> vector<8x512xf32>
    %c1_12 = arith.constant 1 : index
    %c0_13 = arith.constant 0 : index
    %c0_14 = arith.constant 0 : index
    %16 = vector.load %arg3[%c1_12, %c0_13, %c0_14] : memref<4x1x512xf32, #tpu.memory_space<vmem>>, vector<1x1x512xf32>
    %17 = vector.shape_cast %16 : vector<1x1x512xf32> to vector<1x512xf32>
    %18 = vector.broadcast %17 : vector<1x512xf32> to vector<8x512xf32>
    %19 = arith.addf %15, %18 : vector<8x512xf32>
    %cst_15 = arith.constant 0.000000e+00 : f32
    %20 = vector.broadcast %cst_15 : f32 to vector<8x512xf32>
    %21 = arith.cmpf oge, %19, %20 : vector<8x512xf32>
    %cst_16 = arith.constant 2.000000e-01 : f32
    %22 = vector.broadcast %cst_16 : f32 to vector<8x512xf32>
    %23 = arith.mulf %22, %19 : vector<8x512xf32>
    %24 = arith.select %21, %19, %23 : vector<8x512xi1>, vector<8x512xf32>
    %c2 = arith.constant 2 : index
    %c0_17 = arith.constant 0 : index
    %c0_18 = arith.constant 0 : index
    %25 = vector.load %arg2[%c2, %c0_17, %c0_18] : memref<4x512x512xf32, #tpu.memory_space<vmem>>, vector<1x512x512xf32>
    %26 = vector.shape_cast %25 : vector<1x512x512xf32> to vector<512x512xf32>
    %cst_19 = arith.constant dense<0.000000e+00> : vector<8x512xf32>
    %27 = tpu.matmul %24, %26, %cst_19 {dimension_numbers = #tpu.dot_dimension_numbers<[1], [0], [0], [1], [0, 0, 1, 1], [], []>} : vector<8x512xf32>, vector<512x512xf32>, vector<8x512xf32> -> vector<8x512xf32>
    %c2_20 = arith.constant 2 : index
    %c0_21 = arith.constant 0 : index
    %c0_22 = arith.constant 0 : index
    %28 = vector.load %arg3[%c2_20, %c0_21, %c0_22] : memref<4x1x512xf32, #tpu.memory_space<vmem>>, vector<1x1x512xf32>
    %29 = vector.shape_cast %28 : vector<1x1x512xf32> to vector<1x512xf32>
    %30 = vector.broadcast %29 : vector<1x512xf32> to vector<8x512xf32>
    %31 = arith.addf %27, %30 : vector<8x512xf32>
    %cst_23 = arith.constant 0.000000e+00 : f32
    %32 = vector.broadcast %cst_23 : f32 to vector<8x512xf32>
    %33 = arith.cmpf oge, %31, %32 : vector<8x512xf32>
    %cst_24 = arith.constant 2.000000e-01 : f32
    %34 = vector.broadcast %cst_24 : f32 to vector<8x512xf32>
    %35 = arith.mulf %34, %31 : vector<8x512xf32>
    %36 = arith.select %33, %31, %35 : vector<8x512xi1>, vector<8x512xf32>
    %c3 = arith.constant 3 : index
    %c0_25 = arith.constant 0 : index
    %c0_26 = arith.constant 0 : index
    %37 = vector.load %arg2[%c3, %c0_25, %c0_26] : memref<4x512x512xf32, #tpu.memory_space<vmem>>, vector<1x512x512xf32>
    %38 = vector.shape_cast %37 : vector<1x512x512xf32> to vector<512x512xf32>
    %cst_27 = arith.constant dense<0.000000e+00> : vector<8x512xf32>
    %39 = tpu.matmul %36, %38, %cst_27 {dimension_numbers = #tpu.dot_dimension_numbers<[1], [0], [0], [1], [0, 0, 1, 1], [], []>} : vector<8x512xf32>, vector<512x512xf32>, vector<8x512xf32> -> vector<8x512xf32>
    %c3_28 = arith.constant 3 : index
    %c0_29 = arith.constant 0 : index
    %c0_30 = arith.constant 0 : index
    %40 = vector.load %arg3[%c3_28, %c0_29, %c0_30] : memref<4x1x512xf32, #tpu.memory_space<vmem>>, vector<1x1x512xf32>
    %41 = vector.shape_cast %40 : vector<1x1x512xf32> to vector<1x512xf32>
    %42 = vector.broadcast %41 : vector<1x512xf32> to vector<8x512xf32>
    %43 = arith.addf %39, %42 : vector<8x512xf32>
    %c0_31 = arith.constant 0 : index
    %c0_32 = arith.constant 0 : index
    %44 = vector.load %arg4[%c0_31, %c0_32] : memref<8x512xf32, #tpu.memory_space<vmem>>, vector<8x512xf32>
    tpu.vector_store %arg4[%c0_31, %c0_32], %43 {strides = array<i32>} : memref<8x512xf32, #tpu.memory_space<vmem>>, vector<8x512xf32>,
    return
  }
  func.func @transform_0(%arg0: i32) -> (i32, i32) {
    %c0_i32 = arith.constant 0 : i32
    %c0_i32_0 = arith.constant 0 : i32
    return %arg0, %c0_i32 : i32, i32
  }
  func.func @transform_1(%arg0: i32) -> (i32, i32, i32) {
    %c0_i32 = arith.constant 0 : i32
    %c0_i32_0 = arith.constant 0 : i32
    %c0_i32_1 = arith.constant 0 : i32
    %c0_i32_2 = arith.constant 0 : i32
    return %c0_i32, %c0_i32_0, %c0_i32_1 : i32, i32, i32
  }
  func.func @transform_2(%arg0: i32) -> (i32, i32, i32) {
    %c0_i32 = arith.constant 0 : i32
    %c0_i32_0 = arith.constant 0 : i32
    %c0_i32_1 = arith.constant 0 : i32
    %c0_i32_2 = arith.constant 0 : i32
    return %c0_i32, %c0_i32_0, %c0_i32_1 : i32, i32, i32
  }
  func.func @transform_3(%arg0: i32) -> (i32, i32) {
    %c0_i32 = arith.constant 0 : i32
    %c0_i32_0 = arith.constant 0 : i32
    return %arg0, %c0_i32 : i32, i32
  }
}

</mosaic_0001>

<llo_original>
// kernel: tpu_custom_call.1
$region0: #{tpu_custom_call.1}
  #allocation0 [shape = 'u32[]', space=smem, size = 0x4, offset = 0x4, fixed_abs, tag = 'smem constant byte address 0x4 - core index']
  #allocation1 [shape = 'u32[144,128]{1,0:T(1,128)}', space=vmem, size = 0x12000, scoped, tag = 'internal scratch']
  %s0 = inlined_call_operand.hbm [shape: f32[8,512], index: 0, kind: input, shape index: {}]
  %s1 = inlined_call_operand.hbm [shape: f32[4,512,512], index: 1, kind: input, shape index: {}]
  %s2 = inlined_call_operand.hbm [shape: f32[4,1,512], index: 2, kind: input, shape index: {}]
  %s3 = inlined_call_operand.hbm [shape: f32[8,512], index: 3, kind: output, shape index: {}]
  %s4 = sld [smem:[#allocation0]]
  $region34: #{tpu_custom_call.1} parent=0
    _
  %s6 = ssub.s32 1, %s4
  %s7 = scalar_select 0, %s6, %s4
  $region1: #{tpu_custom_call.1} parent=0
    #allocation2 [shape = 'u8[16384]{0}', space=vmem, size = 0x4000, scoped, tag = 'input window, operand 0, single buffered']
    #allocation3 [shape = 's32[1]{0}', space=sflag, size = 0x4, scoped, tag = 'scoped memory for tpu_custom_call.1']
    #allocation4 [shape = 's32[1]{0}', space=sflag, size = 0x4, scoped, tag = 'scoped memory for tpu_custom_call.1']
    #allocation5 [shape = 'u8[4194304]{0}', space=vmem, size = 0x400000, scoped, tag = 'input window, operand 1, single buffered']
    #allocation6 [shape = 's32[1]{0}', space=sflag, size = 0x4, scoped, tag = 'scoped memory for tpu_custom_call.1']
    #allocation7 [shape = 'u8[8192]{0}', space=vmem, size = 0x2000, scoped, tag = 'input window, operand 2, single buffered']
    #allocation8 [shape = 'u8[16384]{0}', space=vmem, size = 0x4000, scoped, tag = 'output window, operand 0, single buffered']
    %8 = vsyncpa [#allocation3], 0
    %9 = vsyncpa [#allocation6], 0
    %10 = vsyncpa [#allocation4], 0
    // Predicated region
    $region2: #{tpu_custom_call.1} parent=1 // pred_check
      _
    $region3: #{tpu_custom_call.1} parent=1 // pred_check_branch
      %12 = sbr.rel (0) target = $region5
    $region4: #{tpu_custom_call.1} parent=1 // pred_region
      %s14 = ssub.s32 512, 512
      %15 = vsyncadd [#allocation3], %s14
      %s17 = sshll.u32 [#allocation2], 4
      %s18 = int_to_ptr.vmem [resolvable:$true] %s17
      %20 = dma.hbm_to_vmem [thread:$0]  %s0, 512, %s18, [#allocation3]
    $region5: #{tpu_custom_call.1} parent=1 // pred_fallthru
      _
    // Predicated region
    $region6: #{tpu_custom_call.1} parent=1 // pred_check
      _
    $region7: #{tpu_custom_call.1} parent=1 // pred_check_branch
      %22 = sbr.rel (0) target = $region9
    $region8: #{tpu_custom_call.1} parent=1 // pred_region
      %s24 = ssub.s32 131072, 131072
      %25 = vsyncadd [#allocation6], %s24
      %s26 = sshll.u32 [#allocation5], 4
      %s27 = int_to_ptr.vmem [resolvable:$true] %s26
      %32 = dma.hbm_to_vmem [thread:$0]  %s1, 131072, %s27, [#allocation6], 512, 512, 32
    $region9: #{tpu_custom_call.1} parent=1 // pred_fallthru
      _
    // Predicated region
    $region10: #{tpu_custom_call.1} parent=1 // pred_check
      _
    $region11: #{tpu_custom_call.1} parent=1 // pred_check_branch
      %34 = sbr.rel (0) target = $region13
    $region12: #{tpu_custom_call.1} parent=1 // pred_region
      %s36 = ssub.s32 256, 256
      %37 = vsyncadd [#allocation6], %s36
      %s38 = sshll.u32 [#allocation7], 4
      %s39 = int_to_ptr.vmem [resolvable:$true] %s38
      %44 = dma.hbm_to_vmem [thread:$0]  %s2, 256, %s39, [#allocation6], 64, 64, 4
    $region13: #{tpu_custom_call.1} parent=1 // pred_fallthru
      _
    // Predicated region
    $region14: #{tpu_custom_call.1} parent=1 // pred_check
      _
    $region15: #{tpu_custom_call.1} parent=1 // pred_check_branch
      %46 = sbr.rel (0) target = $region17
    $region16: #{tpu_custom_call.1} parent=1 // pred_region
      %47 = dma.done [#allocation3], 512
    $region17: #{tpu_custom_call.1} parent=1 // pred_fallthru
      _
    // Predicated region
    $region18: #{tpu_custom_call.1} parent=1 // pred_check
      _
    $region19: #{tpu_custom_call.1} parent=1 // pred_check_branch
      %49 = sbr.rel (0) target = $region21
    $region20: #{tpu_custom_call.1} parent=1 // pred_region
      %50 = dma.done [#allocation6], 131072
    $region21: #{tpu_custom_call.1} parent=1 // pred_fallthru
      _
    // Predicated region
    $region22: #{tpu_custom_call.1} parent=1 // pred_check
      _
    $region23: #{tpu_custom_call.1} parent=1 // pred_check_branch
      %52 = sbr.rel (0) target = $region25
    $region24: #{tpu_custom_call.1} parent=1 // pred_region
      %53 = dma.done [#allocation6], 256
    $region25: #{tpu_custom_call.1} parent=1 // pred_fallthru
      _
    %v54 = vld [vmem:[#allocation2] sm:$0xff]
    %v55 = vld [vmem:[#allocation2 + $0x8] sm:$0xff]
    %v56 = vld [vmem:[#allocation2 + $0x10] sm:$0xff]
    %v57 = vld [vmem:[#allocation2 + $0x18] sm:$0xff]
    %v58 = vld [vmem:[#allocation5] sm:$0xff]
    %v59 = vld [vmem:[#allocation5 + $0x8] sm:$0xff]
    %v60 = vld [vmem:[#allocation5 + $0x10] sm:$0xff]
    %v61 = vld [vmem:[#allocation5 + $0x18] sm:$0xff]
    %v62 = vld [vmem:[#allocation5 + $0x20] sm:$0xff]
    %v63 = vld [vmem:[#allocation5 + $0x28] sm:$0xff]
    %v64 = vld [vmem:[#allocation5 + $0x30] sm:$0xff]
    %v65 = vld [vmem:[#allocation5 + $0x38] sm:$0xff]
    %v66 = vld [vmem:[#allocation5 + $0x40] sm:$0xff]
    %v67 = vld [vmem:[#allocation5 + $0x48] sm:$0xff]
    %v68 = vld [vmem:[#allocation5 + $0x50] sm:$0xff]
    %v69 = vld [vmem:[#allocation5 + $0x58] sm:$0xff]
    %v70 = vld [vmem:[#allocation5 + $0x60] sm:$0xff]
    %v71 = vld [vmem:[#allocation5 + $0x68] sm:$0xff]
    %v72 = vld [vmem:[#allocation5 + $0x70] sm:$0xff]
    %v73 = vld [vmem:[#allocation5 + $0x78] sm:$0xff]
    %v74 = vld [vmem:[#allocation5 + $0x80] sm:$0xff]
    %v75 = vld [vmem:[#allocation5 + $0x88] sm:$0xff]
    %v76 = vld [vmem:[#allocation5 + $0x90] sm:$0xff]
    %v77 = vld [vmem:[#allocation5 + $0x98] sm:$0xff]
    %v78 = vld [vmem:[#allocation5 + $0xa0] sm:$0xff]
    %v79 = vld [vmem:[#allocation5 + $0xa8] sm:$0xff]
    %v80 = vld [vmem:[#allocation5 + $0xb0] sm:$0xff]
    %v81 = vld [vmem:[#allocation5 + $0xb8] sm:$0xff]
    %v82 = vld [vmem:[#allocation5 + $0xc0] sm:$0xff]
    %v83 = vld [vmem:[#allocation5 + $0xc8] sm:$0xff]
    %v84 = vld [vmem:[#allocation5 + $0xd0] sm:$0xff]
    %v85 = vld [vmem:[#allocation5 + $0xd8] sm:$0xff]
    %v86 = vld [vmem:[#allocation5 + $0xe0] sm:$0xff]
    %v87 = vld [vmem:[#allocation5 + $0xe8] sm:$0xff]
    %v88 = vld [vmem:[#allocation5 + $0xf0] sm:$0xff]
    %v89 = vld [vmem:[#allocation5 + $0xf8] sm:$0xff]
    %v90 = vld [vmem:[#allocation5 + $0x100] sm:$0xff]
    %v91 = vld [vmem:[#allocation5 + $0x108] sm:$0xff]
    %v92 = vld [vmem:[#allocation5 + $0x110] sm:$0xff]
    %v93 = vld [vmem:[#allocation5 + $0x118] sm:$0xff]
    %v94 = vld [vmem:[#allocation5 + $0x120] sm:$0xff]
    %v95 = vld [vmem:[#allocation5 + $0x128] sm:$0xff]
    %v96 = vld [vmem:[#allocation5 + $0x130] sm:$0xff]
    %v97 = vld [vmem:[#allocation5 + $0x138] sm:$0xff]
    %v98 = vld [vmem:[#allocation5 + $0x140] sm:$0xff]
    %v99 = vld [vmem:[#allocation5 + $0x148] sm:$0xff]
    %v100 = vld [vmem:[#allocation5 + $0x150] sm:$0xff]
    %v101 = vld [vmem:[#allocation5 + $0x158] sm:$0xff]
    %v102 = vld [vmem:[#allocation5 + $0x160] sm:$0xff]
    %v103 = vld [vmem:[#allocation5 + $0x168] sm:$0xff]
    %v104 = vld [vmem:[#allocation5 + $0x170] sm:$0xff]
    %v105 = vld [vmem:[#allocation5 + $0x178] sm:$0xff]
    %v106 = vld [vmem:[#allocation5 + $0x180] sm:$0xff]
    %v107 = vld [vmem:[#allocation5 + $0x188] sm:$0xff]
    %v108 = vld [vmem:[#allocation5 + $0x190] sm:$0xff]
    %v109 = vld [vmem:[#allocation5 + $0x198] sm:$0xff]
    %v110 = vld [vmem:[#allocation5 + $0x1a0] sm:$0xff]
    %v111 = vld [vmem:[#allocation5 + $0x1a8] sm:$0xff]
    %v112 = vld [vmem:[#allocation5 + $0x1b0] sm:$0xff]
    %v113 = vld [vmem:[#allocation5 + $0x1b8] sm:$0xff]
    %v114 = vld [vmem:[#allocation5 + $0x1c0] sm:$0xff]
    %v115 = vld [vmem:[#allocation5 + $0x1c8] sm:$0xff]
    %v116 = vld [vmem:[#allocation5 + $0x1d0] sm:$0xff]
    %v117 = vld [vmem:[#allocation5 + $0x1d8] sm:$0xff]
    %v118 = vld [vmem:[#allocation5 + $0x1e0] sm:$0xff]
    %v119 = vld [vmem:[#allocation5 + $0x1e8] sm:$0xff]
    %v120 = vld [vmem:[#allocation5 + $0x1f0] sm:$0xff]
    %v121 = vld [vmem:[#allocation5 + $0x1f8] sm:$0xff]
    %v122 = vld [vmem:[#allocation5 + $0x200] sm:$0xff]
    %v123 = vld [vmem:[#allocation5 + $0x208] sm:$0xff]
    %v124 = vld [vmem:[#allocation5 + $0x210] sm:$0xff]
    %v125 = vld [vmem:[#allocation5 + $0x218] sm:$0xff]
    %v126 = vld [vmem:[#allocation5 + $0x220] sm:$0xff]
    %v127 = vld [vmem:[#allocation5 + $0x228] sm:$0xff]
    %v128 = vld [vmem:[#allocation5 + $0x230] sm:$0xff]
    %v129 = vld [vmem:[#allocation5 + $0x238] sm:$0xff]
    %v130 = vld [vmem:[#allocation5 + $0x240] sm:$0xff]
    %v131 = vld [vmem:[#allocation5 + $0x248] sm:$0xff]
    %v132 = vld [vmem:[#allocation5 + $0x250] sm:$0xff]
    %v133 = vld [vmem:[#allocation5 + $0x258] sm:$0xff]
    %v134 = vld [vmem:[#allocation5 + $0x260] sm:$0xff]
    %v135 = vld [vmem:[#allocation5 + $0x268] sm:$0xff]
    %v136 = vld [vmem:[#allocation5 + $0x270] sm:$0xff]
    %v137 = vld [vmem:[#allocation5 + $0x278] sm:$0xff]
    %v138 = vld [vmem:[#allocation5 + $0x280] sm:$0xff]
    %v139 = vld [vmem:[#allocation5 + $0x288] sm:$0xff]
    %v140 = vld [vmem:[#allocation5 + $0x290] sm:$0xff]
    %v141 = vld [vmem:[#allocation5 + $0x298] sm:$0xff]
    %v142 = vld [vmem:[#allocation5 + $0x2a0] sm:$0xff]
    %v143 = vld [vmem:[#allocation5 + $0x2a8] sm:$0xff]
    %v144 = vld [vmem:[#allocation5 + $0x2b0] sm:$0xff]
    %v145 = vld [vmem:[#allocation5 + $0x2b8] sm:$0xff]
    %v146 = vld [vmem:[#allocation5 + $0x2c0] sm:$0xff]
    %v147 = vld [vmem:[#allocation5 + $0x2c8] sm:$0xff]
    %v148 = vld [vmem:[#allocation5 + $0x2d0] sm:$0xff]
    %v149 = vld [vmem:[#allocation5 + $0x2d8] sm:$0xff]
    %v150 = vld [vmem:[#allocation5 + $0x2e0] sm:$0xff]
    %v151 = vld [vmem:[#allocation5 + $0x2e8] sm:$0xff]
    %v152 = vld [vmem:[#allocation5 + $0x2f0] sm:$0xff]
    %v153 = vld [vmem:[#allocation5 + $0x2f8] sm:$0xff]
    %v154 = vld [vmem:[#allocation5 + $0x300] sm:$0xff]
    %v155 = vld [vmem:[#allocation5 + $0x308] sm:$0xff]
    %v156 = vld [vmem:[#allocation5 + $0x310] sm:$0xff]
    %v157 = vld [vmem:[#allocation5 + $0x318] sm:$0xff]
    %v158 = vld [vmem:[#allocation5 + $0x320] sm:$0xff]
    %v159 = vld [vmem:[#allocation5 + $0x328] sm:$0xff]
    %v160 = vld [vmem:[#allocation5 + $0x330] sm:$0xff]
    %v161 = vld [vmem:[#allocation5 + $0x338] sm:$0xff]
    %v162 = vld [vmem:[#allocation5 + $0x340] sm:$0xff]
    %v163 = vld [vmem:[#allocation5 + $0x348] sm:$0xff]
    %v164 = vld [vmem:[#allocation5 + $0x350] sm:$0xff]
    %v165 = vld [vmem:[#allocation5 + $0x358] sm:$0xff]
    %v166 = vld [vmem:[#allocation5 + $0x360] sm:$0xff]
    %v167 = vld [vmem:[#allocation5 + $0x368] sm:$0xff]
    %v168 = vld [vmem:[#allocation5 + $0x370] sm:$0xff]
    %v169 = vld [vmem:[#allocation5 + $0x378] sm:$0xff]
    %v170 = vld [vmem:[#allocation5 + $0x380] sm:$0xff]
    %v171 = vld [vmem:[#allocation5 + $0x388] sm:$0xff]
    %v172 = vld [vmem:[#allocation5 + $0x390] sm:$0xff]
    %v173 = vld [vmem:[#allocation5 + $0x398] sm:$0xff]
    %v174 = vld [vmem:[#allocation5 + $0x3a0] sm:$0xff]
    %v175 = vld [vmem:[#allocation5 + $0x3a8] sm:$0xff]
    %v176 = vld [vmem:[#allocation5 + $0x3b0] sm:$0xff]
    %v177 = vld [vmem:[#allocation5 + $0x3b8] sm:$0xff]
    %v178 = vld [vmem:[#allocation5 + $0x3c0] sm:$0xff]
    %v179 = vld [vmem:[#allocation5 + $0x3c8] sm:$0xff]
    %v180 = vld [vmem:[#allocation5 + $0x3d0] sm:$0xff]
    %v181 = vld [vmem:[#allocation5 + $0x3d8] sm:$0xff]
    %v182 = vld [vmem:[#allocation5 + $0x3e0] sm:$0xff]
    %v183 = vld [vmem:[#allocation5 + $0x3e8] sm:$0xff]
    %v184 = vld [vmem:[#allocation5 + $0x3f0] sm:$0xff]
    %v185 = vld [vmem:[#allocation5 + $0x3f8] sm:$0xff]
    %v186 = vld [vmem:[#allocation5 + $0x400] sm:$0xff]
    %v187 = vld [vmem:[#allocation5 + $0x408] sm:$0xff]
    %v188 = vld [vmem:[#allocation5 + $0x410] sm:$0xff]
    %v189 = vld [vmem:[#allocation5 + $0x418] sm:$0xff]
    %v190 = vld [vmem:[#allocation5 + $0x420] sm:$0xff]
    %v191 = vld [vmem:[#allocation5 + $0x428] sm:$0xff]
    %v192 = vld [vmem:[#allocation5 + $0x430] sm:$0xff]
    %v193 = vld [vmem:[#allocation5 + $0x438] sm:$0xff]
    %v194 = vld [vmem:[#allocation5 + $0x440] sm:$0xff]
    %v195 = vld [vmem:[#allocation5 + $0x448] sm:$0xff]
    %v196 = vld [vmem:[#allocation5 + $0x450] sm:$0xff]
    %v197 = vld [vmem:[#allocation5 + $0x458] sm:$0xff]
    %v198 = vld [vmem:[#allocation5 + $0x460] sm:$0xff]
    %v199 = vld [vmem:[#allocation5 + $0x468] sm:$0xff]
    %v200 = vld [vmem:[#allocation5 + $0x470] sm:$0xff]
    %v201 = vld [vmem:[#allocation5 + $0x478] sm:$0xff]
    %v202 = vld [vmem:[#allocation5 + $0x480] sm:$0xff]
    %v203 = vld [vmem:[#allocation5 + $0x488] sm:$0xff]
    %v204 = vld [vmem:[#allocation5 + $0x490] sm:$0xff]
    %v205 = vld [vmem:[#allocation5 + $0x498] sm:$0xff]
    %v206 = vld [vmem:[#allocation5 + $0x4a0] sm:$0xff]
    %v207 = vld [vmem:[#allocation5 + $0x4a8] sm:$0xff]
    %v208 = vld [vmem:[#allocation5 + $0x4b0] sm:$0xff]
    %v209 = vld [vmem:[#allocation5 + $0x4b8] sm:$0xff]
    %v210 = vld [vmem:[#allocation5 + $0x4c0] sm:$0xff]
    %v211 = vld [vmem:[#allocation5 + $0x4c8] sm:$0xff]
    %v212 = vld [vmem:[#allocation5 + $0x4d0] sm:$0xff]
    %v213 = vld [vmem:[#allocation5 + $0x4d8] sm:$0xff]
    %v214 = vld [vmem:[#allocation5 + $0x4e0] sm:$0xff]
    %v215 = vld [vmem:[#allocation5 + $0x4e8] sm:$0xff]
    %v216 = vld [vmem:[#allocation5 + $0x4f0] sm:$0xff]
    %v217 = vld [vmem:[#allocation5 + $0x4f8] sm:$0xff]
    %v218 = vld [vmem:[#allocation5 + $0x500] sm:$0xff]
    %v219 = vld [vmem:[#allocation5 + $0x508] sm:$0xff]
    %v220 = vld [vmem:[#allocation5 + $0x510] sm:$0xff]
    %v221 = vld [vmem:[#allocation5 + $0x518] sm:$0xff]
    %v222 = vld [vmem:[#allocation5 + $0x520] sm:$0xff]
    %v223 = vld [vmem:[#allocation5 + $0x528] sm:$0xff]
    %v224 = vld [vmem:[#allocation5 + $0x530] sm:$0xff]
    %v225 = vld [vmem:[#allocation5 + $0x538] sm:$0xff]
    %v226 = vld [vmem:[#allocation5 + $0x540] sm:$0xff]
    %v227 = vld [vmem:[#allocation5 + $0x548] sm:$0xff]
    %v228 = vld [vmem:[#allocation5 + $0x550] sm:$0xff]
    %v229 = vld [vmem:[#allocation5 + $0x558] sm:$0xff]
    %v230 = vld [vmem:[#allocation5 + $0x560] sm:$0xff]
    %v231 = vld [vmem:[#allocation5 + $0x568] sm:$0xff]
    %v232 = vld [vmem:[#allocation5 + $0x570] sm:$0xff]
    %v233 = vld [vmem:[#allocation5 + $0x578] sm:$0xff]
    %v234 = vld [vmem:[#allocation5 + $0x580] sm:$0xff]
    %v235 = vld [vmem:[#allocation5 + $0x588] sm:$0xff]
    %v236 = vld [vmem:[#allocation5 + $0x590] sm:$0xff]
    %v237 = vld [vmem:[#allocation5 + $0x598] sm:$0xff]
    %v238 = vld [vmem:[#allocation5 + $0x5a0] sm:$0xff]
    %v239 = vld [vmem:[#allocation5 + $0x5a8] sm:$0xff]
    %v240 = vld [vmem:[#allocation5 + $0x5b0] sm:$0xff]
    %v241 = vld [vmem:[#allocation5 + $0x5b8] sm:$0xff]
    %v242 = vld [vmem:[#allocation5 + $0x5c0] sm:$0xff]
    %v243 = vld [vmem:[#allocation5 + $0x5c8] sm:$0xff]
    %v244 = vld [vmem:[#allocation5 + $0x5d0] sm:$0xff]
    %v245 = vld [vmem:[#allocation5 + $0x5d8] sm:$0xff]
    %v246 = vld [vmem:[#allocation5 + $0x5e0] sm:$0xff]
    %v247 = vld [vmem:[#allocation5 + $0x5e8] sm:$0xff]
    %v248 = vld [vmem:[#allocation5 + $0x5f0] sm:$0xff]
    %v249 = vld [vmem:[#allocation5 + $0x5f8] sm:$0xff]
    %v250 = vld [vmem:[#allocation5 + $0x600] sm:$0xff]
    %v251 = vld [vmem:[#allocation5 + $0x608] sm:$0xff]
    %v252 = vld [vmem:[#allocation5 + $0x610] sm:$0xff]
    %v253 = vld [vmem:[#allocation5 + $0x618] sm:$0xff]
    %v254 = vld [vmem:[#allocation5 + $0x620] sm:$0xff]
    %v255 = vld [vmem:[#allocation5 + $0x628] sm:$0xff]
    %v256 = vld [vmem:[#allocation5 + $0x630] sm:$0xff]
    %v257 = vld [vmem:[#allocation5 + $0x638] sm:$0xff]
    %v258 = vld [vmem:[#allocation5 + $0x640] sm:$0xff]
    %v259 = vld [vmem:[#allocation5 + $0x648] sm:$0xff]
    %v260 = vld [vmem:[#allocation5 + $0x650] sm:$0xff]
    %v261 = vld [vmem:[#allocation5 + $0x658] sm:$0xff]
    %v262 = vld [vmem:[#allocation5 + $0x660] sm:$0xff]
    %v263 = vld [vmem:[#allocation5 + $0x668] sm:$0xff]
    %v264 = vld [vmem:[#allocation5 + $0x670] sm:$0xff]
    %v265 = vld [vmem:[#allocation5 + $0x678] sm:$0xff]
    %v266 = vld [vmem:[#allocation5 + $0x680] sm:$0xff]
    %v267 = vld [vmem:[#allocation5 + $0x688] sm:$0xff]
    %v268 = vld [vmem:[#allocation5 + $0x690] sm:$0xff]
    %v269 = vld [vmem:[#allocation5 + $0x698] sm:$0xff]
    %v270 = vld [vmem:[#allocation5 + $0x6a0] sm:$0xff]
    %v271 = vld [vmem:[#allocation5 + $0x6a8] sm:$0xff]
    %v272 = vld [vmem:[#allocation5 + $0x6b0] sm:$0xff]
    %v273 = vld [vmem:[#allocation5 + $0x6b8] sm:$0xff]
    %v274 = vld [vmem:[#allocation5 + $0x6c0] sm:$0xff]
    %v275 = vld [vmem:[#allocation5 + $0x6c8] sm:$0xff]
    %v276 = vld [vmem:[#allocation5 + $0x6d0] sm:$0xff]
    %v277 = vld [vmem:[#allocation5 + $0x6d8] sm:$0xff]
    %v278 = vld [vmem:[#allocation5 + $0x6e0] sm:$0xff]
    %v279 = vld [vmem:[#allocation5 + $0x6e8] sm:$0xff]
    %v280 = vld [vmem:[#allocation5 + $0x6f0] sm:$0xff]
    %v281 = vld [vmem:[#allocation5 + $0x6f8] sm:$0xff]
    %v282 = vld [vmem:[#allocation5 + $0x700] sm:$0xff]
    %v283 = vld [vmem:[#allocation5 + $0x708] sm:$0xff]
    %v284 = vld [vmem:[#allocation5 + $0x710] sm:$0xff]
    %v285 = vld [vmem:[#allocation5 + $0x718] sm:$0xff]
    %v286 = vld [vmem:[#allocation5 + $0x720] sm:$0xff]
    %v287 = vld [vmem:[#allocation5 + $0x728] sm:$0xff]
    %v288 = vld [vmem:[#allocation5 + $0x730] sm:$0xff]
    %v289 = vld [vmem:[#allocation5 + $0x738] sm:$0xff]
    %v290 = vld [vmem:[#allocation5 + $0x740] sm:$0xff]
    %v291 = vld [vmem:[#allocation5 + $0x748] sm:$0xff]
    %v292 = vld [vmem:[#allocation5 + $0x750] sm:$0xff]
    %v293 = vld [vmem:[#allocation5 + $0x758] sm:$0xff]
    %v294 = vld [vmem:[#allocation5 + $0x760] sm:$0xff]
    %v295 = vld [vmem:[#allocation5 + $0x768] sm:$0xff]
    %v296 = vld [vmem:[#allocation5 + $0x770] sm:$0xff]
    %v297 = vld [vmem:[#allocation5 + $0x778] sm:$0xff]
    %v298 = vld [vmem:[#allocation5 + $0x780] sm:$0xff]
    %v299 = vld [vmem:[#allocation5 + $0x788] sm:$0xff]
    %v300 = vld [vmem:[#allocation5 + $0x790] sm:$0xff]
    %v301 = vld [vmem:[#allocation5 + $0x798] sm:$0xff]
    %v302 = vld [vmem:[#allocation5 + $0x7a0] sm:$0xff]
    %v303 = vld [vmem:[#allocation5 + $0x7a8] sm:$0xff]
    %v304 = vld [vmem:[#allocation5 + $0x7b0] sm:$0xff]
    %v305 = vld [vmem:[#allocation5 + $0x7b8] sm:$0xff]
    %v306 = vld [vmem:[#allocation5 + $0x7c0] sm:$0xff]
    %v307 = vld [vmem:[#allocation5 + $0x7c8] sm:$0xff]
    %v308 = vld [vmem:[#allocation5 + $0x7d0] sm:$0xff]
    %v309 = vld [vmem:[#allocation5 + $0x7d8] sm:$0xff]
    %v310 = vld [vmem:[#allocation5 + $0x7e0] sm:$0xff]
    %v311 = vld [vmem:[#allocation5 + $0x7e8] sm:$0xff]
    %v312 = vld [vmem:[#allocation5 + $0x7f0] sm:$0xff]
    %v313 = vld [vmem:[#allocation5 + $0x7f8] sm:$0xff]
    %v314 = vld [vmem:[#allocation7] sm:$0xf]
    %v316 = vlaneseq
    %v317 = vshrl.u32 %v316, 7
    %v318 = vsub.s32 0, %v317
    %v319 = vrot.slane %v314, %v318
    %v320 = vlaneseq
    %v321 = vshrl.u32 %v320, 7
    %v322 = vsub.s32 1, %v321
    %v323 = vrot.slane %v314, %v322
    %v324 = vlaneseq
    %v325 = vshrl.u32 %v324, 7
    %v326 = vsub.s32 2, %v325
    %v327 = vrot.slane %v314, %v326
    %v328 = vlaneseq
    %v329 = vshrl.u32 %v328, 7
    %v330 = vsub.s32 3, %v329
    %v331 = vrot.slane %v314, %v330
    %336 = vmatprep.subr.mxu0 %v119
    %337 = vmatpush1.msra.mxu0 %v118
    %338 = vmatprep.subr.mxu0 %v115
    %339 = vmatpush1.msra.mxu0 %v114
    %340 = vmatprep.subr.mxu0 %v111
    %341 = vmatpush1.msra.mxu0 %v110
    %342 = vmatprep.subr.mxu0 %v107
    %343 = vmatpush1.msra.mxu0 %v106
    %344 = vmatprep.subr.mxu0 %v103
    %345 = vmatpush1.msra.mxu0 %v102
    %346 = vmatprep.subr.mxu0 %v99
    %347 = vmatpush1.msra.mxu0 %v98
    %348 = vmatprep.subr.mxu0 %v95
    %349 = vmatpush1.msra.mxu0 %v94
    %350 = vmatprep.subr.mxu0 %v91
    %351 = vmatpush1.msra.mxu0 %v90
    %352 = vmatprep.subr.mxu0 %v87
    %353 = vmatpush1.msra.mxu0 %v86
    %354 = vmatprep.subr.mxu0 %v83
    %355 = vmatpush1.msra.mxu0 %v82
    %356 = vmatprep.subr.mxu0 %v79
    %357 = vmatpush1.msra.mxu0 %v78
    %358 = vmatprep.subr.mxu0 %v75
    %359 = vmatpush1.msra.mxu0 %v74
    %360 = vmatprep.subr.mxu0 %v71
    %361 = vmatpush1.msra.mxu0 %v70
    %362 = vmatprep.subr.mxu0 %v67
    %363 = vmatpush1.msra.mxu0 %v66
    %364 = vmatprep.subr.mxu0 %v63
    %365 = vmatpush1.msra.mxu0 %v62
    %366 = vmatprep.subr.mxu0 %v59
    %367 = vmatpush1.msra.mxu0 %v58
    %368 = vmatprep.subr.mxu0 %v183
    %369 = vmatpush2.msra.mxu0 %v182
    %370 = vmatprep.subr.mxu0 %v179
    %371 = vmatpush2.msra.mxu0 %v178
    %372 = vmatprep.subr.mxu0 %v175
    %373 = vmatpush2.msra.mxu0 %v174
    %374 = vmatprep.subr.mxu0 %v171
    %375 = vmatpush2.msra.mxu0 %v170
    %376 = vmatprep.subr.mxu0 %v167
    %377 = vmatpush2.msra.mxu0 %v166
    %378 = vmatprep.subr.mxu0 %v163
    %379 = vmatpush2.msra.mxu0 %v162
    %380 = vmatprep.subr.mxu0 %v159
    %381 = vmatpush2.msra.mxu0 %v158
    %382 = vmatprep.subr.mxu0 %v155
    %383 = vmatpush2.msra.mxu0 %v154
    %384 = vmatprep.subr.mxu0 %v151
    %385 = vmatpush2.msra.mxu0 %v150
    %386 = vmatprep.subr.mxu0 %v147
    %387 = vmatpush2.msra.mxu0 %v146
    %388 = vmatprep.subr.mxu0 %v143
    %389 = vmatpush2.msra.mxu0 %v142
    %390 = vmatprep.subr.mxu0 %v139
    %391 = vmatpush2.msra.mxu0 %v138
    %392 = vmatprep.subr.mxu0 %v135
    %393 = vmatpush2.msra.mxu0 %v134
    %394 = vmatprep.subr.mxu0 %v131
    %395 = vmatpush2.msra.mxu0 %v130
    %396 = vmatprep.subr.mxu0 %v127
    %397 = vmatpush2.msra.mxu0 %v126
    %398 = vmatprep.subr.mxu0 %v123
    %399 = vmatpush2.msra.mxu0 %v122
    %400 = vmatprep.mubr.f32.mxu0 %v55
    %401 = vmatmul.mubr.f32.gmra.mxu0 %v54
    %v402 = vpop.f32.mrf.mxu0
    %v403 = vadd.f32 %v319, %v402
    %v404 = vpop.f32.mrf.mxu0
    %v405 = vadd.f32 %v323, %v404
    %406 = vdwg.mxu0
    %407 = vmatprep.subr.mxu0 %v247
    %408 = vmatpush1.msra.mxu0 %v246
    %409 = vmatprep.subr.mxu0 %v243
    %410 = vmatpush1.msra.mxu0 %v242
    %411 = vmatprep.subr.mxu0 %v239
    %412 = vmatpush1.msra.mxu0 %v238
    %413 = vmatprep.subr.mxu0 %v235
    %414 = vmatpush1.msra.mxu0 %v234
    %415 = vmatprep.subr.mxu0 %v231
    %416 = vmatpush1.msra.mxu0 %v230
    %417 = vmatprep.subr.mxu0 %v227
    %418 = vmatpush1.msra.mxu0 %v226
    %419 = vmatprep.subr.mxu0 %v223
    %420 = vmatpush1.msra.mxu0 %v222
    %421 = vmatprep.subr.mxu0 %v219
    %422 = vmatpush1.msra.mxu0 %v218
    %423 = vmatprep.subr.mxu0 %v215
    %424 = vmatpush1.msra.mxu0 %v214
    %425 = vmatprep.subr.mxu0 %v211
    %426 = vmatpush1.msra.mxu0 %v210
    %427 = vmatprep.subr.mxu0 %v207
    %428 = vmatpush1.msra.mxu0 %v206
    %429 = vmatprep.subr.mxu0 %v203
    %430 = vmatpush1.msra.mxu0 %v202
    %431 = vmatprep.subr.mxu0 %v199
    %432 = vmatpush1.msra.mxu0 %v198
    %433 = vmatprep.subr.mxu0 %v195
    %434 = vmatpush1.msra.mxu0 %v194
    %435 = vmatprep.subr.mxu0 %v191
    %436 = vmatpush1.msra.mxu0 %v190
    %437 = vmatprep.subr.mxu0 %v187
    %438 = vmatpush1.msra.mxu0 %v186
    %439 = vmatprep.subr.mxu0 %v311
    %440 = vmatpush2.msra.mxu0 %v310
    %441 = vmatprep.subr.mxu0 %v307
    %442 = vmatpush2.msra.mxu0 %v306
    %443 = vmatprep.subr.mxu0 %v303
    %444 = vmatpush2.msra.mxu0 %v302
    %445 = vmatprep.subr.mxu0 %v299
    %446 = vmatpush2.msra.mxu0 %v298
    %447 = vmatprep.subr.mxu0 %v295
    %448 = vmatpush2.msra.mxu0 %v294
    %449 = vmatprep.subr.mxu0 %v291
    %450 = vmatpush2.msra.mxu0 %v290
    %451 = vmatprep.subr.mxu0 %v287
    %452 = vmatpush2.msra.mxu0 %v286
    %453 = vmatprep.subr.mxu0 %v283
    %454 = vmatpush2.msra.mxu0 %v282
    %455 = vmatprep.subr.mxu0 %v279
    %456 = vmatpush2.msra.mxu0 %v278
    %457 = vmatprep.subr.mxu0 %v275
    %458 = vmatpush2.msra.mxu0 %v274
    %459 = vmatprep.subr.mxu0 %v271
    %460 = vmatpush2.msra.mxu0 %v270
    %461 = vmatprep.subr.mxu0 %v267
    %462 = vmatpush2.msra.mxu0 %v266
    %463 = vmatprep.subr.mxu0 %v263
    %464 = vmatpush2.msra.mxu0 %v262
    %465 = vmatprep.subr.mxu0 %v259
    %466 = vmatpush2.msra.mxu0 %v258
    %467 = vmatprep.subr.mxu0 %v255
    %468 = vmatpush2.msra.mxu0 %v254
    %469 = vmatprep.subr.mxu0 %v251
    %470 = vmatpush2.msra.mxu0 %v250
    %471 = vmatprep.mubr.f32.mxu0 %v57
    %472 = vmatmul.mubr.f32.gmra.mxu0 %v56
    %v473 = vpop.f32.mrf.mxu0
    %v474 = vadd.f32 %v403, %v473
    %v475 = vpop.f32.mrf.mxu0
    %v476 = vadd.f32 %v405, %v475
    %477 = vdwg.mxu0
    %478 = vmatprep.subr.mxu0 %v121
    %479 = vmatpush1.msra.mxu0 %v120
    %480 = vmatprep.subr.mxu0 %v117
    %481 = vmatpush1.msra.mxu0 %v116
    %482 = vmatprep.subr.mxu0 %v113
    %483 = vmatpush1.msra.mxu0 %v112
    %484 = vmatprep.subr.mxu0 %v109
    %485 = vmatpush1.msra.mxu0 %v108
    %486 = vmatprep.subr.mxu0 %v105
    %487 = vmatpush1.msra.mxu0 %v104
    %488 = vmatprep.subr.mxu0 %v101
    %489 = vmatpush1.msra.mxu0 %v100
    %490 = vmatprep.subr.mxu0 %v97
    %491 = vmatpush1.msra.mxu0 %v96
    %492 = vmatprep.subr.mxu0 %v93
    %493 = vmatpush1.msra.mxu0 %v92
    %494 = vmatprep.subr.mxu0 %v89
    %495 = vmatpush1.msra.mxu0 %v88
    %496 = vmatprep.subr.mxu0 %v85
    %497 = vmatpush1.msra.mxu0 %v84
    %498 = vmatprep.subr.mxu0 %v81
    %499 = vmatpush1.msra.mxu0 %v80
    %500 = vmatprep.subr.mxu0 %v77
    %501 = vmatpush1.msra.mxu0 %v76
    %502 = vmatprep.subr.mxu0 %v73
    %503 = vmatpush1.msra.mxu0 %v72
    %504 = vmatprep.subr.mxu0 %v69
    %505 = vmatpush1.msra.mxu0 %v68
    %506 = vmatprep.subr.mxu0 %v65
    %507 = vmatpush1.msra.mxu0 %v64
    %508 = vmatprep.subr.mxu0 %v61
    %509 = vmatpush1.msra.mxu0 %v60
    %510 = vmatprep.subr.mxu0 %v185
    %511 = vmatpush2.msra.mxu0 %v184
    %512 = vmatprep.subr.mxu0 %v181
    %513 = vmatpush2.msra.mxu0 %v180
    %514 = vmatprep.subr.mxu0 %v177
    %515 = vmatpush2.msra.mxu0 %v176
    %516 = vmatprep.subr.mxu0 %v173
    %517 = vmatpush2.msra.mxu0 %v172
    %518 = vmatprep.subr.mxu0 %v169
    %519 = vmatpush2.msra.mxu0 %v168
    %520 = vmatprep.subr.mxu0 %v165
    %521 = vmatpush2.msra.mxu0 %v164
    %522 = vmatprep.subr.mxu0 %v161
    %523 = vmatpush2.msra.mxu0 %v160
    %524 = vmatprep.subr.mxu0 %v157
    %525 = vmatpush2.msra.mxu0 %v156
    %526 = vmatprep.subr.mxu0 %v153
    %527 = vmatpush2.msra.mxu0 %v152
    %528 = vmatprep.subr.mxu0 %v149
    %529 = vmatpush2.msra.mxu0 %v148
    %530 = vmatprep.subr.mxu0 %v145
    %531 = vmatpush2.msra.mxu0 %v144
    %532 = vmatprep.subr.mxu0 %v141
    %533 = vmatpush2.msra.mxu0 %v140
    %534 = vmatprep.subr.mxu0 %v137
    %535 = vmatpush2.msra.mxu0 %v136
    %536 = vmatprep.subr.mxu0 %v133
    %537 = vmatpush2.msra.mxu0 %v132
    %538 = vmatprep.subr.mxu0 %v129
    %539 = vmatpush2.msra.mxu0 %v128
    %540 = vmatprep.subr.mxu0 %v125
    %541 = vmatpush2.msra.mxu0 %v124
    %542 = vmatprep.mubr.f32.mxu0 %v55
    %543 = vmatmul.mubr.f32.gmra.mxu0 %v54
    %v544 = vpop.f32.mrf.mxu0
    %v545 = vadd.f32 %v327, %v544
    %v546 = vpop.f32.mrf.mxu0
    %v547 = vadd.f32 %v331, %v546
    %548 = vdwg.mxu0
    %549 = vmatprep.subr.mxu0 %v249
    %550 = vmatpush1.msra.mxu0 %v248
    %551 = vmatprep.subr.mxu0 %v245
    %552 = vmatpush1.msra.mxu0 %v244
    %553 = vmatprep.subr.mxu0 %v241
    %554 = vmatpush1.msra.mxu0 %v240
    %555 = vmatprep.subr.mxu0 %v237
    %556 = vmatpush1.msra.mxu0 %v236
    %557 = vmatprep.subr.mxu0 %v233
    %558 = vmatpush1.msra.mxu0 %v232
    %559 = vmatprep.subr.mxu0 %v229
    %560 = vmatpush1.msra.mxu0 %v228
    %561 = vmatprep.subr.mxu0 %v225
    %562 = vmatpush1.msra.mxu0 %v224
    %563 = vmatprep.subr.mxu0 %v221
    %564 = vmatpush1.msra.mxu0 %v220
    %565 = vmatprep.subr.mxu0 %v217
    %566 = vmatpush1.msra.mxu0 %v216
    %567 = vmatprep.subr.mxu0 %v213
    %568 = vmatpush1.msra.mxu0 %v212
    %569 = vmatprep.subr.mxu0 %v209
    %570 = vmatpush1.msra.mxu0 %v208
    %571 = vmatprep.subr.mxu0 %v205
    %572 = vmatpush1.msra.mxu0 %v204
    %573 = vmatprep.subr.mxu0 %v201
    %574 = vmatpush1.msra.mxu0 %v200
    %575 = vmatprep.subr.mxu0 %v197
    %576 = vmatpush1.msra.mxu0 %v196
    %577 = vmatprep.subr.mxu0 %v193
    %578 = vmatpush1.msra.mxu0 %v192
    %579 = vmatprep.subr.mxu0 %v189
    %580 = vmatpush1.msra.mxu0 %v188
    %581 = vmatprep.subr.mxu0 %v313
    %582 = vmatpush2.msra.mxu0 %v312
    %583 = vmatprep.subr.mxu0 %v309
    %584 = vmatpush2.msra.mxu0 %v308
    %585 = vmatprep.subr.mxu0 %v305
    %586 = vmatpush2.msra.mxu0 %v304
    %587 = vmatprep.subr.mxu0 %v301
    %588 = vmatpush2.msra.mxu0 %v300
    %589 = vmatprep.subr.mxu0 %v297
    %590 = vmatpush2.msra.mxu0 %v296
    %591 = vmatprep.subr.mxu0 %v293
    %592 = vmatpush2.msra.mxu0 %v292
    %593 = vmatprep.subr.mxu0 %v289
    %594 = vmatpush2.msra.mxu0 %v288
    %595 = vmatprep.subr.mxu0 %v285
    %596 = vmatpush2.msra.mxu0 %v284
    %597 = vmatprep.subr.mxu0 %v281
    %598 = vmatpush2.msra.mxu0 %v280
    %599 = vmatprep.subr.mxu0 %v277
    %600 = vmatpush2.msra.mxu0 %v276
    %601 = vmatprep.subr.mxu0 %v273
    %602 = vmatpush2.msra.mxu0 %v272
    %603 = vmatprep.subr.mxu0 %v269
    %604 = vmatpush2.msra.mxu0 %v268
    %605 = vmatprep.subr.mxu0 %v265
    %606 = vmatpush2.msra.mxu0 %v264
    %607 = vmatprep.subr.mxu0 %v261
    %608 = vmatpush2.msra.mxu0 %v260
    %609 = vmatprep.subr.mxu0 %v257
    %610 = vmatpush2.msra.mxu0 %v256
    %611 = vmatprep.subr.mxu0 %v253
    %612 = vmatpush2.msra.mxu0 %v252
    %613 = vmatprep.mubr.f32.mxu0 %v57
    %614 = vmatmul.mubr.f32.gmra.mxu0 %v56
    %v615 = vpop.f32.mrf.mxu0
    %v616 = vadd.f32 %v545, %v615
    %v617 = vpop.f32.mrf.mxu0
    %v618 = vadd.f32 %v547, %v617
    %619 = vdwg.mxu0
    %vm620 = vcmp.ge.f32.partialorder %v474, 0.0
    %vm621 = vcmp.ge.f32.partialorder %v476, 0.0
    %vm622 = vcmp.ge.f32.partialorder %v616, 0.0
    %vm623 = vcmp.ge.f32.partialorder %v618, 0.0
    %v624 = vmul.f32 %v474, 0.2
    %v625 = vmul.f32 %v476, 0.2
    %v626 = vmul.f32 %v616, 0.2
    %v627 = vmul.f32 %v618, 0.2
    %v628 = vsel %vm620, %v474, %v624
    %v629 = vsel %vm621, %v476, %v625
    %v630 = vsel %vm622, %v616, %v626
    %v631 = vsel %vm623, %v618, %v627
    %s632 = scalar_lea.vmem [#allocation5], 2048
    %v633 = vld [vmem:[%s632] sm:$0xff]
    %v634 = vld [vmem:[%s632 + $0x8] sm:$0xff]
    %v635 = vld [vmem:[%s632 + $0x10] sm:$0xff]
    %v636 = vld [vmem:[%s632 + $0x18] sm:$0xff]
    %v637 = vld [vmem:[%s632 + $0x20] sm:$0xff]
    %v638 = vld [vmem:[%s632 + $0x28] sm:$0xff]
    %v639 = vld [vmem:[%s632 + $0x30] sm:$0xff]
    %v640 = vld [vmem:[%s632 + $0x38] sm:$0xff]
    %v641 = vld [vmem:[%s632 + $0x40] sm:$0xff]
    %v642 = vld [vmem:[%s632 + $0x48] sm:$0xff]
    %v643 = vld [vmem:[%s632 + $0x50] sm:$0xff]
    %v644 = vld [vmem:[%s632 + $0x58] sm:$0xff]
    %v645 = vld [vmem:[%s632 + $0x60] sm:$0xff]
    %v646 = vld [vmem:[%s632 + $0x68] sm:$0xff]
    %v647 = vld [vmem:[%s632 + $0x70] sm:$0xff]
    %v648 = vld [vmem:[%s632 + $0x78] sm:$0xff]
    %v649 = vld [vmem:[%s632 + $0x80] sm:$0xff]
    %v650 = vld [vmem:[%s632 + $0x88] sm:$0xff]
    %v651 = vld [vmem:[%s632 + $0x90] sm:$0xff]
    %v652 = vld [vmem:[%s632 + $0x98] sm:$0xff]
    %v653 = vld [vmem:[%s632 + $0xa0] sm:$0xff]
    %v654 = vld [vmem:[%s632 + $0xa8] sm:$0xff]
    %v655 = vld [vmem:[%s632 + $0xb0] sm:$0xff]
    %v656 = vld [vmem:[%s632 + $0xb8] sm:$0xff]
    %v657 = vld [vmem:[%s632 + $0xc0] sm:$0xff]
    %v658 = vld [vmem:[%s632 + $0xc8] sm:$0xff]
    %v659 = vld [vmem:[%s632 + $0xd0] sm:$0xff]
    %v660 = vld [vmem:[%s632 + $0xd8] sm:$0xff]
    %v661 = vld [vmem:[%s632 + $0xe0] sm:$0xff]
    %v662 = vld [vmem:[%s632 + $0xe8] sm:$0xff]
    %v663 = vld [vmem:[%s632 + $0xf0] sm:$0xff]
    %v664 = vld [vmem:[%s632 + $0xf8] sm:$0xff]
    %v665 = vld [vmem:[%s632 + $0x100] sm:$0xff]
    %v666 = vld [vmem:[%s632 + $0x108] sm:$0xff]
    %v667 = vld [vmem:[%s632 + $0x110] sm:$0xff]
    %v668 = vld [vmem:[%s632 + $0x118] sm:$0xff]
    %v669 = vld [vmem:[%s632 + $0x120] sm:$0xff]
    %v670 = vld [vmem:[%s632 + $0x128] sm:$0xff]
    %v671 = vld [vmem:[%s632 + $0x130] sm:$0xff]
    %v672 = vld [vmem:[%s632 + $0x138] sm:$0xff]
    %v673 = vld [vmem:[%s632 + $0x140] sm:$0xff]
    %v674 = vld [vmem:[%s632 + $0x148] sm:$0xff]
    %v675 = vld [vmem:[%s632 + $0x150] sm:$0xff]
    %v676 = vld [vmem:[%s632 + $0x158] sm:$0xff]
    %v677 = vld [vmem:[%s632 + $0x160] sm:$0xff]
    %v678 = vld [vmem:[%s632 + $0x168] sm:$0xff]
    %v679 = vld [vmem:[%s632 + $0x170] sm:$0xff]
    %v680 = vld [vmem:[%s632 + $0x178] sm:$0xff]
    %v681 = vld [vmem:[%s632 + $0x180] sm:$0xff]
    %v682 = vld [vmem:[%s632 + $0x188] sm:$0xff]
    %v683 = vld [vmem:[%s632 + $0x190] sm:$0xff]
    %v684 = vld [vmem:[%s632 + $0x198] sm:$0xff]
    %v685 = vld [vmem:[%s632 + $0x1a0] sm:$0xff]
    %v686 = vld [vmem:[%s632 + $0x1a8] sm:$0xff]
    %v687 = vld [vmem:[%s632 + $0x1b0] sm:$0xff]
    %v688 = vld [vmem:[%s632 + $0x1b8] sm:$0xff]
    %v689 = vld [vmem:[%s632 + $0x1c0] sm:$0xff]
    %v690 = vld [vmem:[%s632 + $0x1c8] sm:$0xff]
    %v691 = vld [vmem:[%s632 + $0x1d0] sm:$0xff]
    %v692 = vld [vmem:[%s632 + $0x1d8] sm:$0xff]
    %v693 = vld [vmem:[%s632 + $0x1e0] sm:$0xff]
    %v694 = vld [vmem:[%s632 + $0x1e8] sm:$0xff]
    %v695 = vld [vmem:[%s632 + $0x1f0] sm:$0xff]
    %v696 = vld [vmem:[%s632 + $0x1f8] sm:$0xff]
    %v697 = vld [vmem:[%s632 + $0x200] sm:$0xff]
    %v698 = vld [vmem:[%s632 + $0x208] sm:$0xff]
    %v699 = vld [vmem:[%s632 + $0x210] sm:$0xff]
    %v700 = vld [vmem:[%s632 + $0x218] sm:$0xff]
    %v701 = vld [vmem:[%s632 + $0x220] sm:$0xff]
    %v702 = vld [vmem:[%s632 + $0x228] sm:$0xff]
    %v703 = vld [vmem:[%s632 + $0x230] sm:$0xff]
    %v704 = vld [vmem:[%s632 + $0x238] sm:$0xff]
    %v705 = vld [vmem:[%s632 + $0x240] sm:$0xff]
    %v706 = vld [vmem:[%s632 + $0x248] sm:$0xff]
    %v707 = vld [vmem:[%s632 + $0x250] sm:$0xff]
    %v708 = vld [vmem:[%s632 + $0x258] sm:$0xff]
    %v709 = vld [vmem:[%s632 + $0x260] sm:$0xff]
    %v710 = vld [vmem:[%s632 + $0x268] sm:$0xff]
    %v711 = vld [vmem:[%s632 + $0x270] sm:$0xff]
    %v712 = vld [vmem:[%s632 + $0x278] sm:$0xff]
    %v713 = vld [vmem:[%s632 + $0x280] sm:$0xff]
    %v714 = vld [vmem:[%s632 + $0x288] sm:$0xff]
    %v715 = vld [vmem:[%s632 + $0x290] sm:$0xff]
    %v716 = vld [vmem:[%s632 + $0x298] sm:$0xff]
    %v717 = vld [vmem:[%s632 + $0x2a0] sm:$0xff]
    %v718 = vld [vmem:[%s632 + $0x2a8] sm:$0xff]
    %v719 = vld [vmem:[%s632 + $0x2b0] sm:$0xff]
    %v720 = vld [vmem:[%s632 + $0x2b8] sm:$0xff]
    %v721 = vld [vmem:[%s632 + $0x2c0] sm:$0xff]
    %v722 = vld [vmem:[%s632 + $0x2c8] sm:$0xff]
    %v723 = vld [vmem:[%s632 + $0x2d0] sm:$0xff]
    %v724 = vld [vmem:[%s632 + $0x2d8] sm:$0xff]
    %v725 = vld [vmem:[%s632 + $0x2e0] sm:$0xff]
    %v726 = vld [vmem:[%s632 + $0x2e8] sm:$0xff]
    %v727 = vld [vmem:[%s632 + $0x2f0] sm:$0xff]
    %v728 = vld [vmem:[%s632 + $0x2f8] sm:$0xff]
    %v729 = vld [vmem:[%s632 + $0x300] sm:$0xff]
    %v730 = vld [vmem:[%s632 + $0x308] sm:$0xff]
    %v731 = vld [vmem:[%s632 + $0x310] sm:$0xff]
    %v732 = vld [vmem:[%s632 + $0x318] sm:$0xff]
    %v733 = vld [vmem:[%s632 + $0x320] sm:$0xff]
    %v734 = vld [vmem:[%s632 + $0x328] sm:$0xff]
    %v735 = vld [vmem:[%s632 + $0x330] sm:$0xff]
    %v736 = vld [vmem:[%s632 + $0x338] sm:$0xff]
    %v737 = vld [vmem:[%s632 + $0x340] sm:$0xff]
    %v738 = vld [vmem:[%s632 + $0x348] sm:$0xff]
    %v739 = vld [vmem:[%s632 + $0x350] sm:$0xff]
    %v740 = vld [vmem:[%s632 + $0x358] sm:$0xff]
    %v741 = vld [vmem:[%s632 + $0x360] sm:$0xff]
    %v742 = vld [vmem:[%s632 + $0x368] sm:$0xff]
    %v743 = vld [vmem:[%s632 + $0x370] sm:$0xff]
    %v744 = vld [vmem:[%s632 + $0x378] sm:$0xff]
    %v745 = vld [vmem:[%s632 + $0x380] sm:$0xff]
    %v746 = vld [vmem:[%s632 + $0x388] sm:$0xff]
    %v747 = vld [vmem:[%s632 + $0x390] sm:$0xff]
    %v748 = vld [vmem:[%s632 + $0x398] sm:$0xff]
    %v749 = vld [vmem:[%s632 + $0x3a0] sm:$0xff]
    %v750 = vld [vmem:[%s632 + $0x3a8] sm:$0xff]
    %v751 = vld [vmem:[%s632 + $0x3b0] sm:$0xff]
    %v752 = vld [vmem:[%s632 + $0x3b8] sm:$0xff]
    %v753 = vld [vmem:[%s632 + $0x3c0] sm:$0xff]
    %v754 = vld [vmem:[%s632 + $0x3c8] sm:$0xff]
    %v755 = vld [vmem:[%s632 + $0x3d0] sm:$0xff]
    %v756 = vld [vmem:[%s632 + $0x3d8] sm:$0xff]
    %v757 = vld [vmem:[%s632 + $0x3e0] sm:$0xff]
    %v758 = vld [vmem:[%s632 + $0x3e8] sm:$0xff]
    %v759 = vld [vmem:[%s632 + $0x3f0] sm:$0xff]
    %v760 = vld [vmem:[%s632 + $0x3f8] sm:$0xff]
    %v761 = vld [vmem:[%s632 + $0x400] sm:$0xff]
    %v762 = vld [vmem:[%s632 + $0x408] sm:$0xff]
    %v763 = vld [vmem:[%s632 + $0x410] sm:$0xff]
    %v764 = vld [vmem:[%s632 + $0x418] sm:$0xff]
    %v765 = vld [vmem:[%s632 + $0x420] sm:$0xff]
    %v766 = vld [vmem:[%s632 + $0x428] sm:$0xff]
    %v767 = vld [vmem:[%s632 + $0x430] sm:$0xff]
    %v768 = vld [vmem:[%s632 + $0x438] sm:$0xff]
    %v769 = vld [vmem:[%s632 + $0x440] sm:$0xff]
    %v770 = vld [vmem:[%s632 + $0x448] sm:$0xff]
    %v771 = vld [vmem:[%s632 + $0x450] sm:$0xff]
    %v772 = vld [vmem:[%s632 + $0x458] sm:$0xff]
    %v773 = vld [vmem:[%s632 + $0x460] sm:$0xff]
    %v774 = vld [vmem:[%s632 + $0x468] sm:$0xff]
    %v775 = vld [vmem:[%s632 + $0x470] sm:$0xff]
    %v776 = vld [vmem:[%s632 + $0x478] sm:$0xff]
    %v777 = vld [vmem:[%s632 + $0x480] sm:$0xff]
    %v778 = vld [vmem:[%s632 + $0x488] sm:$0xff]
    %v779 = vld [vmem:[%s632 + $0x490] sm:$0xff]
    %v780 = vld [vmem:[%s632 + $0x498] sm:$0xff]
    %v781 = vld [vmem:[%s632 + $0x4a0] sm:$0xff]
    %v782 = vld [vmem:[%s632 + $0x4a8] sm:$0xff]
    %v783 = vld [vmem:[%s632 + $0x4b0] sm:$0xff]
    %v784 = vld [vmem:[%s632 + $0x4b8] sm:$0xff]
    %v785 = vld [vmem:[%s632 + $0x4c0] sm:$0xff]
    %v786 = vld [vmem:[%s632 + $0x4c8] sm:$0xff]
    %v787 = vld [vmem:[%s632 + $0x4d0] sm:$0xff]
    %v788 = vld [vmem:[%s632 + $0x4d8] sm:$0xff]
    %v789 = vld [vmem:[%s632 + $0x4e0] sm:$0xff]
    %v790 = vld [vmem:[%s632 + $0x4e8] sm:$0xff]
    %v791 = vld [vmem:[%s632 + $0x4f0] sm:$0xff]
    %v792 = vld [vmem:[%s632 + $0x4f8] sm:$0xff]
    %v793 = vld [vmem:[%s632 + $0x500] sm:$0xff]
    %v794 = vld [vmem:[%s632 + $0x508] sm:$0xff]
    %v795 = vld [vmem:[%s632 + $0x510] sm:$0xff]
    %v796 = vld [vmem:[%s632 + $0x518] sm:$0xff]
    %v797 = vld [vmem:[%s632 + $0x520] sm:$0xff]
    %v798 = vld [vmem:[%s632 + $0x528] sm:$0xff]
    %v799 = vld [vmem:[%s632 + $0x530] sm:$0xff]
    %v800 = vld [vmem:[%s632 + $0x538] sm:$0xff]
    %v801 = vld [vmem:[%s632 + $0x540] sm:$0xff]
    %v802 = vld [vmem:[%s632 + $0x548] sm:$0xff]
    %v803 = vld [vmem:[%s632 + $0x550] sm:$0xff]
    %v804 = vld [vmem:[%s632 + $0x558] sm:$0xff]
    %v805 = vld [vmem:[%s632 + $0x560] sm:$0xff]
    %v806 = vld [vmem:[%s632 + $0x568] sm:$0xff]
    %v807 = vld [vmem:[%s632 + $0x570] sm:$0xff]
    %v808 = vld [vmem:[%s632 + $0x578] sm:$0xff]
    %v809 = vld [vmem:[%s632 + $0x580] sm:$0xff]
    %v810 = vld [vmem:[%s632 + $0x588] sm:$0xff]
    %v811 = vld [vmem:[%s632 + $0x590] sm:$0xff]
    %v812 = vld [vmem:[%s632 + $0x598] sm:$0xff]
    %v813 = vld [vmem:[%s632 + $0x5a0] sm:$0xff]
    %v814 = vld [vmem:[%s632 + $0x5a8] sm:$0xff]
    %v815 = vld [vmem:[%s632 + $0x5b0] sm:$0xff]
    %v816 = vld [vmem:[%s632 + $0x5b8] sm:$0xff]
    %v817 = vld [vmem:[%s632 + $0x5c0] sm:$0xff]
    %v818 = vld [vmem:[%s632 + $0x5c8] sm:$0xff]
    %v819 = vld [vmem:[%s632 + $0x5d0] sm:$0xff]
    %v820 = vld [vmem:[%s632 + $0x5d8] sm:$0xff]
    %v821 = vld [vmem:[%s632 + $0x5e0] sm:$0xff]
    %v822 = vld [vmem:[%s632 + $0x5e8] sm:$0xff]
    %v823 = vld [vmem:[%s632 + $0x5f0] sm:$0xff]
    %v824 = vld [vmem:[%s632 + $0x5f8] sm:$0xff]
    %v825 = vld [vmem:[%s632 + $0x600] sm:$0xff]
    %v826 = vld [vmem:[%s632 + $0x608] sm:$0xff]
    %v827 = vld [vmem:[%s632 + $0x610] sm:$0xff]
    %v828 = vld [vmem:[%s632 + $0x618] sm:$0xff]
    %v829 = vld [vmem:[%s632 + $0x620] sm:$0xff]
    %v830 = vld [vmem:[%s632 + $0x628] sm:$0xff]
    %v831 = vld [vmem:[%s632 + $0x630] sm:$0xff]
    %v832 = vld [vmem:[%s632 + $0x638] sm:$0xff]
    %v833 = vld [vmem:[%s632 + $0x640] sm:$0xff]
    %v834 = vld [vmem:[%s632 + $0x648] sm:$0xff]
    %v835 = vld [vmem:[%s632 + $0x650] sm:$0xff]
    %v836 = vld [vmem:[%s632 + $0x658] sm:$0xff]
    %v837 = vld [vmem:[%s632 + $0x660] sm:$0xff]
    %v838 = vld [vmem:[%s632 + $0x668] sm:$0xff]
    %v839 = vld [vmem:[%s632 + $0x670] sm:$0xff]
    %v840 = vld [vmem:[%s632 + $0x678] sm:$0xff]
    %v841 = vld [vmem:[%s632 + $0x680] sm:$0xff]
    %v842 = vld [vmem:[%s632 + $0x688] sm:$0xff]
    %v843 = vld [vmem:[%s632 + $0x690] sm:$0xff]
    %v844 = vld [vmem:[%s632 + $0x698] sm:$0xff]
    %v845 = vld [vmem:[%s632 + $0x6a0] sm:$0xff]
    %v846 = vld [vmem:[%s632 + $0x6a8] sm:$0xff]
    %v847 = vld [vmem:[%s632 + $0x6b0] sm:$0xff]
    %v848 = vld [vmem:[%s632 + $0x6b8] sm:$0xff]
    %v849 = vld [vmem:[%s632 + $0x6c0] sm:$0xff]
    %v850 = vld [vmem:[%s632 + $0x6c8] sm:$0xff]
    %v851 = vld [vmem:[%s632 + $0x6d0] sm:$0xff]
    %v852 = vld [vmem:[%s632 + $0x6d8] sm:$0xff]
    %v853 = vld [vmem:[%s632 + $0x6e0] sm:$0xff]
    %v854 = vld [vmem:[%s632 + $0x6e8] sm:$0xff]
    %v855 = vld [vmem:[%s632 + $0x6f0] sm:$0xff]
    %v856 = vld [vmem:[%s632 + $0x6f8] sm:$0xff]
    %v857 = vld [vmem:[%s632 + $0x700] sm:$0xff]
    %v858 = vld [vmem:[%s632 + $0x708] sm:$0xff]
    %v859 = vld [vmem:[%s632 + $0x710] sm:$0xff]
    %v860 = vld [vmem:[%s632 + $0x718] sm:$0xff]
    %v861 = vld [vmem:[%s632 + $0x720] sm:$0xff]
    %v862 = vld [vmem:[%s632 + $0x728] sm:$0xff]
    %v863 = vld [vmem:[%s632 + $0x730] sm:$0xff]
    %v864 = vld [vmem:[%s632 + $0x738] sm:$0xff]
    %v865 = vld [vmem:[%s632 + $0x740] sm:$0xff]
    %v866 = vld [vmem:[%s632 + $0x748] sm:$0xff]
    %v867 = vld [vmem:[%s632 + $0x750] sm:$0xff]
    %v868 = vld [vmem:[%s632 + $0x758] sm:$0xff]
    %v869 = vld [vmem:[%s632 + $0x760] sm:$0xff]
    %v870 = vld [vmem:[%s632 + $0x768] sm:$0xff]
    %v871 = vld [vmem:[%s632 + $0x770] sm:$0xff]
    %v872 = vld [vmem:[%s632 + $0x778] sm:$0xff]
    %v873 = vld [vmem:[%s632 + $0x780] sm:$0xff]
    %v874 = vld [vmem:[%s632 + $0x788] sm:$0xff]
    %v875 = vld [vmem:[%s632 + $0x790] sm:$0xff]
    %v876 = vld [vmem:[%s632 + $0x798] sm:$0xff]
    %v877 = vld [vmem:[%s632 + $0x7a0] sm:$0xff]
    %v878 = vld [vmem:[%s632 + $0x7a8] sm:$0xff]
    %v879 = vld [vmem:[%s632 + $0x7b0] sm:$0xff]
    %v880 = vld [vmem:[%s632 + $0x7b8] sm:$0xff]
    %v881 = vld [vmem:[%s632 + $0x7c0] sm:$0xff]
    %v882 = vld [vmem:[%s632 + $0x7c8] sm:$0xff]
    %v883 = vld [vmem:[%s632 + $0x7d0] sm:$0xff]
    %v884 = vld [vmem:[%s632 + $0x7d8] sm:$0xff]
    %v885 = vld [vmem:[%s632 + $0x7e0] sm:$0xff]
    %v886 = vld [vmem:[%s632 + $0x7e8] sm:$0xff]
    %v887 = vld [vmem:[%s632 + $0x7f0] sm:$0xff]
    %v888 = vld [vmem:[%s632 + $0x7f8] sm:$0xff]
    %s889 = scalar_lea.vmem [#allocation7], 4
    %v890 = vld [vmem:[%s889] sm:$0xf]
    %v892 = vlaneseq
    %v893 = vshrl.u32 %v892, 7
    %v894 = vsub.s32 0, %v893
    %v895 = vrot.slane %v890, %v894
    %v896 = vlaneseq
    %v897 = vshrl.u32 %v896, 7
    %v898 = vsub.s32 1, %v897
    %v899 = vrot.slane %v890, %v898
    %v900 = vlaneseq
    %v901 = vshrl.u32 %v900, 7
    %v902 = vsub.s32 2, %v901
    %v903 = vrot.slane %v890, %v902
    %v904 = vlaneseq
    %v905 = vshrl.u32 %v904, 7
    %v906 = vsub.s32 3, %v905
    %v907 = vrot.slane %v890, %v906
    %912 = vmatprep.subr.mxu0 %v694
    %913 = vmatpush1.msra.mxu0 %v693
    %914 = vmatprep.subr.mxu0 %v690
    %915 = vmatpush1.msra.mxu0 %v689
    %916 = vmatprep.subr.mxu0 %v686
    %917 = vmatpush1.msra.mxu0 %v685
    %918 = vmatprep.subr.mxu0 %v682
    %919 = vmatpush1.msra.mxu0 %v681
    %920 = vmatprep.subr.mxu0 %v678
    %921 = vmatpush1.msra.mxu0 %v677
    %922 = vmatprep.subr.mxu0 %v674
    %923 = vmatpush1.msra.mxu0 %v673
    %924 = vmatprep.subr.mxu0 %v670
    %925 = vmatpush1.msra.mxu0 %v669
    %926 = vmatprep.subr.mxu0 %v666
    %927 = vmatpush1.msra.mxu0 %v665
    %928 = vmatprep.subr.mxu0 %v662
    %929 = vmatpush1.msra.mxu0 %v661
    %930 = vmatprep.subr.mxu0 %v658
    %931 = vmatpush1.msra.mxu0 %v657
    %932 = vmatprep.subr.mxu0 %v654
    %933 = vmatpush1.msra.mxu0 %v653
    %934 = vmatprep.subr.mxu0 %v650
    %935 = vmatpush1.msra.mxu0 %v649
    %936 = vmatprep.subr.mxu0 %v646
    %937 = vmatpush1.msra.mxu0 %v645
    %938 = vmatprep.subr.mxu0 %v642
    %939 = vmatpush1.msra.mxu0 %v641
    %940 = vmatprep.subr.mxu0 %v638
    %941 = vmatpush1.msra.mxu0 %v637
    %942 = vmatprep.subr.mxu0 %v634
    %943 = vmatpush1.msra.mxu0 %v633
    %944 = vmatprep.subr.mxu0 %v758
    %945 = vmatpush2.msra.mxu0 %v757
    %946 = vmatprep.subr.mxu0 %v754
    %947 = vmatpush2.msra.mxu0 %v753
    %948 = vmatprep.subr.mxu0 %v750
    %949 = vmatpush2.msra.mxu0 %v749
    %950 = vmatprep.subr.mxu0 %v746
    %951 = vmatpush2.msra.mxu0 %v745
    %952 = vmatprep.subr.mxu0 %v742
    %953 = vmatpush2.msra.mxu0 %v741
    %954 = vmatprep.subr.mxu0 %v738
    %955 = vmatpush2.msra.mxu0 %v737
    %956 = vmatprep.subr.mxu0 %v734
    %957 = vmatpush2.msra.mxu0 %v733
    %958 = vmatprep.subr.mxu0 %v730
    %959 = vmatpush2.msra.mxu0 %v729
    %960 = vmatprep.subr.mxu0 %v726
    %961 = vmatpush2.msra.mxu0 %v725
    %962 = vmatprep.subr.mxu0 %v722
    %963 = vmatpush2.msra.mxu0 %v721
    %964 = vmatprep.subr.mxu0 %v718
    %965 = vmatpush2.msra.mxu0 %v717
    %966 = vmatprep.subr.mxu0 %v714
    %967 = vmatpush2.msra.mxu0 %v713
    %968 = vmatprep.subr.mxu0 %v710
    %969 = vmatpush2.msra.mxu0 %v709
    %970 = vmatprep.subr.mxu0 %v706
    %971 = vmatpush2.msra.mxu0 %v705
    %972 = vmatprep.subr.mxu0 %v702
    %973 = vmatpush2.msra.mxu0 %v701
    %974 = vmatprep.subr.mxu0 %v698
    %975 = vmatpush2.msra.mxu0 %v697
    %976 = vmatprep.mubr.f32.mxu0 %v629
    %977 = vmatmul.mubr.f32.gmra.mxu0 %v628
    %v978 = vpop.f32.mrf.mxu0
    %v979 = vadd.f32 %v895, %v978
    %v980 = vpop.f32.mrf.mxu0
    %v981 = vadd.f32 %v899, %v980
    %982 = vdwg.mxu0
    %983 = vmatprep.subr.mxu0 %v822
    %984 = vmatpush1.msra.mxu0 %v821
    %985 = vmatprep.subr.mxu0 %v818
    %986 = vmatpush1.msra.mxu0 %v817
    %987 = vmatprep.subr.mxu0 %v814
    %988 = vmatpush1.msra.mxu0 %v813
    %989 = vmatprep.subr.mxu0 %v810
    %990 = vmatpush1.msra.mxu0 %v809
    %991 = vmatprep.subr.mxu0 %v806
    %992 = vmatpush1.msra.mxu0 %v805
    %993 = vmatprep.subr.mxu0 %v802
    %994 = vmatpush1.msra.mxu0 %v801
    %995 = vmatprep.subr.mxu0 %v798
    %996 = vmatpush1.msra.mxu0 %v797
    %997 = vmatprep.subr.mxu0 %v794
    %998 = vmatpush1.msra.mxu0 %v793
    %999 = vmatprep.subr.mxu0 %v790
    %1000 = vmatpush1.msra.mxu0 %v789
    %1001 = vmatprep.subr.mxu0 %v786
    %1002 = vmatpush1.msra.mxu0 %v785
    %1003 = vmatprep.subr.mxu0 %v782
    %1004 = vmatpush1.msra.mxu0 %v781
    %1005 = vmatprep.subr.mxu0 %v778
    %1006 = vmatpush1.msra.mxu0 %v777
    %1007 = vmatprep.subr.mxu0 %v774
    %1008 = vmatpush1.msra.mxu0 %v773
    %1009 = vmatprep.subr.mxu0 %v770
    %1010 = vmatpush1.msra.mxu0 %v769
    %1011 = vmatprep.subr.mxu0 %v766
    %1012 = vmatpush1.msra.mxu0 %v765
    %1013 = vmatprep.subr.mxu0 %v762
    %1014 = vmatpush1.msra.mxu0 %v761
    %1015 = vmatprep.subr.mxu0 %v886
    %1016 = vmatpush2.msra.mxu0 %v885
    %1017 = vmatprep.subr.mxu0 %v882
    %1018 = vmatpush2.msra.mxu0 %v881
    %1019 = vmatprep.subr.mxu0 %v878
    %1020 = vmatpush2.msra.mxu0 %v877
    %1021 = vmatprep.subr.mxu0 %v874
    %1022 = vmatpush2.msra.mxu0 %v873
    %1023 = vmatprep.subr.mxu0 %v870
    %1024 = vmatpush2.msra.mxu0 %v869
    %1025 = vmatprep.subr.mxu0 %v866
    %1026 = vmatpush2.msra.mxu0 %v865
    %1027 = vmatprep.subr.mxu0 %v862
    %1028 = vmatpush2.msra.mxu0 %v861
    %1029 = vmatprep.subr.mxu0 %v858
    %1030 = vmatpush2.msra.mxu0 %v857
    %1031 = vmatprep.subr.mxu0 %v854
    %1032 = vmatpush2.msra.mxu0 %v853
    %1033 = vmatprep.subr.mxu0 %v850
    %1034 = vmatpush2.msra.mxu0 %v849
    %1035 = vmatprep.subr.mxu0 %v846
    %1036 = vmatpush2.msra.mxu0 %v845
    %1037 = vmatprep.subr.mxu0 %v842
    %1038 = vmatpush2.msra.mxu0 %v841
    %1039 = vmatprep.subr.mxu0 %v838
    %1040 = vmatpush2.msra.mxu0 %v837
    %1041 = vmatprep.subr.mxu0 %v834
    %1042 = vmatpush2.msra.mxu0 %v833
    %1043 = vmatprep.subr.mxu0 %v830
    %1044 = vmatpush2.msra.mxu0 %v829
    %1045 = vmatprep.subr.mxu0 %v826
    %1046 = vmatpush2.msra.mxu0 %v825
    %1047 = vmatprep.mubr.f32.mxu0 %v631
    %1048 = vmatmul.mubr.f32.gmra.mxu0 %v630
    %v1049 = vpop.f32.mrf.mxu0
    %v1050 = vadd.f32 %v979, %v1049
    %v1051 = vpop.f32.mrf.mxu0
    %v1052 = vadd.f32 %v981, %v1051
    %1053 = vdwg.mxu0
    %1054 = vmatprep.subr.mxu0 %v696
    %1055 = vmatpush1.msra.mxu0 %v695
    %1056 = vmatprep.subr.mxu0 %v692
    %1057 = vmatpush1.msra.mxu0 %v691
    %1058 = vmatprep.subr.mxu0 %v688
    %1059 = vmatpush1.msra.mxu0 %v687
    %1060 = vmatprep.subr.mxu0 %v684
    %1061 = vmatpush1.msra.mxu0 %v683
    %1062 = vmatprep.subr.mxu0 %v680
    %1063 = vmatpush1.msra.mxu0 %v679
    %1064 = vmatprep.subr.mxu0 %v676
    %1065 = vmatpush1.msra.mxu0 %v675
    %1066 = vmatprep.subr.mxu0 %v672
    %1067 = vmatpush1.msra.mxu0 %v671
    %1068 = vmatprep.subr.mxu0 %v668
    %1069 = vmatpush1.msra.mxu0 %v667
    %1070 = vmatprep.subr.mxu0 %v664
    %1071 = vmatpush1.msra.mxu0 %v663
    %1072 = vmatprep.subr.mxu0 %v660
    %1073 = vmatpush1.msra.mxu0 %v659
    %1074 = vmatprep.subr.mxu0 %v656
    %1075 = vmatpush1.msra.mxu0 %v655
    %1076 = vmatprep.subr.mxu0 %v652
    %1077 = vmatpush1.msra.mxu0 %v651
    %1078 = vmatprep.subr.mxu0 %v648
    %1079 = vmatpush1.msra.mxu0 %v647
    %1080 = vmatprep.subr.mxu0 %v644
    %1081 = vmatpush1.msra.mxu0 %v643
    %1082 = vmatprep.subr.mxu0 %v640
    %1083 = vmatpush1.msra.mxu0 %v639
    %1084 = vmatprep.subr.mxu0 %v636
    %1085 = vmatpush1.msra.mxu0 %v635
    %1086 = vmatprep.subr.mxu0 %v760
    %1087 = vmatpush2.msra.mxu0 %v759
    %1088 = vmatprep.subr.mxu0 %v756
    %1089 = vmatpush2.msra.mxu0 %v755
    %1090 = vmatprep.subr.mxu0 %v752
    %1091 = vmatpush2.msra.mxu0 %v751
    %1092 = vmatprep.subr.mxu0 %v748
    %1093 = vmatpush2.msra.mxu0 %v747
    %1094 = vmatprep.subr.mxu0 %v744
    %1095 = vmatpush2.msra.mxu0 %v743
    %1096 = vmatprep.subr.mxu0 %v740
    %1097 = vmatpush2.msra.mxu0 %v739
    %1098 = vmatprep.subr.mxu0 %v736
    %1099 = vmatpush2.msra.mxu0 %v735
    %1100 = vmatprep.subr.mxu0 %v732
    %1101 = vmatpush2.msra.mxu0 %v731
    %1102 = vmatprep.subr.mxu0 %v728
    %1103 = vmatpush2.msra.mxu0 %v727
    %1104 = vmatprep.subr.mxu0 %v724
    %1105 = vmatpush2.msra.mxu0 %v723
    %1106 = vmatprep.subr.mxu0 %v720
    %1107 = vmatpush2.msra.mxu0 %v719
    %1108 = vmatprep.subr.mxu0 %v716
    %1109 = vmatpush2.msra.mxu0 %v715
    %1110 = vmatprep.subr.mxu0 %v712
    %1111 = vmatpush2.msra.mxu0 %v711
    %1112 = vmatprep.subr.mxu0 %v708
    %1113 = vmatpush2.msra.mxu0 %v707
    %1114 = vmatprep.subr.mxu0 %v704
    %1115 = vmatpush2.msra.mxu0 %v703
    %1116 = vmatprep.subr.mxu0 %v700
    %1117 = vmatpush2.msra.mxu0 %v699
    %1118 = vmatprep.mubr.f32.mxu0 %v629
    %1119 = vmatmul.mubr.f32.gmra.mxu0 %v628
    %v1120 = vpop.f32.mrf.mxu0
    %v1121 = vadd.f32 %v903, %v1120
    %v1122 = vpop.f32.mrf.mxu0
    %v1123 = vadd.f32 %v907, %v1122
    %1124 = vdwg.mxu0
    %1125 = vmatprep.subr.mxu0 %v824
    %1126 = vmatpush1.msra.mxu0 %v823
    %1127 = vmatprep.subr.mxu0 %v820
    %1128 = vmatpush1.msra.mxu0 %v819
    %1129 = vmatprep.subr.mxu0 %v816
    %1130 = vmatpush1.msra.mxu0 %v815
    %1131 = vmatprep.subr.mxu0 %v812
    %1132 = vmatpush1.msra.mxu0 %v811
    %1133 = vmatprep.subr.mxu0 %v808
    %1134 = vmatpush1.msra.mxu0 %v807
    %1135 = vmatprep.subr.mxu0 %v804
    %1136 = vmatpush1.msra.mxu0 %v803
    %1137 = vmatprep.subr.mxu0 %v800
    %1138 = vmatpush1.msra.mxu0 %v799
    %1139 = vmatprep.subr.mxu0 %v796
    %1140 = vmatpush1.msra.mxu0 %v795
    %1141 = vmatprep.subr.mxu0 %v792
    %1142 = vmatpush1.msra.mxu0 %v791
    %1143 = vmatprep.subr.mxu0 %v788
    %1144 = vmatpush1.msra.mxu0 %v787
    %1145 = vmatprep.subr.mxu0 %v784
    %1146 = vmatpush1.msra.mxu0 %v783
    %1147 = vmatprep.subr.mxu0 %v780
    %1148 = vmatpush1.msra.mxu0 %v779
    %1149 = vmatprep.subr.mxu0 %v776
    %1150 = vmatpush1.msra.mxu0 %v775
    %1151 = vmatprep.subr.mxu0 %v772
    %1152 = vmatpush1.msra.mxu0 %v771
    %1153 = vmatprep.subr.mxu0 %v768
    %1154 = vmatpush1.msra.mxu0 %v767
    %1155 = vmatprep.subr.mxu0 %v764
    %1156 = vmatpush1.msra.mxu0 %v763
    %1157 = vmatprep.subr.mxu0 %v888
    %1158 = vmatpush2.msra.mxu0 %v887
    %1159 = vmatprep.subr.mxu0 %v884
    %1160 = vmatpush2.msra.mxu0 %v883
    %1161 = vmatprep.subr.mxu0 %v880
    %1162 = vmatpush2.msra.mxu0 %v879
    %1163 = vmatprep.subr.mxu0 %v876
    %1164 = vmatpush2.msra.mxu0 %v875
    %1165 = vmatprep.subr.mxu0 %v872
    %1166 = vmatpush2.msra.mxu0 %v871
    %1167 = vmatprep.subr.mxu0 %v868
    %1168 = vmatpush2.msra.mxu0 %v867
    %1169 = vmatprep.subr.mxu0 %v864
    %1170 = vmatpush2.msra.mxu0 %v863
    %1171 = vmatprep.subr.mxu0 %v860
    %1172 = vmatpush2.msra.mxu0 %v859
    %1173 = vmatprep.subr.mxu0 %v856
    %1174 = vmatpush2.msra.mxu0 %v855
    %1175 = vmatprep.subr.mxu0 %v852
    %1176 = vmatpush2.msra.mxu0 %v851
    %1177 = vmatprep.subr.mxu0 %v848
    %1178 = vmatpush2.msra.mxu0 %v847
    %1179 = vmatprep.subr.mxu0 %v844
    %1180 = vmatpush2.msra.mxu0 %v843
    %1181 = vmatprep.subr.mxu0 %v840
    %1182 = vmatpush2.msra.mxu0 %v839
    %1183 = vmatprep.subr.mxu0 %v836
    %1184 = vmatpush2.msra.mxu0 %v835
    %1185 = vmatprep.subr.mxu0 %v832
    %1186 = vmatpush2.msra.mxu0 %v831
    %1187 = vmatprep.subr.mxu0 %v828
    %1188 = vmatpush2.msra.mxu0 %v827
    %1189 = vmatprep.mubr.f32.mxu0 %v631
    %1190 = vmatmul.mubr.f32.gmra.mxu0 %v630
    %v1191 = vpop.f32.mrf.mxu0
    %v1192 = vadd.f32 %v1121, %v1191
    %v1193 = vpop.f32.mrf.mxu0
    %v1194 = vadd.f32 %v1123, %v1193
    %1195 = vdwg.mxu0
    %vm1196 = vcmp.ge.f32.partialorder %v1050, 0.0
    %vm1197 = vcmp.ge.f32.partialorder %v1052, 0.0
    %vm1198 = vcmp.ge.f32.partialorder %v1192, 0.0
    %vm1199 = vcmp.ge.f32.partialorder %v1194, 0.0
    %v1200 = vmul.f32 %v1050, 0.2
    %v1201 = vmul.f32 %v1052, 0.2
    %v1202 = vmul.f32 %v1192, 0.2
    %v1203 = vmul.f32 %v1194, 0.2
    %v1204 = vsel %vm1196, %v1050, %v1200
    %v1205 = vsel %vm1197, %v1052, %v1201
    %v1206 = vsel %vm1198, %v1192, %v1202
    %v1207 = vsel %vm1199, %v1194, %v1203
    %s1208 = scalar_lea.vmem [#allocation5], 4096
    %v1209 = vld [vmem:[%s1208] sm:$0xff]
    %v1210 = vld [vmem:[%s1208 + $0x8] sm:$0xff]
    %v1211 = vld [vmem:[%s1208 + $0x10] sm:$0xff]
    %v1212 = vld [vmem:[%s1208 + $0x18] sm:$0xff]
    %v1213 = vld [vmem:[%s1208 + $0x20] sm:$0xff]
    %v1214 = vld [vmem:[%s1208 + $0x28] sm:$0xff]
    %v1215 = vld [vmem:[%s1208 + $0x30] sm:$0xff]
    %v1216 = vld [vmem:[%s1208 + $0x38] sm:$0xff]
    %v1217 = vld [vmem:[%s1208 + $0x40] sm:$0xff]
    %v1218 = vld [vmem:[%s1208 + $0x48] sm:$0xff]
    %v1219 = vld [vmem:[%s1208 + $0x50] sm:$0xff]
    %v1220 = vld [vmem:[%s1208 + $0x58] sm:$0xff]
    %v1221 = vld [vmem:[%s1208 + $0x60] sm:$0xff]
    %v1222 = vld [vmem:[%s1208 + $0x68] sm:$0xff]
    %v1223 = vld [vmem:[%s1208 + $0x70] sm:$0xff]
    %v1224 = vld [vmem:[%s1208 + $0x78] sm:$0xff]
    %v1225 = vld [vmem:[%s1208 + $0x80] sm:$0xff]
    %v1226 = vld [vmem:[%s1208 + $0x88] sm:$0xff]
    %v1227 = vld [vmem:[%s1208 + $0x90] sm:$0xff]
    %v1228 = vld [vmem:[%s1208 + $0x98] sm:$0xff]
    %v1229 = vld [vmem:[%s1208 + $0xa0] sm:$0xff]
    %v1230 = vld [vmem:[%s1208 + $0xa8] sm:$0xff]
    %v1231 = vld [vmem:[%s1208 + $0xb0] sm:$0xff]
    %v1232 = vld [vmem:[%s1208 + $0xb8] sm:$0xff]
    %v1233 = vld [vmem:[%s1208 + $0xc0] sm:$0xff]
    %v1234 = vld [vmem:[%s1208 + $0xc8] sm:$0xff]
    %v1235 = vld [vmem:[%s1208 + $0xd0] sm:$0xff]
    %v1236 = vld [vmem:[%s1208 + $0xd8] sm:$0xff]
    %v1237 = vld [vmem:[%s1208 + $0xe0] sm:$0xff]
    %v1238 = vld [vmem:[%s1208 + $0xe8] sm:$0xff]
    %v1239 = vld [vmem:[%s1208 + $0xf0] sm:$0xff]
    %v1240 = vld [vmem:[%s1208 + $0xf8] sm:$0xff]
    %v1241 = vld [vmem:[%s1208 + $0x100] sm:$0xff]
    %v1242 = vld [vmem:[%s1208 + $0x108] sm:$0xff]
    %v1243 = vld [vmem:[%s1208 + $0x110] sm:$0xff]
    %v1244 = vld [vmem:[%s1208 + $0x118] sm:$0xff]
    %v1245 = vld [vmem:[%s1208 + $0x120] sm:$0xff]
    %v1246 = vld [vmem:[%s1208 + $0x128] sm:$0xff]
    %v1247 = vld [vmem:[%s1208 + $0x130] sm:$0xff]
    %v1248 = vld [vmem:[%s1208 + $0x138] sm:$0xff]
    %v1249 = vld [vmem:[%s1208 + $0x140] sm:$0xff]
    %v1250 = vld [vmem:[%s1208 + $0x148] sm:$0xff]
    %v1251 = vld [vmem:[%s1208 + $0x150] sm:$0xff]
    %v1252 = vld [vmem:[%s1208 + $0x158] sm:$0xff]
    %v1253 = vld [vmem:[%s1208 + $0x160] sm:$0xff]
    %v1254 = vld [vmem:[%s1208 + $0x168] sm:$0xff]
    %v1255 = vld [vmem:[%s1208 + $0x170] sm:$0xff]
    %v1256 = vld [vmem:[%s1208 + $0x178] sm:$0xff]
    %v1257 = vld [vmem:[%s1208 + $0x180] sm:$0xff]
    %v1258 = vld [vmem:[%s1208 + $0x188] sm:$0xff]
    %v1259 = vld [vmem:[%s1208 + $0x190] sm:$0xff]
    %v1260 = vld [vmem:[%s1208 + $0x198] sm:$0xff]
    %v1261 = vld [vmem:[%s1208 + $0x1a0] sm:$0xff]
    %v1262 = vld [vmem:[%s1208 + $0x1a8] sm:$0xff]
    %v1263 = vld [vmem:[%s1208 + $0x1b0] sm:$0xff]
    %v1264 = vld [vmem:[%s1208 + $0x1b8] sm:$0xff]
    %v1265 = vld [vmem:[%s1208 + $0x1c0] sm:$0xff]
    %v1266 = vld [vmem:[%s1208 + $0x1c8] sm:$0xff]
    %v1267 = vld [vmem:[%s1208 + $0x1d0] sm:$0xff]
    %v1268 = vld [vmem:[%s1208 + $0x1d8] sm:$0xff]
    %v1269 = vld [vmem:[%s1208 + $0x1e0] sm:$0xff]
    %v1270 = vld [vmem:[%s1208 + $0x1e8] sm:$0xff]
    %v1271 = vld [vmem:[%s1208 + $0x1f0] sm:$0xff]
    %v1272 = vld [vmem:[%s1208 + $0x1f8] sm:$0xff]
    %v1273 = vld [vmem:[%s1208 + $0x200] sm:$0xff]
    %v1274 = vld [vmem:[%s1208 + $0x208] sm:$0xff]
    %v1275 = vld [vmem:[%s1208 + $0x210] sm:$0xff]
    %v1276 = vld [vmem:[%s1208 + $0x218] sm:$0xff]
    %v1277 = vld [vmem:[%s1208 + $0x220] sm:$0xff]
    %v1278 = vld [vmem:[%s1208 + $0x228] sm:$0xff]
    %v1279 = vld [vmem:[%s1208 + $0x230] sm:$0xff]
    %v1280 = vld [vmem:[%s1208 + $0x238] sm:$0xff]
    %v1281 = vld [vmem:[%s1208 + $0x240] sm:$0xff]
    %v1282 = vld [vmem:[%s1208 + $0x248] sm:$0xff]
    %v1283 = vld [vmem:[%s1208 + $0x250] sm:$0xff]
    %v1284 = vld [vmem:[%s1208 + $0x258] sm:$0xff]
    %v1285 = vld [vmem:[%s1208 + $0x260] sm:$0xff]
    %v1286 = vld [vmem:[%s1208 + $0x268] sm:$0xff]
    %v1287 = vld [vmem:[%s1208 + $0x270] sm:$0xff]
    %v1288 = vld [vmem:[%s1208 + $0x278] sm:$0xff]
    %v1289 = vld [vmem:[%s1208 + $0x280] sm:$0xff]
    %v1290 = vld [vmem:[%s1208 + $0x288] sm:$0xff]
    %v1291 = vld [vmem:[%s1208 + $0x290] sm:$0xff]
    %v1292 = vld [vmem:[%s1208 + $0x298] sm:$0xff]
    %v1293 = vld [vmem:[%s1208 + $0x2a0] sm:$0xff]
    %v1294 = vld [vmem:[%s1208 + $0x2a8] sm:$0xff]
    %v1295 = vld [vmem:[%s1208 + $0x2b0] sm:$0xff]
    %v1296 = vld [vmem:[%s1208 + $0x2b8] sm:$0xff]
    %v1297 = vld [vmem:[%s1208 + $0x2c0] sm:$0xff]
    %v1298 = vld [vmem:[%s1208 + $0x2c8] sm:$0xff]
    %v1299 = vld [vmem:[%s1208 + $0x2d0] sm:$0xff]
    %v1300 = vld [vmem:[%s1208 + $0x2d8] sm:$0xff]
    %v1301 = vld [vmem:[%s1208 + $0x2e0] sm:$0xff]
    %v1302 = vld [vmem:[%s1208 + $0x2e8] sm:$0xff]
    %v1303 = vld [vmem:[%s1208 + $0x2f0] sm:$0xff]
    %v1304 = vld [vmem:[%s1208 + $0x2f8] sm:$0xff]
    %v1305 = vld [vmem:[%s1208 + $0x300] sm:$0xff]
    %v1306 = vld [vmem:[%s1208 + $0x308] sm:$0xff]
    %v1307 = vld [vmem:[%s1208 + $0x310] sm:$0xff]
    %v1308 = vld [vmem:[%s1208 + $0x318] sm:$0xff]
    %v1309 = vld [vmem:[%s1208 + $0x320] sm:$0xff]
    %v1310 = vld [vmem:[%s1208 + $0x328] sm:$0xff]
    %v1311 = vld [vmem:[%s1208 + $0x330] sm:$0xff]
    %v1312 = vld [vmem:[%s1208 + $0x338] sm:$0xff]
    %v1313 = vld [vmem:[%s1208 + $0x340] sm:$0xff]
    %v1314 = vld [vmem:[%s1208 + $0x348] sm:$0xff]
    %v1315 = vld [vmem:[%s1208 + $0x350] sm:$0xff]
    %v1316 = vld [vmem:[%s1208 + $0x358] sm:$0xff]
    %v1317 = vld [vmem:[%s1208 + $0x360] sm:$0xff]
    %v1318 = vld [vmem:[%s1208 + $0x368] sm:$0xff]
    %v1319 = vld [vmem:[%s1208 + $0x370] sm:$0xff]
    %v1320 = vld [vmem:[%s1208 + $0x378] sm:$0xff]
    %v1321 = vld [vmem:[%s1208 + $0x380] sm:$0xff]
    %v1322 = vld [vmem:[%s1208 + $0x388] sm:$0xff]
    %v1323 = vld [vmem:[%s1208 + $0x390] sm:$0xff]
    %v1324 = vld [vmem:[%s1208 + $0x398] sm:$0xff]
    %v1325 = vld [vmem:[%s1208 + $0x3a0] sm:$0xff]
    %v1326 = vld [vmem:[%s1208 + $0x3a8] sm:$0xff]
    %v1327 = vld [vmem:[%s1208 + $0x3b0] sm:$0xff]
    %v1328 = vld [vmem:[%s1208 + $0x3b8] sm:$0xff]
    %v1329 = vld [vmem:[%s1208 + $0x3c0] sm:$0xff]
    %v1330 = vld [vmem:[%s1208 + $0x3c8] sm:$0xff]
    %v1331 = vld [vmem:[%s1208 + $0x3d0] sm:$0xff]
    %v1332 = vld [vmem:[%s1208 + $0x3d8] sm:$0xff]
    %v1333 = vld [vmem:[%s1208 + $0x3e0] sm:$0xff]
    %v1334 = vld [vmem:[%s1208 + $0x3e8] sm:$0xff]
    %v1335 = vld [vmem:[%s1208 + $0x3f0] sm:$0xff]
    %v1336 = vld [vmem:[%s1208 + $0x3f8] sm:$0xff]
    %v1337 = vld [vmem:[%s1208 + $0x400] sm:$0xff]
    %v1338 = vld [vmem:[%s1208 + $0x408] sm:$0xff]
    %v1339 = vld [vmem:[%s1208 + $0x410] sm:$0xff]
    %v1340 = vld [vmem:[%s1208 + $0x418] sm:$0xff]
    %v1341 = vld [vmem:[%s1208 + $0x420] sm:$0xff]
    %v1342 = vld [vmem:[%s1208 + $0x428] sm:$0xff]
    %v1343 = vld [vmem:[%s1208 + $0x430] sm:$0xff]
    %v1344 = vld [vmem:[%s1208 + $0x438] sm:$0xff]
    %v1345 = vld [vmem:[%s1208 + $0x440] sm:$0xff]
    %v1346 = vld [vmem:[%s1208 + $0x448] sm:$0xff]
    %v1347 = vld [vmem:[%s1208 + $0x450] sm:$0xff]
    %v1348 = vld [vmem:[%s1208 + $0x458] sm:$0xff]
    %v1349 = vld [vmem:[%s1208 + $0x460] sm:$0xff]
    %v1350 = vld [vmem:[%s1208 + $0x468] sm:$0xff]
    %v1351 = vld [vmem:[%s1208 + $0x470] sm:$0xff]
    %v1352 = vld [vmem:[%s1208 + $0x478] sm:$0xff]
    %v1353 = vld [vmem:[%s1208 + $0x480] sm:$0xff]
    %v1354 = vld [vmem:[%s1208 + $0x488] sm:$0xff]
    %v1355 = vld [vmem:[%s1208 + $0x490] sm:$0xff]
    %v1356 = vld [vmem:[%s1208 + $0x498] sm:$0xff]
    %v1357 = vld [vmem:[%s1208 + $0x4a0] sm:$0xff]
    %v1358 = vld [vmem:[%s1208 + $0x4a8] sm:$0xff]
    %v1359 = vld [vmem:[%s1208 + $0x4b0] sm:$0xff]
    %v1360 = vld [vmem:[%s1208 + $0x4b8] sm:$0xff]
    %v1361 = vld [vmem:[%s1208 + $0x4c0] sm:$0xff]
    %v1362 = vld [vmem:[%s1208 + $0x4c8] sm:$0xff]
    %v1363 = vld [vmem:[%s1208 + $0x4d0] sm:$0xff]
    %v1364 = vld [vmem:[%s1208 + $0x4d8] sm:$0xff]
    %v1365 = vld [vmem:[%s1208 + $0x4e0] sm:$0xff]
    %v1366 = vld [vmem:[%s1208 + $0x4e8] sm:$0xff]
    %v1367 = vld [vmem:[%s1208 + $0x4f0] sm:$0xff]
    %v1368 = vld [vmem:[%s1208 + $0x4f8] sm:$0xff]
    %v1369 = vld [vmem:[%s1208 + $0x500] sm:$0xff]
    %v1370 = vld [vmem:[%s1208 + $0x508] sm:$0xff]
    %v1371 = vld [vmem:[%s1208 + $0x510] sm:$0xff]
    %v1372 = vld [vmem:[%s1208 + $0x518] sm:$0xff]
    %v1373 = vld [vmem:[%s1208 + $0x520] sm:$0xff]
    %v1374 = vld [vmem:[%s1208 + $0x528] sm:$0xff]
    %v1375 = vld [vmem:[%s1208 + $0x530] sm:$0xff]
    %v1376 = vld [vmem:[%s1208 + $0x538] sm:$0xff]
    %v1377 = vld [vmem:[%s1208 + $0x540] sm:$0xff]
    %v1378 = vld [vmem:[%s1208 + $0x548] sm:$0xff]
    %v1379 = vld [vmem:[%s1208 + $0x550] sm:$0xff]
    %v1380 = vld [vmem:[%s1208 + $0x558] sm:$0xff]
    %v1381 = vld [vmem:[%s1208 + $0x560] sm:$0xff]
    %v1382 = vld [vmem:[%s1208 + $0x568] sm:$0xff]
    %v1383 = vld [vmem:[%s1208 + $0x570] sm:$0xff]
    %v1384 = vld [vmem:[%s1208 + $0x578] sm:$0xff]
    %v1385 = vld [vmem:[%s1208 + $0x580] sm:$0xff]
    %v1386 = vld [vmem:[%s1208 + $0x588] sm:$0xff]
    %v1387 = vld [vmem:[%s1208 + $0x590] sm:$0xff]
    %v1388 = vld [vmem:[%s1208 + $0x598] sm:$0xff]
    %v1389 = vld [vmem:[%s1208 + $0x5a0] sm:$0xff]
    %v1390 = vld [vmem:[%s1208 + $0x5a8] sm:$0xff]
    %v1391 = vld [vmem:[%s1208 + $0x5b0] sm:$0xff]
    %v1392 = vld [vmem:[%s1208 + $0x5b8] sm:$0xff]
    %v1393 = vld [vmem:[%s1208 + $0x5c0] sm:$0xff]
    %v1394 = vld [vmem:[%s1208 + $0x5c8] sm:$0xff]
    %v1395 = vld [vmem:[%s1208 + $0x5d0] sm:$0xff]
    %v1396 = vld [vmem:[%s1208 + $0x5d8] sm:$0xff]
    %v1397 = vld [vmem:[%s1208 + $0x5e0] sm:$0xff]
    %v1398 = vld [vmem:[%s1208 + $0x5e8] sm:$0xff]
    %v1399 = vld [vmem:[%s1208 + $0x5f0] sm:$0xff]
    %v1400 = vld [vmem:[%s1208 + $0x5f8] sm:$0xff]
    %v1401 = vld [vmem:[%s1208 + $0x600] sm:$0xff]
    %v1402 = vld [vmem:[%s1208 + $0x608] sm:$0xff]
    %v1403 = vld [vmem:[%s1208 + $0x610] sm:$0xff]
    %v1404 = vld [vmem:[%s1208 + $0x618] sm:$0xff]
    %v1405 = vld [vmem:[%s1208 + $0x620] sm:$0xff]
    %v1406 = vld [vmem:[%s1208 + $0x628] sm:$0xff]
    %v1407 = vld [vmem:[%s1208 + $0x630] sm:$0xff]
    %v1408 = vld [vmem:[%s1208 + $0x638] sm:$0xff]
    %v1409 = vld [vmem:[%s1208 + $0x640] sm:$0xff]
    %v1410 = vld [vmem:[%s1208 + $0x648] sm:$0xff]
    %v1411 = vld [vmem:[%s1208 + $0x650] sm:$0xff]
    %v1412 = vld [vmem:[%s1208 + $0x658] sm:$0xff]
    %v1413 = vld [vmem:[%s1208 + $0x660] sm:$0xff]
    %v1414 = vld [vmem:[%s1208 + $0x668] sm:$0xff]
    %v1415 = vld [vmem:[%s1208 + $0x670] sm:$0xff]
    %v1416 = vld [vmem:[%s1208 + $0x678] sm:$0xff]
    %v1417 = vld [vmem:[%s1208 + $0x680] sm:$0xff]
    %v1418 = vld [vmem:[%s1208 + $0x688] sm:$0xff]
    %v1419 = vld [vmem:[%s1208 + $0x690] sm:$0xff]
    %v1420 = vld [vmem:[%s1208 + $0x698] sm:$0xff]
    %v1421 = vld [vmem:[%s1208 + $0x6a0] sm:$0xff]
    %v1422 = vld [vmem:[%s1208 + $0x6a8] sm:$0xff]
    %v1423 = vld [vmem:[%s1208 + $0x6b0] sm:$0xff]
    %v1424 = vld [vmem:[%s1208 + $0x6b8] sm:$0xff]
    %v1425 = vld [vmem:[%s1208 + $0x6c0] sm:$0xff]
    %v1426 = vld [vmem:[%s1208 + $0x6c8] sm:$0xff]
    %v1427 = vld [vmem:[%s1208 + $0x6d0] sm:$0xff]
    %v1428 = vld [vmem:[%s1208 + $0x6d8] sm:$0xff]
    %v1429 = vld [vmem:[%s1208 + $0x6e0] sm:$0xff]
    %v1430 = vld [vmem:[%s1208 + $0x6e8] sm:$0xff]
    %v1431 = vld [vmem:[%s1208 + $0x6f0] sm:$0xff]
    %v1432 = vld [vmem:[%s1208 + $0x6f8] sm:$0xff]
    %v1433 = vld [vmem:[%s1208 + $0x700] sm:$0xff]
    %v1434 = vld [vmem:[%s1208 + $0x708] sm:$0xff]
    %v1435 = vld [vmem:[%s1208 + $0x710] sm:$0xff]
    %v1436 = vld [vmem:[%s1208 + $0x718] sm:$0xff]
    %v1437 = vld [vmem:[%s1208 + $0x720] sm:$0xff]
    %v1438 = vld [vmem:[%s1208 + $0x728] sm:$0xff]
    %v1439 = vld [vmem:[%s1208 + $0x730] sm:$0xff]
    %v1440 = vld [vmem:[%s1208 + $0x738] sm:$0xff]
    %v1441 = vld [vmem:[%s1208 + $0x740] sm:$0xff]
    %v1442 = vld [vmem:[%s1208 + $0x748] sm:$0xff]
    %v1443 = vld [vmem:[%s1208 + $0x750] sm:$0xff]
    %v1444 = vld [vmem:[%s1208 + $0x758] sm:$0xff]
    %v1445 = vld [vmem:[%s1208 + $0x760] sm:$0xff]
    %v1446 = vld [vmem:[%s1208 + $0x768] sm:$0xff]
    %v1447 = vld [vmem:[%s1208 + $0x770] sm:$0xff]
    %v1448 = vld [vmem:[%s1208 + $0x778] sm:$0xff]
    %v1449 = vld [vmem:[%s1208 + $0x780] sm:$0xff]
    %v1450 = vld [vmem:[%s1208 + $0x788] sm:$0xff]
    %v1451 = vld [vmem:[%s1208 + $0x790] sm:$0xff]
    %v1452 = vld [vmem:[%s1208 + $0x798] sm:$0xff]
    %v1453 = vld [vmem:[%s1208 + $0x7a0] sm:$0xff]
    %v1454 = vld [vmem:[%s1208 + $0x7a8] sm:$0xff]
    %v1455 = vld [vmem:[%s1208 + $0x7b0] sm:$0xff]
    %v1456 = vld [vmem:[%s1208 + $0x7b8] sm:$0xff]
    %v1457 = vld [vmem:[%s1208 + $0x7c0] sm:$0xff]
    %v1458 = vld [vmem:[%s1208 + $0x7c8] sm:$0xff]
    %v1459 = vld [vmem:[%s1208 + $0x7d0] sm:$0xff]
    %v1460 = vld [vmem:[%s1208 + $0x7d8] sm:$0xff]
    %v1461 = vld [vmem:[%s1208 + $0x7e0] sm:$0xff]
    %v1462 = vld [vmem:[%s1208 + $0x7e8] sm:$0xff]
    %v1463 = vld [vmem:[%s1208 + $0x7f0] sm:$0xff]
    %v1464 = vld [vmem:[%s1208 + $0x7f8] sm:$0xff]
    %s1465 = scalar_lea.vmem [#allocation7], 8
    %v1466 = vld [vmem:[%s1465] sm:$0xf]
    %v1468 = vlaneseq
    %v1469 = vshrl.u32 %v1468, 7
    %v1470 = vsub.s32 0, %v1469
    %v1471 = vrot.slane %v1466, %v1470
    %v1472 = vlaneseq
    %v1473 = vshrl.u32 %v1472, 7
    %v1474 = vsub.s32 1, %v1473
    %v1475 = vrot.slane %v1466, %v1474
    %v1476 = vlaneseq
    %v1477 = vshrl.u32 %v1476, 7
    %v1478 = vsub.s32 2, %v1477
    %v1479 = vrot.slane %v1466, %v1478
    %v1480 = vlaneseq
    %v1481 = vshrl.u32 %v1480, 7
    %v1482 = vsub.s32 3, %v1481
    %v1483 = vrot.slane %v1466, %v1482
    %1488 = vmatprep.subr.mxu0 %v1270
    %1489 = vmatpush1.msra.mxu0 %v1269
    %1490 = vmatprep.subr.mxu0 %v1266
    %1491 = vmatpush1.msra.mxu0 %v1265
    %1492 = vmatprep.subr.mxu0 %v1262
    %1493 = vmatpush1.msra.mxu0 %v1261
    %1494 = vmatprep.subr.mxu0 %v1258
    %1495 = vmatpush1.msra.mxu0 %v1257
    %1496 = vmatprep.subr.mxu0 %v1254
    %1497 = vmatpush1.msra.mxu0 %v1253
    %1498 = vmatprep.subr.mxu0 %v1250
    %1499 = vmatpush1.msra.mxu0 %v1249
    %1500 = vmatprep.subr.mxu0 %v1246
    %1501 = vmatpush1.msra.mxu0 %v1245
    %1502 = vmatprep.subr.mxu0 %v1242
    %1503 = vmatpush1.msra.mxu0 %v1241
    %1504 = vmatprep.subr.mxu0 %v1238
    %1505 = vmatpush1.msra.mxu0 %v1237
    %1506 = vmatprep.subr.mxu0 %v1234
    %1507 = vmatpush1.msra.mxu0 %v1233
    %1508 = vmatprep.subr.mxu0 %v1230
    %1509 = vmatpush1.msra.mxu0 %v1229
    %1510 = vmatprep.subr.mxu0 %v1226
    %1511 = vmatpush1.msra.mxu0 %v1225
    %1512 = vmatprep.subr.mxu0 %v1222
    %1513 = vmatpush1.msra.mxu0 %v1221
    %1514 = vmatprep.subr.mxu0 %v1218
    %1515 = vmatpush1.msra.mxu0 %v1217
    %1516 = vmatprep.subr.mxu0 %v1214
    %1517 = vmatpush1.msra.mxu0 %v1213
    %1518 = vmatprep.subr.mxu0 %v1210
    %1519 = vmatpush1.msra.mxu0 %v1209
    %1520 = vmatprep.subr.mxu0 %v1334
    %1521 = vmatpush2.msra.mxu0 %v1333
    %1522 = vmatprep.subr.mxu0 %v1330
    %1523 = vmatpush2.msra.mxu0 %v1329
    %1524 = vmatprep.subr.mxu0 %v1326
    %1525 = vmatpush2.msra.mxu0 %v1325
    %1526 = vmatprep.subr.mxu0 %v1322
    %1527 = vmatpush2.msra.mxu0 %v1321
    %1528 = vmatprep.subr.mxu0 %v1318
    %1529 = vmatpush2.msra.mxu0 %v1317
    %1530 = vmatprep.subr.mxu0 %v1314
    %1531 = vmatpush2.msra.mxu0 %v1313
    %1532 = vmatprep.subr.mxu0 %v1310
    %1533 = vmatpush2.msra.mxu0 %v1309
    %1534 = vmatprep.subr.mxu0 %v1306
    %1535 = vmatpush2.msra.mxu0 %v1305
    %1536 = vmatprep.subr.mxu0 %v1302
    %1537 = vmatpush2.msra.mxu0 %v1301
    %1538 = vmatprep.subr.mxu0 %v1298
    %1539 = vmatpush2.msra.mxu0 %v1297
    %1540 = vmatprep.subr.mxu0 %v1294
    %1541 = vmatpush2.msra.mxu0 %v1293
    %1542 = vmatprep.subr.mxu0 %v1290
    %1543 = vmatpush2.msra.mxu0 %v1289
    %1544 = vmatprep.subr.mxu0 %v1286
    %1545 = vmatpush2.msra.mxu0 %v1285
    %1546 = vmatprep.subr.mxu0 %v1282
    %1547 = vmatpush2.msra.mxu0 %v1281
    %1548 = vmatprep.subr.mxu0 %v1278
    %1549 = vmatpush2.msra.mxu0 %v1277
    %1550 = vmatprep.subr.mxu0 %v1274
    %1551 = vmatpush2.msra.mxu0 %v1273
    %1552 = vmatprep.mubr.f32.mxu0 %v1205
    %1553 = vmatmul.mubr.f32.gmra.mxu0 %v1204
    %v1554 = vpop.f32.mrf.mxu0
    %v1555 = vadd.f32 %v1471, %v1554
    %v1556 = vpop.f32.mrf.mxu0
    %v1557 = vadd.f32 %v1475, %v1556
    %1558 = vdwg.mxu0
    %1559 = vmatprep.subr.mxu0 %v1398
    %1560 = vmatpush1.msra.mxu0 %v1397
    %1561 = vmatprep.subr.mxu0 %v1394
    %1562 = vmatpush1.msra.mxu0 %v1393
    %1563 = vmatprep.subr.mxu0 %v1390
    %1564 = vmatpush1.msra.mxu0 %v1389
    %1565 = vmatprep.subr.mxu0 %v1386
    %1566 = vmatpush1.msra.mxu0 %v1385
    %1567 = vmatprep.subr.mxu0 %v1382
    %1568 = vmatpush1.msra.mxu0 %v1381
    %1569 = vmatprep.subr.mxu0 %v1378
    %1570 = vmatpush1.msra.mxu0 %v1377
    %1571 = vmatprep.subr.mxu0 %v1374
    %1572 = vmatpush1.msra.mxu0 %v1373
    %1573 = vmatprep.subr.mxu0 %v1370
    %1574 = vmatpush1.msra.mxu0 %v1369
    %1575 = vmatprep.subr.mxu0 %v1366
    %1576 = vmatpush1.msra.mxu0 %v1365
    %1577 = vmatprep.subr.mxu0 %v1362
    %1578 = vmatpush1.msra.mxu0 %v1361
    %1579 = vmatprep.subr.mxu0 %v1358
    %1580 = vmatpush1.msra.mxu0 %v1357
    %1581 = vmatprep.subr.mxu0 %v1354
    %1582 = vmatpush1.msra.mxu0 %v1353
    %1583 = vmatprep.subr.mxu0 %v1350
    %1584 = vmatpush1.msra.mxu0 %v1349
    %1585 = vmatprep.subr.mxu0 %v1346
    %1586 = vmatpush1.msra.mxu0 %v1345
    %1587 = vmatprep.subr.mxu0 %v1342
    %1588 = vmatpush1.msra.mxu0 %v1341
    %1589 = vmatprep.subr.mxu0 %v1338
    %1590 = vmatpush1.msra.mxu0 %v1337
    %1591 = vmatprep.subr.mxu0 %v1462
    %1592 = vmatpush2.msra.mxu0 %v1461
    %1593 = vmatprep.subr.mxu0 %v1458
    %1594 = vmatpush2.msra.mxu0 %v1457
    %1595 = vmatprep.subr.mxu0 %v1454
    %1596 = vmatpush2.msra.mxu0 %v1453
    %1597 = vmatprep.subr.mxu0 %v1450
    %1598 = vmatpush2.msra.mxu0 %v1449
    %1599 = vmatprep.subr.mxu0 %v1446
    %1600 = vmatpush2.msra.mxu0 %v1445
    %1601 = vmatprep.subr.mxu0 %v1442
    %1602 = vmatpush2.msra.mxu0 %v1441
    %1603 = vmatprep.subr.mxu0 %v1438
    %1604 = vmatpush2.msra.mxu0 %v1437
    %1605 = vmatprep.subr.mxu0 %v1434
    %1606 = vmatpush2.msra.mxu0 %v1433
    %1607 = vmatprep.subr.mxu0 %v1430
    %1608 = vmatpush2.msra.mxu0 %v1429
    %1609 = vmatprep.subr.mxu0 %v1426
    %1610 = vmatpush2.msra.mxu0 %v1425
    %1611 = vmatprep.subr.mxu0 %v1422
    %1612 = vmatpush2.msra.mxu0 %v1421
    %1613 = vmatprep.subr.mxu0 %v1418
    %1614 = vmatpush2.msra.mxu0 %v1417
    %1615 = vmatprep.subr.mxu0 %v1414
    %1616 = vmatpush2.msra.mxu0 %v1413
    %1617 = vmatprep.subr.mxu0 %v1410
    %1618 = vmatpush2.msra.mxu0 %v1409
    %1619 = vmatprep.subr.mxu0 %v1406
    %1620 = vmatpush2.msra.mxu0 %v1405
    %1621 = vmatprep.subr.mxu0 %v1402
    %1622 = vmatpush2.msra.mxu0 %v1401
    %1623 = vmatprep.mubr.f32.mxu0 %v1207
    %1624 = vmatmul.mubr.f32.gmra.mxu0 %v1206
    %v1625 = vpop.f32.mrf.mxu0
    %v1626 = vadd.f32 %v1555, %v1625
    %v1627 = vpop.f32.mrf.mxu0
    %v1628 = vadd.f32 %v1557, %v1627
    %1629 = vdwg.mxu0
    %1630 = vmatprep.subr.mxu0 %v1272
    %1631 = vmatpush1.msra.mxu0 %v1271
    %1632 = vmatprep.subr.mxu0 %v1268
    %1633 = vmatpush1.msra.mxu0 %v1267
    %1634 = vmatprep.subr.mxu0 %v1264
    %1635 = vmatpush1.msra.mxu0 %v1263
    %1636 = vmatprep.subr.mxu0 %v1260
    %1637 = vmatpush1.msra.mxu0 %v1259
    %1638 = vmatprep.subr.mxu0 %v1256
    %1639 = vmatpush1.msra.mxu0 %v1255
    %1640 = vmatprep.subr.mxu0 %v1252
    %1641 = vmatpush1.msra.mxu0 %v1251
    %1642 = vmatprep.subr.mxu0 %v1248
    %1643 = vmatpush1.msra.mxu0 %v1247
    %1644 = vmatprep.subr.mxu0 %v1244
    %1645 = vmatpush1.msra.mxu0 %v1243
    %1646 = vmatprep.subr.mxu0 %v1240
    %1647 = vmatpush1.msra.mxu0 %v1239
    %1648 = vmatprep.subr.mxu0 %v1236
    %1649 = vmatpush1.msra.mxu0 %v1235
    %1650 = vmatprep.subr.mxu0 %v1232
    %1651 = vmatpush1.msra.mxu0 %v1231
    %1652 = vmatprep.subr.mxu0 %v1228
    %1653 = vmatpush1.msra.mxu0 %v1227
    %1654 = vmatprep.subr.mxu0 %v1224
    %1655 = vmatpush1.msra.mxu0 %v1223
    %1656 = vmatprep.subr.mxu0 %v1220
    %1657 = vmatpush1.msra.mxu0 %v1219
    %1658 = vmatprep.subr.mxu0 %v1216
    %1659 = vmatpush1.msra.mxu0 %v1215
    %1660 = vmatprep.subr.mxu0 %v1212
    %1661 = vmatpush1.msra.mxu0 %v1211
    %1662 = vmatprep.subr.mxu0 %v1336
    %1663 = vmatpush2.msra.mxu0 %v1335
    %1664 = vmatprep.subr.mxu0 %v1332
    %1665 = vmatpush2.msra.mxu0 %v1331
    %1666 = vmatprep.subr.mxu0 %v1328
    %1667 = vmatpush2.msra.mxu0 %v1327
    %1668 = vmatprep.subr.mxu0 %v1324
    %1669 = vmatpush2.msra.mxu0 %v1323
    %1670 = vmatprep.subr.mxu0 %v1320
    %1671 = vmatpush2.msra.mxu0 %v1319
    %1672 = vmatprep.subr.mxu0 %v1316
    %1673 = vmatpush2.msra.mxu0 %v1315
    %1674 = vmatprep.subr.mxu0 %v1312
    %1675 = vmatpush2.msra.mxu0 %v1311
    %1676 = vmatprep.subr.mxu0 %v1308
    %1677 = vmatpush2.msra.mxu0 %v1307
    %1678 = vmatprep.subr.mxu0 %v1304
    %1679 = vmatpush2.msra.mxu0 %v1303
    %1680 = vmatprep.subr.mxu0 %v1300
    %1681 = vmatpush2.msra.mxu0 %v1299
    %1682 = vmatprep.subr.mxu0 %v1296
    %1683 = vmatpush2.msra.mxu0 %v1295
    %1684 = vmatprep.subr.mxu0 %v1292
    %1685 = vmatpush2.msra.mxu0 %v1291
    %1686 = vmatprep.subr.mxu0 %v1288
    %1687 = vmatpush2.msra.mxu0 %v1287
    %1688 = vmatprep.subr.mxu0 %v1284
    %1689 = vmatpush2.msra.mxu0 %v1283
    %1690 = vmatprep.subr.mxu0 %v1280
    %1691 = vmatpush2.msra.mxu0 %v1279
    %1692 = vmatprep.subr.mxu0 %v1276
    %1693 = vmatpush2.msra.mxu0 %v1275
    %1694 = vmatprep.mubr.f32.mxu0 %v1205
    %1695 = vmatmul.mubr.f32.gmra.mxu0 %v1204
    %v1696 = vpop.f32.mrf.mxu0
    %v1697 = vadd.f32 %v1479, %v1696
    %v1698 = vpop.f32.mrf.mxu0
    %v1699 = vadd.f32 %v1483, %v1698
    %1700 = vdwg.mxu0
    %1701 = vmatprep.subr.mxu0 %v1400
    %1702 = vmatpush1.msra.mxu0 %v1399
    %1703 = vmatprep.subr.mxu0 %v1396
    %1704 = vmatpush1.msra.mxu0 %v1395
    %1705 = vmatprep.subr.mxu0 %v1392
    %1706 = vmatpush1.msra.mxu0 %v1391
    %1707 = vmatprep.subr.mxu0 %v1388
    %1708 = vmatpush1.msra.mxu0 %v1387
    %1709 = vmatprep.subr.mxu0 %v1384
    %1710 = vmatpush1.msra.mxu0 %v1383
    %1711 = vmatprep.subr.mxu0 %v1380
    %1712 = vmatpush1.msra.mxu0 %v1379
    %1713 = vmatprep.subr.mxu0 %v1376
    %1714 = vmatpush1.msra.mxu0 %v1375
    %1715 = vmatprep.subr.mxu0 %v1372
    %1716 = vmatpush1.msra.mxu0 %v1371
    %1717 = vmatprep.subr.mxu0 %v1368
    %1718 = vmatpush1.msra.mxu0 %v1367
    %1719 = vmatprep.subr.mxu0 %v1364
    %1720 = vmatpush1.msra.mxu0 %v1363
    %1721 = vmatprep.subr.mxu0 %v1360
    %1722 = vmatpush1.msra.mxu0 %v1359
    %1723 = vmatprep.subr.mxu0 %v1356
    %1724 = vmatpush1.msra.mxu0 %v1355
    %1725 = vmatprep.subr.mxu0 %v1352
    %1726 = vmatpush1.msra.mxu0 %v1351
    %1727 = vmatprep.subr.mxu0 %v1348
    %1728 = vmatpush1.msra.mxu0 %v1347
    %1729 = vmatprep.subr.mxu0 %v1344
    %1730 = vmatpush1.msra.mxu0 %v1343
    %1731 = vmatprep.subr.mxu0 %v1340
    %1732 = vmatpush1.msra.mxu0 %v1339
    %1733 = vmatprep.subr.mxu0 %v1464
    %1734 = vmatpush2.msra.mxu0 %v1463
    %1735 = vmatprep.subr.mxu0 %v1460
    %1736 = vmatpush2.msra.mxu0 %v1459
    %1737 = vmatprep.subr.mxu0 %v1456
    %1738 = vmatpush2.msra.mxu0 %v1455
    %1739 = vmatprep.subr.mxu0 %v1452
    %1740 = vmatpush2.msra.mxu0 %v1451
    %1741 = vmatprep.subr.mxu0 %v1448
    %1742 = vmatpush2.msra.mxu0 %v1447
    %1743 = vmatprep.subr.mxu0 %v1444
    %1744 = vmatpush2.msra.mxu0 %v1443
    %1745 = vmatprep.subr.mxu0 %v1440
    %1746 = vmatpush2.msra.mxu0 %v1439
    %1747 = vmatprep.subr.mxu0 %v1436
    %1748 = vmatpush2.msra.mxu0 %v1435
    %1749 = vmatprep.subr.mxu0 %v1432
    %1750 = vmatpush2.msra.mxu0 %v1431
    %1751 = vmatprep.subr.mxu0 %v1428
    %1752 = vmatpush2.msra.mxu0 %v1427
    %1753 = vmatprep.subr.mxu0 %v1424
    %1754 = vmatpush2.msra.mxu0 %v1423
    %1755 = vmatprep.subr.mxu0 %v1420
    %1756 = vmatpush2.msra.mxu0 %v1419
    %1757 = vmatprep.subr.mxu0 %v1416
    %1758 = vmatpush2.msra.mxu0 %v1415
    %1759 = vmatprep.subr.mxu0 %v1412
    %1760 = vmatpush2.msra.mxu0 %v1411
    %1761 = vmatprep.subr.mxu0 %v1408
    %1762 = vmatpush2.msra.mxu0 %v1407
    %1763 = vmatprep.subr.mxu0 %v1404
    %1764 = vmatpush2.msra.mxu0 %v1403
    %1765 = vmatprep.mubr.f32.mxu0 %v1207
    %1766 = vmatmul.mubr.f32.gmra.mxu0 %v1206
    %v1767 = vpop.f32.mrf.mxu0
    %v1768 = vadd.f32 %v1697, %v1767
    %v1769 = vpop.f32.mrf.mxu0
    %v1770 = vadd.f32 %v1699, %v1769
    %1771 = vdwg.mxu0
    %vm1772 = vcmp.ge.f32.partialorder %v1626, 0.0
    %vm1773 = vcmp.ge.f32.partialorder %v1628, 0.0
    %vm1774 = vcmp.ge.f32.partialorder %v1768, 0.0
    %vm1775 = vcmp.ge.f32.partialorder %v1770, 0.0
    %v1776 = vmul.f32 %v1626, 0.2
    %v1777 = vmul.f32 %v1628, 0.2
    %v1778 = vmul.f32 %v1768, 0.2
    %v1779 = vmul.f32 %v1770, 0.2
    %v1780 = vsel %vm1772, %v1626, %v1776
    %v1781 = vsel %vm1773, %v1628, %v1777
    %v1782 = vsel %vm1774, %v1768, %v1778
    %v1783 = vsel %vm1775, %v1770, %v1779
    %s1784 = scalar_lea.vmem [#allocation5], 6144
    %v1785 = vld [vmem:[%s1784] sm:$0xff]
    %v1786 = vld [vmem:[%s1784 + $0x8] sm:$0xff]
    %v1787 = vld [vmem:[%s1784 + $0x10] sm:$0xff]
    %v1788 = vld [vmem:[%s1784 + $0x18] sm:$0xff]
    %v1789 = vld [vmem:[%s1784 + $0x20] sm:$0xff]
    %v1790 = vld [vmem:[%s1784 + $0x28] sm:$0xff]
    %v1791 = vld [vmem:[%s1784 + $0x30] sm:$0xff]
    %v1792 = vld [vmem:[%s1784 + $0x38] sm:$0xff]
    %v1793 = vld [vmem:[%s1784 + $0x40] sm:$0xff]
    %v1794 = vld [vmem:[%s1784 + $0x48] sm:$0xff]
    %v1795 = vld [vmem:[%s1784 + $0x50] sm:$0xff]
    %v1796 = vld [vmem:[%s1784 + $0x58] sm:$0xff]
    %v1797 = vld [vmem:[%s1784 + $0x60] sm:$0xff]
    %v1798 = vld [vmem:[%s1784 + $0x68] sm:$0xff]
    %v1799 = vld [vmem:[%s1784 + $0x70] sm:$0xff]
    %v1800 = vld [vmem:[%s1784 + $0x78] sm:$0xff]
    %v1801 = vld [vmem:[%s1784 + $0x80] sm:$0xff]
    %v1802 = vld [vmem:[%s1784 + $0x88] sm:$0xff]
    %v1803 = vld [vmem:[%s1784 + $0x90] sm:$0xff]
    %v1804 = vld [vmem:[%s1784 + $0x98] sm:$0xff]
    %v1805 = vld [vmem:[%s1784 + $0xa0] sm:$0xff]
    %v1806 = vld [vmem:[%s1784 + $0xa8] sm:$0xff]
    %v1807 = vld [vmem:[%s1784 + $0xb0] sm:$0xff]
    %v1808 = vld [vmem:[%s1784 + $0xb8] sm:$0xff]
    %v1809 = vld [vmem:[%s1784 + $0xc0] sm:$0xff]
    %v1810 = vld [vmem:[%s1784 + $0xc8] sm:$0xff]
    %v1811 = vld [vmem:[%s1784 + $0xd0] sm:$0xff]
    %v1812 = vld [vmem:[%s1784 + $0xd8] sm:$0xff]
    %v1813 = vld [vmem:[%s1784 + $0xe0] sm:$0xff]
    %v1814 = vld [vmem:[%s1784 + $0xe8] sm:$0xff]
    %v1815 = vld [vmem:[%s1784 + $0xf0] sm:$0xff]
    %v1816 = vld [vmem:[%s1784 + $0xf8] sm:$0xff]
    %v1817 = vld [vmem:[%s1784 + $0x100] sm:$0xff]
    %v1818 = vld [vmem:[%s1784 + $0x108] sm:$0xff]
    %v1819 = vld [vmem:[%s1784 + $0x110] sm:$0xff]
    %v1820 = vld [vmem:[%s1784 + $0x118] sm:$0xff]
    %v1821 = vld [vmem:[%s1784 + $0x120] sm:$0xff]
    %v1822 = vld [vmem:[%s1784 + $0x128] sm:$0xff]
    %v1823 = vld [vmem:[%s1784 + $0x130] sm:$0xff]
    %v1824 = vld [vmem:[%s1784 + $0x138] sm:$0xff]
    %v1825 = vld [vmem:[%s1784 + $0x140] sm:$0xff]
    %v1826 = vld [vmem:[%s1784 + $0x148] sm:$0xff]
    %v1827 = vld [vmem:[%s1784 + $0x150] sm:$0xff]
    %v1828 = vld [vmem:[%s1784 + $0x158] sm:$0xff]
    %v1829 = vld [vmem:[%s1784 + $0x160] sm:$0xff]
    %v1830 = vld [vmem:[%s1784 + $0x168] sm:$0xff]
    %v1831 = vld [vmem:[%s1784 + $0x170] sm:$0xff]
    %v1832 = vld [vmem:[%s1784 + $0x178] sm:$0xff]
    %v1833 = vld [vmem:[%s1784 + $0x180] sm:$0xff]
    %v1834 = vld [vmem:[%s1784 + $0x188] sm:$0xff]
    %v1835 = vld [vmem:[%s1784 + $0x190] sm:$0xff]
    %v1836 = vld [vmem:[%s1784 + $0x198] sm:$0xff]
    %v1837 = vld [vmem:[%s1784 + $0x1a0] sm:$0xff]
    %v1838 = vld [vmem:[%s1784 + $0x1a8] sm:$0xff]
    %v1839 = vld [vmem:[%s1784 + $0x1b0] sm:$0xff]
    %v1840 = vld [vmem:[%s1784 + $0x1b8] sm:$0xff]
    %v1841 = vld [vmem:[%s1784 + $0x1c0] sm:$0xff]
    %v1842 = vld [vmem:[%s1784 + $0x1c8] sm:$0xff]
    %v1843 = vld [vmem:[%s1784 + $0x1d0] sm:$0xff]
    %v1844 = vld [vmem:[%s1784 + $0x1d8] sm:$0xff]
    %v1845 = vld [vmem:[%s1784 + $0x1e0] sm:$0xff]
    %v1846 = vld [vmem:[%s1784 + $0x1e8] sm:$0xff]
    %v1847 = vld [vmem:[%s1784 + $0x1f0] sm:$0xff]
    %v1848 = vld [vmem:[%s1784 + $0x1f8] sm:$0xff]
    %v1849 = vld [vmem:[%s1784 + $0x200] sm:$0xff]
    %v1850 = vld [vmem:[%s1784 + $0x208] sm:$0xff]
    %v1851 = vld [vmem:[%s1784 + $0x210] sm:$0xff]
    %v1852 = vld [vmem:[%s1784 + $0x218] sm:$0xff]
    %v1853 = vld [vmem:[%s1784 + $0x220] sm:$0xff]
    %v1854 = vld [vmem:[%s1784 + $0x228] sm:$0xff]
    %v1855 = vld [vmem:[%s1784 + $0x230] sm:$0xff]
    %v1856 = vld [vmem:[%s1784 + $0x238] sm:$0xff]
    %v1857 = vld [vmem:[%s1784 + $0x240] sm:$0xff]
    %v1858 = vld [vmem:[%s1784 + $0x248] sm:$0xff]
    %v1859 = vld [vmem:[%s1784 + $0x250] sm:$0xff]
    %v1860 = vld [vmem:[%s1784 + $0x258] sm:$0xff]
    %v1861 = vld [vmem:[%s1784 + $0x260] sm:$0xff]
    %v1862 = vld [vmem:[%s1784 + $0x268] sm:$0xff]
    %v1863 = vld [vmem:[%s1784 + $0x270] sm:$0xff]
    %v1864 = vld [vmem:[%s1784 + $0x278] sm:$0xff]
    %v1865 = vld [vmem:[%s1784 + $0x280] sm:$0xff]
    %v1866 = vld [vmem:[%s1784 + $0x288] sm:$0xff]
    %v1867 = vld [vmem:[%s1784 + $0x290] sm:$0xff]
    %v1868 = vld [vmem:[%s1784 + $0x298] sm:$0xff]
    %v1869 = vld [vmem:[%s1784 + $0x2a0] sm:$0xff]
    %v1870 = vld [vmem:[%s1784 + $0x2a8] sm:$0xff]
    %v1871 = vld [vmem:[%s1784 + $0x2b0] sm:$0xff]
    %v1872 = vld [vmem:[%s1784 + $0x2b8] sm:$0xff]
    %v1873 = vld [vmem:[%s1784 + $0x2c0] sm:$0xff]
    %v1874 = vld [vmem:[%s1784 + $0x2c8] sm:$0xff]
    %v1875 = vld [vmem:[%s1784 + $0x2d0] sm:$0xff]
    %v1876 = vld [vmem:[%s1784 + $0x2d8] sm:$0xff]
    %v1877 = vld [vmem:[%s1784 + $0x2e0] sm:$0xff]
    %v1878 = vld [vmem:[%s1784 + $0x2e8] sm:$0xff]
    %v1879 = vld [vmem:[%s1784 + $0x2f0] sm:$0xff]
    %v1880 = vld [vmem:[%s1784 + $0x2f8] sm:$0xff]
    %v1881 = vld [vmem:[%s1784 + $0x300] sm:$0xff]
    %v1882 = vld [vmem:[%s1784 + $0x308] sm:$0xff]
    %v1883 = vld [vmem:[%s1784 + $0x310] sm:$0xff]
    %v1884 = vld [vmem:[%s1784 + $0x318] sm:$0xff]
    %v1885 = vld [vmem:[%s1784 + $0x320] sm:$0xff]
    %v1886 = vld [vmem:[%s1784 + $0x328] sm:$0xff]
    %v1887 = vld [vmem:[%s1784 + $0x330] sm:$0xff]
    %v1888 = vld [vmem:[%s1784 + $0x338] sm:$0xff]
    %v1889 = vld [vmem:[%s1784 + $0x340] sm:$0xff]
    %v1890 = vld [vmem:[%s1784 + $0x348] sm:$0xff]
    %v1891 = vld [vmem:[%s1784 + $0x350] sm:$0xff]
    %v1892 = vld [vmem:[%s1784 + $0x358] sm:$0xff]
    %v1893 = vld [vmem:[%s1784 + $0x360] sm:$0xff]
    %v1894 = vld [vmem:[%s1784 + $0x368] sm:$0xff]
    %v1895 = vld [vmem:[%s1784 + $0x370] sm:$0xff]
    %v1896 = vld [vmem:[%s1784 + $0x378] sm:$0xff]
    %v1897 = vld [vmem:[%s1784 + $0x380] sm:$0xff]
    %v1898 = vld [vmem:[%s1784 + $0x388] sm:$0xff]
    %v1899 = vld [vmem:[%s1784 + $0x390] sm:$0xff]
    %v1900 = vld [vmem:[%s1784 + $0x398] sm:$0xff]
    %v1901 = vld [vmem:[%s1784 + $0x3a0] sm:$0xff]
    %v1902 = vld [vmem:[%s1784 + $0x3a8] sm:$0xff]
    %v1903 = vld [vmem:[%s1784 + $0x3b0] sm:$0xff]
    %v1904 = vld [vmem:[%s1784 + $0x3b8] sm:$0xff]
    %v1905 = vld [vmem:[%s1784 + $0x3c0] sm:$0xff]
    %v1906 = vld [vmem:[%s1784 + $0x3c8] sm:$0xff]
    %v1907 = vld [vmem:[%s1784 + $0x3d0] sm:$0xff]
    %v1908 = vld [vmem:[%s1784 + $0x3d8] sm:$0xff]
    %v1909 = vld [vmem:[%s1784 + $0x3e0] sm:$0xff]
    %v1910 = vld [vmem:[%s1784 + $0x3e8] sm:$0xff]
    %v1911 = vld [vmem:[%s1784 + $0x3f0] sm:$0xff]
    %v1912 = vld [vmem:[%s1784 + $0x3f8] sm:$0xff]
    %v1913 = vld [vmem:[%s1784 + $0x400] sm:$0xff]
    %v1914 = vld [vmem:[%s1784 + $0x408] sm:$0xff]
    %v1915 = vld [vmem:[%s1784 + $0x410] sm:$0xff]
    %v1916 = vld [vmem:[%s1784 + $0x418] sm:$0xff]
    %v1917 = vld [vmem:[%s1784 + $0x420] sm:$0xff]
    %v1918 = vld [vmem:[%s1784 + $0x428] sm:$0xff]
    %v1919 = vld [vmem:[%s1784 + $0x430] sm:$0xff]
    %v1920 = vld [vmem:[%s1784 + $0x438] sm:$0xff]
    %v1921 = vld [vmem:[%s1784 + $0x440] sm:$0xff]
    %v1922 = vld [vmem:[%s1784 + $0x448] sm:$0xff]
    %v1923 = vld [vmem:[%s1784 + $0x450] sm:$0xff]
    %v1924 = vld [vmem:[%s1784 + $0x458] sm:$0xff]
    %v1925 = vld [vmem:[%s1784 + $0x460] sm:$0xff]
    %v1926 = vld [vmem:[%s1784 + $0x468] sm:$0xff]
    %v1927 = vld [vmem:[%s1784 + $0x470] sm:$0xff]
    %v1928 = vld [vmem:[%s1784 + $0x478] sm:$0xff]
    %v1929 = vld [vmem:[%s1784 + $0x480] sm:$0xff]
    %v1930 = vld [vmem:[%s1784 + $0x488] sm:$0xff]
    %v1931 = vld [vmem:[%s1784 + $0x490] sm:$0xff]
    %v1932 = vld [vmem:[%s1784 + $0x498] sm:$0xff]
    %v1933 = vld [vmem:[%s1784 + $0x4a0] sm:$0xff]
    %v1934 = vld [vmem:[%s1784 + $0x4a8] sm:$0xff]
    %v1935 = vld [vmem:[%s1784 + $0x4b0] sm:$0xff]
    %v1936 = vld [vmem:[%s1784 + $0x4b8] sm:$0xff]
    %v1937 = vld [vmem:[%s1784 + $0x4c0] sm:$0xff]
    %v1938 = vld [vmem:[%s1784 + $0x4c8] sm:$0xff]
    %v1939 = vld [vmem:[%s1784 + $0x4d0] sm:$0xff]
    %v1940 = vld [vmem:[%s1784 + $0x4d8] sm:$0xff]
    %v1941 = vld [vmem:[%s1784 + $0x4e0] sm:$0xff]
    %v1942 = vld [vmem:[%s1784 + $0x4e8] sm:$0xff]
    %v1943 = vld [vmem:[%s1784 + $0x4f0] sm:$0xff]
    %v1944 = vld [vmem:[%s1784 + $0x4f8] sm:$0xff]
    %v1945 = vld [vmem:[%s1784 + $0x500] sm:$0xff]
    %v1946 = vld [vmem:[%s1784 + $0x508] sm:$0xff]
    %v1947 = vld [vmem:[%s1784 + $0x510] sm:$0xff]
    %v1948 = vld [vmem:[%s1784 + $0x518] sm:$0xff]
    %v1949 = vld [vmem:[%s1784 + $0x520] sm:$0xff]
    %v1950 = vld [vmem:[%s1784 + $0x528] sm:$0xff]
    %v1951 = vld [vmem:[%s1784 + $0x530] sm:$0xff]
    %v1952 = vld [vmem:[%s1784 + $0x538] sm:$0xff]
    %v1953 = vld [vmem:[%s1784 + $0x540] sm:$0xff]
    %v1954 = vld [vmem:[%s1784 + $0x548] sm:$0xff]
    %v1955 = vld [vmem:[%s1784 + $0x550] sm:$0xff]
    %v1956 = vld [vmem:[%s1784 + $0x558] sm:$0xff]
    %v1957 = vld [vmem:[%s1784 + $0x560] sm:$0xff]
    %v1958 = vld [vmem:[%s1784 + $0x568] sm:$0xff]
    %v1959 = vld [vmem:[%s1784 + $0x570] sm:$0xff]
    %v1960 = vld [vmem:[%s1784 + $0x578] sm:$0xff]
    %v1961 = vld [vmem:[%s1784 + $0x580] sm:$0xff]
    %v1962 = vld [vmem:[%s1784 + $0x588] sm:$0xff]
    %v1963 = vld [vmem:[%s1784 + $0x590] sm:$0xff]
    %v1964 = vld [vmem:[%s1784 + $0x598] sm:$0xff]
    %v1965 = vld [vmem:[%s1784 + $0x5a0] sm:$0xff]
    %v1966 = vld [vmem:[%s1784 + $0x5a8] sm:$0xff]
    %v1967 = vld [vmem:[%s1784 + $0x5b0] sm:$0xff]
    %v1968 = vld [vmem:[%s1784 + $0x5b8] sm:$0xff]
    %v1969 = vld [vmem:[%s1784 + $0x5c0] sm:$0xff]
    %v1970 = vld [vmem:[%s1784 + $0x5c8] sm:$0xff]
    %v1971 = vld [vmem:[%s1784 + $0x5d0] sm:$0xff]
    %v1972 = vld [vmem:[%s1784 + $0x5d8] sm:$0xff]
    %v1973 = vld [vmem:[%s1784 + $0x5e0] sm:$0xff]
    %v1974 = vld [vmem:[%s1784 + $0x5e8] sm:$0xff]
    %v1975 = vld [vmem:[%s1784 + $0x5f0] sm:$0xff]
    %v1976 = vld [vmem:[%s1784 + $0x5f8] sm:$0xff]
    %v1977 = vld [vmem:[%s1784 + $0x600] sm:$0xff]
    %v1978 = vld [vmem:[%s1784 + $0x608] sm:$0xff]
    %v1979 = vld [vmem:[%s1784 + $0x610] sm:$0xff]
    %v1980 = vld [vmem:[%s1784 + $0x618] sm:$0xff]
    %v1981 = vld [vmem:[%s1784 + $0x620] sm:$0xff]
    %v1982 = vld [vmem:[%s1784 + $0x628] sm:$0xff]
    %v1983 = vld [vmem:[%s1784 + $0x630] sm:$0xff]
    %v1984 = vld [vmem:[%s1784 + $0x638] sm:$0xff]
    %v1985 = vld [vmem:[%s1784 + $0x640] sm:$0xff]
    %v1986 = vld [vmem:[%s1784 + $0x648] sm:$0xff]
    %v1987 = vld [vmem:[%s1784 + $0x650] sm:$0xff]
    %v1988 = vld [vmem:[%s1784 + $0x658] sm:$0xff]
    %v1989 = vld [vmem:[%s1784 + $0x660] sm:$0xff]
    %v1990 = vld [vmem:[%s1784 + $0x668] sm:$0xff]
    %v1991 = vld [vmem:[%s1784 + $0x670] sm:$0xff]
    %v1992 = vld [vmem:[%s1784 + $0x678] sm:$0xff]
    %v1993 = vld [vmem:[%s1784 + $0x680] sm:$0xff]
    %v1994 = vld [vmem:[%s1784 + $0x688] sm:$0xff]
    %v1995 = vld [vmem:[%s1784 + $0x690] sm:$0xff]
    %v1996 = vld [vmem:[%s1784 + $0x698] sm:$0xff]
    %v1997 = vld [vmem:[%s1784 + $0x6a0] sm:$0xff]
    %v1998 = vld [vmem:[%s1784 + $0x6a8] sm:$0xff]
    %v1999 = vld [vmem:[%s1784 + $0x6b0] sm:$0xff]
    %v2000 = vld [vmem:[%s1784 + $0x6b8] sm:$0xff]
    %v2001 = vld [vmem:[%s1784 + $0x6c0] sm:$0xff]
    %v2002 = vld [vmem:[%s1784 + $0x6c8] sm:$0xff]
    %v2003 = vld [vmem:[%s1784 + $0x6d0] sm:$0xff]
    %v2004 = vld [vmem:[%s1784 + $0x6d8] sm:$0xff]
    %v2005 = vld [vmem:[%s1784 + $0x6e0] sm:$0xff]
    %v2006 = vld [vmem:[%s1784 + $0x6e8] sm:$0xff]
    %v2007 = vld [vmem:[%s1784 + $0x6f0] sm:$0xff]
    %v2008 = vld [vmem:[%s1784 + $0x6f8] sm:$0xff]
    %v2009 = vld [vmem:[%s1784 + $0x700] sm:$0xff]
    %v2010 = vld [vmem:[%s1784 + $0x708] sm:$0xff]
    %v2011 = vld [vmem:[%s1784 + $0x710] sm:$0xff]
    %v2012 = vld [vmem:[%s1784 + $0x718] sm:$0xff]
    %v2013 = vld [vmem:[%s1784 + $0x720] sm:$0xff]
    %v2014 = vld [vmem:[%s1784 + $0x728] sm:$0xff]
    %v2015 = vld [vmem:[%s1784 + $0x730] sm:$0xff]
    %v2016 = vld [vmem:[%s1784 + $0x738] sm:$0xff]
    %v2017 = vld [vmem:[%s1784 + $0x740] sm:$0xff]
    %v2018 = vld [vmem:[%s1784 + $0x748] sm:$0xff]
    %v2019 = vld [vmem:[%s1784 + $0x750] sm:$0xff]
    %v2020 = vld [vmem:[%s1784 + $0x758] sm:$0xff]
    %v2021 = vld [vmem:[%s1784 + $0x760] sm:$0xff]
    %v2022 = vld [vmem:[%s1784 + $0x768] sm:$0xff]
    %v2023 = vld [vmem:[%s1784 + $0x770] sm:$0xff]
    %v2024 = vld [vmem:[%s1784 + $0x778] sm:$0xff]
    %v2025 = vld [vmem:[%s1784 + $0x780] sm:$0xff]
    %v2026 = vld [vmem:[%s1784 + $0x788] sm:$0xff]
    %v2027 = vld [vmem:[%s1784 + $0x790] sm:$0xff]
    %v2028 = vld [vmem:[%s1784 + $0x798] sm:$0xff]
    %v2029 = vld [vmem:[%s1784 + $0x7a0] sm:$0xff]
    %v2030 = vld [vmem:[%s1784 + $0x7a8] sm:$0xff]
    %v2031 = vld [vmem:[%s1784 + $0x7b0] sm:$0xff]
    %v2032 = vld [vmem:[%s1784 + $0x7b8] sm:$0xff]
    %v2033 = vld [vmem:[%s1784 + $0x7c0] sm:$0xff]
    %v2034 = vld [vmem:[%s1784 + $0x7c8] sm:$0xff]
    %v2035 = vld [vmem:[%s1784 + $0x7d0] sm:$0xff]
    %v2036 = vld [vmem:[%s1784 + $0x7d8] sm:$0xff]
    %v2037 = vld [vmem:[%s1784 + $0x7e0] sm:$0xff]
    %v2038 = vld [vmem:[%s1784 + $0x7e8] sm:$0xff]
    %v2039 = vld [vmem:[%s1784 + $0x7f0] sm:$0xff]
    %v2040 = vld [vmem:[%s1784 + $0x7f8] sm:$0xff]
    %s2041 = scalar_lea.vmem [#allocation7], 12
    %v2042 = vld [vmem:[%s2041] sm:$0xf]
    %v2044 = vlaneseq
    %v2045 = vshrl.u32 %v2044, 7
    %v2046 = vsub.s32 0, %v2045
    %v2047 = vrot.slane %v2042, %v2046
    %v2048 = vlaneseq
    %v2049 = vshrl.u32 %v2048, 7
    %v2050 = vsub.s32 1, %v2049
    %v2051 = vrot.slane %v2042, %v2050
    %v2052 = vlaneseq
    %v2053 = vshrl.u32 %v2052, 7
    %v2054 = vsub.s32 2, %v2053
    %v2055 = vrot.slane %v2042, %v2054
    %v2056 = vlaneseq
    %v2057 = vshrl.u32 %v2056, 7
    %v2058 = vsub.s32 3, %v2057
    %v2059 = vrot.slane %v2042, %v2058
    %2064 = vmatprep.subr.mxu0 %v1846
    %2065 = vmatpush1.msra.mxu0 %v1845
    %2066 = vmatprep.subr.mxu0 %v1842
    %2067 = vmatpush1.msra.mxu0 %v1841
    %2068 = vmatprep.subr.mxu0 %v1838
    %2069 = vmatpush1.msra.mxu0 %v1837
    %2070 = vmatprep.subr.mxu0 %v1834
    %2071 = vmatpush1.msra.mxu0 %v1833
    %2072 = vmatprep.subr.mxu0 %v1830
    %2073 = vmatpush1.msra.mxu0 %v1829
    %2074 = vmatprep.subr.mxu0 %v1826
    %2075 = vmatpush1.msra.mxu0 %v1825
    %2076 = vmatprep.subr.mxu0 %v1822
    %2077 = vmatpush1.msra.mxu0 %v1821
    %2078 = vmatprep.subr.mxu0 %v1818
    %2079 = vmatpush1.msra.mxu0 %v1817
    %2080 = vmatprep.subr.mxu0 %v1814
    %2081 = vmatpush1.msra.mxu0 %v1813
    %2082 = vmatprep.subr.mxu0 %v1810
    %2083 = vmatpush1.msra.mxu0 %v1809
    %2084 = vmatprep.subr.mxu0 %v1806
    %2085 = vmatpush1.msra.mxu0 %v1805
    %2086 = vmatprep.subr.mxu0 %v1802
    %2087 = vmatpush1.msra.mxu0 %v1801
    %2088 = vmatprep.subr.mxu0 %v1798
    %2089 = vmatpush1.msra.mxu0 %v1797
    %2090 = vmatprep.subr.mxu0 %v1794
    %2091 = vmatpush1.msra.mxu0 %v1793
    %2092 = vmatprep.subr.mxu0 %v1790
    %2093 = vmatpush1.msra.mxu0 %v1789
    %2094 = vmatprep.subr.mxu0 %v1786
    %2095 = vmatpush1.msra.mxu0 %v1785
    %2096 = vmatprep.subr.mxu0 %v1910
    %2097 = vmatpush2.msra.mxu0 %v1909
    %2098 = vmatprep.subr.mxu0 %v1906
    %2099 = vmatpush2.msra.mxu0 %v1905
    %2100 = vmatprep.subr.mxu0 %v1902
    %2101 = vmatpush2.msra.mxu0 %v1901
    %2102 = vmatprep.subr.mxu0 %v1898
    %2103 = vmatpush2.msra.mxu0 %v1897
    %2104 = vmatprep.subr.mxu0 %v1894
    %2105 = vmatpush2.msra.mxu0 %v1893
    %2106 = vmatprep.subr.mxu0 %v1890
    %2107 = vmatpush2.msra.mxu0 %v1889
    %2108 = vmatprep.subr.mxu0 %v1886
    %2109 = vmatpush2.msra.mxu0 %v1885
    %2110 = vmatprep.subr.mxu0 %v1882
    %2111 = vmatpush2.msra.mxu0 %v1881
    %2112 = vmatprep.subr.mxu0 %v1878
    %2113 = vmatpush2.msra.mxu0 %v1877
    %2114 = vmatprep.subr.mxu0 %v1874
    %2115 = vmatpush2.msra.mxu0 %v1873
    %2116 = vmatprep.subr.mxu0 %v1870
    %2117 = vmatpush2.msra.mxu0 %v1869
    %2118 = vmatprep.subr.mxu0 %v1866
    %2119 = vmatpush2.msra.mxu0 %v1865
    %2120 = vmatprep.subr.mxu0 %v1862
    %2121 = vmatpush2.msra.mxu0 %v1861
    %2122 = vmatprep.subr.mxu0 %v1858
    %2123 = vmatpush2.msra.mxu0 %v1857
    %2124 = vmatprep.subr.mxu0 %v1854
    %2125 = vmatpush2.msra.mxu0 %v1853
    %2126 = vmatprep.subr.mxu0 %v1850
    %2127 = vmatpush2.msra.mxu0 %v1849
    %2128 = vmatprep.mubr.f32.mxu0 %v1781
    %2129 = vmatmul.mubr.f32.gmra.mxu0 %v1780
    %v2130 = vpop.f32.mrf.mxu0
    %v2131 = vadd.f32 %v2047, %v2130
    %v2132 = vpop.f32.mrf.mxu0
    %v2133 = vadd.f32 %v2051, %v2132
    %2134 = vdwg.mxu0
    %2135 = vmatprep.subr.mxu0 %v1974
    %2136 = vmatpush1.msra.mxu0 %v1973
    %2137 = vmatprep.subr.mxu0 %v1970
    %2138 = vmatpush1.msra.mxu0 %v1969
    %2139 = vmatprep.subr.mxu0 %v1966
    %2140 = vmatpush1.msra.mxu0 %v1965
    %2141 = vmatprep.subr.mxu0 %v1962
    %2142 = vmatpush1.msra.mxu0 %v1961
    %2143 = vmatprep.subr.mxu0 %v1958
    %2144 = vmatpush1.msra.mxu0 %v1957
    %2145 = vmatprep.subr.mxu0 %v1954
    %2146 = vmatpush1.msra.mxu0 %v1953
    %2147 = vmatprep.subr.mxu0 %v1950
    %2148 = vmatpush1.msra.mxu0 %v1949
    %2149 = vmatprep.subr.mxu0 %v1946
    %2150 = vmatpush1.msra.mxu0 %v1945
    %2151 = vmatprep.subr.mxu0 %v1942
    %2152 = vmatpush1.msra.mxu0 %v1941
    %2153 = vmatprep.subr.mxu0 %v1938
    %2154 = vmatpush1.msra.mxu0 %v1937
    %2155 = vmatprep.subr.mxu0 %v1934
    %2156 = vmatpush1.msra.mxu0 %v1933
    %2157 = vmatprep.subr.mxu0 %v1930
    %2158 = vmatpush1.msra.mxu0 %v1929
    %2159 = vmatprep.subr.mxu0 %v1926
    %2160 = vmatpush1.msra.mxu0 %v1925
    %2161 = vmatprep.subr.mxu0 %v1922
    %2162 = vmatpush1.msra.mxu0 %v1921
    %2163 = vmatprep.subr.mxu0 %v1918
    %2164 = vmatpush1.msra.mxu0 %v1917
    %2165 = vmatprep.subr.mxu0 %v1914
    %2166 = vmatpush1.msra.mxu0 %v1913
    %2167 = vmatprep.subr.mxu0 %v2038
    %2168 = vmatpush2.msra.mxu0 %v2037
    %2169 = vmatprep.subr.mxu0 %v2034
    %2170 = vmatpush2.msra.mxu0 %v2033
    %2171 = vmatprep.subr.mxu0 %v2030
    %2172 = vmatpush2.msra.mxu0 %v2029
    %2173 = vmatprep.subr.mxu0 %v2026
    %2174 = vmatpush2.msra.mxu0 %v2025
    %2175 = vmatprep.subr.mxu0 %v2022
    %2176 = vmatpush2.msra.mxu0 %v2021
    %2177 = vmatprep.subr.mxu0 %v2018
    %2178 = vmatpush2.msra.mxu0 %v2017
    %2179 = vmatprep.subr.mxu0 %v2014
    %2180 = vmatpush2.msra.mxu0 %v2013
    %2181 = vmatprep.subr.mxu0 %v2010
    %2182 = vmatpush2.msra.mxu0 %v2009
    %2183 = vmatprep.subr.mxu0 %v2006
    %2184 = vmatpush2.msra.mxu0 %v2005
    %2185 = vmatprep.subr.mxu0 %v2002
    %2186 = vmatpush2.msra.mxu0 %v2001
    %2187 = vmatprep.subr.mxu0 %v1998
    %2188 = vmatpush2.msra.mxu0 %v1997
    %2189 = vmatprep.subr.mxu0 %v1994
    %2190 = vmatpush2.msra.mxu0 %v1993
    %2191 = vmatprep.subr.mxu0 %v1990
    %2192 = vmatpush2.msra.mxu0 %v1989
    %2193 = vmatprep.subr.mxu0 %v1986
    %2194 = vmatpush2.msra.mxu0 %v1985
    %2195 = vmatprep.subr.mxu0 %v1982
    %2196 = vmatpush2.msra.mxu0 %v1981
    %2197 = vmatprep.subr.mxu0 %v1978
    %2198 = vmatpush2.msra.mxu0 %v1977
    %2199 = vmatprep.mubr.f32.mxu0 %v1783
    %2200 = vmatmul.mubr.f32.gmra.mxu0 %v1782
    %v2201 = vpop.f32.mrf.mxu0
    %v2202 = vadd.f32 %v2131, %v2201
    %v2203 = vpop.f32.mrf.mxu0
    %v2204 = vadd.f32 %v2133, %v2203
    %2205 = vdwg.mxu0
    %2206 = vmatprep.subr.mxu0 %v1848
    %2207 = vmatpush1.msra.mxu0 %v1847
    %2208 = vmatprep.subr.mxu0 %v1844
    %2209 = vmatpush1.msra.mxu0 %v1843
    %2210 = vmatprep.subr.mxu0 %v1840
    %2211 = vmatpush1.msra.mxu0 %v1839
    %2212 = vmatprep.subr.mxu0 %v1836
    %2213 = vmatpush1.msra.mxu0 %v1835
    %2214 = vmatprep.subr.mxu0 %v1832
    %2215 = vmatpush1.msra.mxu0 %v1831
    %2216 = vmatprep.subr.mxu0 %v1828
    %2217 = vmatpush1.msra.mxu0 %v1827
    %2218 = vmatprep.subr.mxu0 %v1824
    %2219 = vmatpush1.msra.mxu0 %v1823
    %2220 = vmatprep.subr.mxu0 %v1820
    %2221 = vmatpush1.msra.mxu0 %v1819
    %2222 = vmatprep.subr.mxu0 %v1816
    %2223 = vmatpush1.msra.mxu0 %v1815
    %2224 = vmatprep.subr.mxu0 %v1812
    %2225 = vmatpush1.msra.mxu0 %v1811
    %2226 = vmatprep.subr.mxu0 %v1808
    %2227 = vmatpush1.msra.mxu0 %v1807
    %2228 = vmatprep.subr.mxu0 %v1804
    %2229 = vmatpush1.msra.mxu0 %v1803
    %2230 = vmatprep.subr.mxu0 %v1800
    %2231 = vmatpush1.msra.mxu0 %v1799
    %2232 = vmatprep.subr.mxu0 %v1796
    %2233 = vmatpush1.msra.mxu0 %v1795
    %2234 = vmatprep.subr.mxu0 %v1792
    %2235 = vmatpush1.msra.mxu0 %v1791
    %2236 = vmatprep.subr.mxu0 %v1788
    %2237 = vmatpush1.msra.mxu0 %v1787
    %2238 = vmatprep.subr.mxu0 %v1912
    %2239 = vmatpush2.msra.mxu0 %v1911
    %2240 = vmatprep.subr.mxu0 %v1908
    %2241 = vmatpush2.msra.mxu0 %v1907
    %2242 = vmatprep.subr.mxu0 %v1904
    %2243 = vmatpush2.msra.mxu0 %v1903
    %2244 = vmatprep.subr.mxu0 %v1900
    %2245 = vmatpush2.msra.mxu0 %v1899
    %2246 = vmatprep.subr.mxu0 %v1896
    %2247 = vmatpush2.msra.mxu0 %v1895
    %2248 = vmatprep.subr.mxu0 %v1892
    %2249 = vmatpush2.msra.mxu0 %v1891
    %2250 = vmatprep.subr.mxu0 %v1888
    %2251 = vmatpush2.msra.mxu0 %v1887
    %2252 = vmatprep.subr.mxu0 %v1884
    %2253 = vmatpush2.msra.mxu0 %v1883
    %2254 = vmatprep.subr.mxu0 %v1880
    %2255 = vmatpush2.msra.mxu0 %v1879
    %2256 = vmatprep.subr.mxu0 %v1876
    %2257 = vmatpush2.msra.mxu0 %v1875
    %2258 = vmatprep.subr.mxu0 %v1872
    %2259 = vmatpush2.msra.mxu0 %v1871
    %2260 = vmatprep.subr.mxu0 %v1868
    %2261 = vmatpush2.msra.mxu0 %v1867
    %2262 = vmatprep.subr.mxu0 %v1864
    %2263 = vmatpush2.msra.mxu0 %v1863
    %2264 = vmatprep.subr.mxu0 %v1860
    %2265 = vmatpush2.msra.mxu0 %v1859
    %2266 = vmatprep.subr.mxu0 %v1856
    %2267 = vmatpush2.msra.mxu0 %v1855
    %2268 = vmatprep.subr.mxu0 %v1852
    %2269 = vmatpush2.msra.mxu0 %v1851
    %2270 = vmatprep.mubr.f32.mxu0 %v1781
    %2271 = vmatmul.mubr.f32.gmra.mxu0 %v1780
    %v2272 = vpop.f32.mrf.mxu0
    %v2273 = vadd.f32 %v2055, %v2272
    %v2274 = vpop.f32.mrf.mxu0
    %v2275 = vadd.f32 %v2059, %v2274
    %2276 = vdwg.mxu0
    %2277 = vmatprep.subr.mxu0 %v1976
    %2278 = vmatpush1.msra.mxu0 %v1975
    %2279 = vmatprep.subr.mxu0 %v1972
    %2280 = vmatpush1.msra.mxu0 %v1971
    %2281 = vmatprep.subr.mxu0 %v1968
    %2282 = vmatpush1.msra.mxu0 %v1967
    %2283 = vmatprep.subr.mxu0 %v1964
    %2284 = vmatpush1.msra.mxu0 %v1963
    %2285 = vmatprep.subr.mxu0 %v1960
    %2286 = vmatpush1.msra.mxu0 %v1959
    %2287 = vmatprep.subr.mxu0 %v1956
    %2288 = vmatpush1.msra.mxu0 %v1955
    %2289 = vmatprep.subr.mxu0 %v1952
    %2290 = vmatpush1.msra.mxu0 %v1951
    %2291 = vmatprep.subr.mxu0 %v1948
    %2292 = vmatpush1.msra.mxu0 %v1947
    %2293 = vmatprep.subr.mxu0 %v1944
    %2294 = vmatpush1.msra.mxu0 %v1943
    %2295 = vmatprep.subr.mxu0 %v1940
    %2296 = vmatpush1.msra.mxu0 %v1939
    %2297 = vmatprep.subr.mxu0 %v1936
    %2298 = vmatpush1.msra.mxu0 %v1935
    %2299 = vmatprep.subr.mxu0 %v1932
    %2300 = vmatpush1.msra.mxu0 %v1931
    %2301 = vmatprep.subr.mxu0 %v1928
    %2302 = vmatpush1.msra.mxu0 %v1927
    %2303 = vmatprep.subr.mxu0 %v1924
    %2304 = vmatpush1.msra.mxu0 %v1923
    %2305 = vmatprep.subr.mxu0 %v1920
    %2306 = vmatpush1.msra.mxu0 %v1919
    %2307 = vmatprep.subr.mxu0 %v1916
    %2308 = vmatpush1.msra.mxu0 %v1915
    %2309 = vmatprep.subr.mxu0 %v2040
    %2310 = vmatpush2.msra.mxu0 %v2039
    %2311 = vmatprep.subr.mxu0 %v2036
    %2312 = vmatpush2.msra.mxu0 %v2035
    %2313 = vmatprep.subr.mxu0 %v2032
    %2314 = vmatpush2.msra.mxu0 %v2031
    %2315 = vmatprep.subr.mxu0 %v2028
    %2316 = vmatpush2.msra.mxu0 %v2027
    %2317 = vmatprep.subr.mxu0 %v2024
    %2318 = vmatpush2.msra.mxu0 %v2023
    %2319 = vmatprep.subr.mxu0 %v2020
    %2320 = vmatpush2.msra.mxu0 %v2019
    %2321 = vmatprep.subr.mxu0 %v2016
    %2322 = vmatpush2.msra.mxu0 %v2015
    %2323 = vmatprep.subr.mxu0 %v2012
    %2324 = vmatpush2.msra.mxu0 %v2011
    %2325 = vmatprep.subr.mxu0 %v2008
    %2326 = vmatpush2.msra.mxu0 %v2007
    %2327 = vmatprep.subr.mxu0 %v2004
    %2328 = vmatpush2.msra.mxu0 %v2003
    %2329 = vmatprep.subr.mxu0 %v2000
    %2330 = vmatpush2.msra.mxu0 %v1999
    %2331 = vmatprep.subr.mxu0 %v1996
    %2332 = vmatpush2.msra.mxu0 %v1995
    %2333 = vmatprep.subr.mxu0 %v1992
    %2334 = vmatpush2.msra.mxu0 %v1991
    %2335 = vmatprep.subr.mxu0 %v1988
    %2336 = vmatpush2.msra.mxu0 %v1987
    %2337 = vmatprep.subr.mxu0 %v1984
    %2338 = vmatpush2.msra.mxu0 %v1983
    %2339 = vmatprep.subr.mxu0 %v1980
    %2340 = vmatpush2.msra.mxu0 %v1979
    %2341 = vmatprep.mubr.f32.mxu0 %v1783
    %2342 = vmatmul.mubr.f32.gmra.mxu0 %v1782
    %v2343 = vpop.f32.mrf.mxu0
    %v2344 = vadd.f32 %v2273, %v2343
    %v2345 = vpop.f32.mrf.mxu0
    %v2346 = vadd.f32 %v2275, %v2345
    %2347 = vdwg.mxu0
    %2348 = vst [vmem:[#allocation8] sm:$0xff] %v2202
    %2349 = vst [vmem:[#allocation8 + $0x8] sm:$0xff] %v2204
    %2350 = vst [vmem:[#allocation8 + $0x10] sm:$0xff] %v2344
    %2351 = vst [vmem:[#allocation8 + $0x18] sm:$0xff] %v2346
    // Predicated region
    $region26: #{tpu_custom_call.1} parent=1 // pred_check
      _
    $region27: #{tpu_custom_call.1} parent=1 // pred_check_branch
      %2353 = sbr.rel (0) target = $region29
    $region28: #{tpu_custom_call.1} parent=1 // pred_region
      %s2355 = ssub.s32 512, 512
      %2356 = vsyncadd [#allocation4], %s2355
      %s2358 = sshll.u32 [#allocation8], 4
      %s2359 = int_to_ptr.vmem [resolvable:$true] %s2358
      %2361 = dma.vmem_to_hbm [thread:$0]  %s2359, 512, %s3, [#allocation4]
    $region29: #{tpu_custom_call.1} parent=1 // pred_fallthru
      _
    // Predicated region
    $region30: #{tpu_custom_call.1} parent=1 // pred_check
      _
    $region31: #{tpu_custom_call.1} parent=1 // pred_check_branch
      %2363 = sbr.rel (0) target = $region33
    $region32: #{tpu_custom_call.1} parent=1 // pred_region
      %2364 = dma.done [#allocation4], 512
    $region33: #{tpu_custom_call.1} parent=1 // pred_fallthru
      _
    %2365 = vsyncpa [#allocation3], 1
    %2366 = vsyncpa [#allocation6], 1
    %2367 = vsyncpa [#allocation4], 1

// kernel: tpu_custom_call.1
$region0: #{tpu_custom_call.1}
  #allocation0 [shape = 'u32[]', space=smem, size = 0x4, offset = 0x4, fixed_abs, tag = 'smem constant byte address 0x4 - core index']
  #allocation1 [shape = 'u32[144,128]{1,0:T(1,128)}', space=vmem, size = 0x12000, scoped, tag = 'internal scratch']
  %s0 = inlined_call_operand.hbm [shape: f32[8,512], index: 0, kind: input, shape index: {}]
  %s1 = inlined_call_operand.hbm [shape: f32[4,512,512], index: 1, kind: input, shape index: {}]
  %s2 = inlined_call_operand.hbm [shape: f32[4,1,512], index: 2, kind: input, shape index: {}]
  %s3 = inlined_call_operand.hbm [shape: f32[8,512], index: 3, kind: output, shape index: {}]
  %s4 = sld [smem:[#allocation0]]
  $region34: #{tpu_custom_call.1} parent=0
    _
  %s6 = ssub.s32 1, %s4
  %s7 = scalar_select 0, %s6, %s4
  $region1: #{tpu_custom_call.1} parent=0
    #allocation2 [shape = 'u8[16384]{0}', space=vmem, size = 0x4000, scoped, tag = 'input window, operand 0, single buffered']
    #allocation3 [shape = 's32[1]{0}', space=sflag, size = 0x4, scoped, tag = 'scoped memory for tpu_custom_call.1']
    #allocation4 [shape = 's32[1]{0}', space=sflag, size = 0x4, scoped, tag = 'scoped memory for tpu_custom_call.1']
    #allocation5 [shape = 'u8[4194304]{0}', space=vmem, size = 0x400000, scoped, tag = 'input window, operand 1, single buffered']
    #allocation6 [shape = 's32[1]{0}', space=sflag, size = 0x4, scoped, tag = 'scoped memory for tpu_custom_call.1']
    #allocation7 [shape = 'u8[8192]{0}', space=vmem, size = 0x2000, scoped, tag = 'input window, operand 2, single buffered']
    #allocation8 [shape = 'u8[16384]{0}', space=vmem, size = 0x4000, scoped, tag = 'output window, operand 0, single buffered']
    %8 = vsyncpa [#allocation3], 0
    %9 = vsyncpa [#allocation6], 0
    %10 = vsyncpa [#allocation4], 0
    // Predicated region
    $region2: #{tpu_custom_call.1} parent=1 // pred_check
      _
    $region3: #{tpu_custom_call.1} parent=1 // pred_check_branch
      %12 = sbr.rel (0) target = $region5
    $region4: #{tpu_custom_call.1} parent=1 // pred_region
      %s14 = ssub.s32 512, 512
      %15 = vsyncadd [#allocation3], %s14
      %s17 = sshll.u32 [#allocation2], 4
      %s18 = int_to_ptr.vmem [resolvable:$true] %s17
      %20 = dma.hbm_to_vmem [thread:$0]  %s0, 512, %s18, [#allocation3]
    $region5: #{tpu_custom_call.1} parent=1 // pred_fallthru
      _
    // Predicated region
    $region6: #{tpu_custom_call.1} parent=1 // pred_check
      _
    $region7: #{tpu_custom_call.1} parent=1 // pred_check_branch
      %22 = sbr.rel (0) target = $region9
    $region8: #{tpu_custom_call.1} parent=1 // pred_region
      %s24 = ssub.s32 131072, 131072
      %25 = vsyncadd [#allocation6], %s24
      %s26 = sshll.u32 [#allocation5], 4
      %s27 = int_to_ptr.vmem [resolvable:$true] %s26
      %32 = dma.hbm_to_vmem [thread:$0]  %s1, 131072, %s27, [#allocation6], 512, 512, 32
    $region9: #{tpu_custom_call.1} parent=1 // pred_fallthru
      _
    // Predicated region
    $region10: #{tpu_custom_call.1} parent=1 // pred_check
      _
    $region11: #{tpu_custom_call.1} parent=1 // pred_check_branch
      %34 = sbr.rel (0) target = $region13
    $region12: #{tpu_custom_call.1} parent=1 // pred_region
      %s36 = ssub.s32 256, 256
      %37 = vsyncadd [#allocation6], %s36
      %s38 = sshll.u32 [#allocation7], 4
      %s39 = int_to_ptr.vmem [resolvable:$true] %s38
      %44 = dma.hbm_to_vmem [thread:$0]  %s2, 256, %s39, [#allocation6], 64, 64, 4
    $region13: #{tpu_custom_call.1} parent=1 // pred_fallthru
      _
    // Predicated region
    $region14: #{tpu_custom_call.1} parent=1 // pred_check
      _
    $region15: #{tpu_custom_call.1} parent=1 // pred_check_branch
      %46 = sbr.rel (0) target = $region17
    $region16: #{tpu_custom_call.1} parent=1 // pred_region
      %47 = dma.done [#allocation3], 512
    $region17: #{tpu_custom_call.1} parent=1 // pred_fallthru
      _
    // Predicated region
    $region18: #{tpu_custom_call.1} parent=1 // pred_check
      _
    $region19: #{tpu_custom_call.1} parent=1 // pred_check_branch
      %49 = sbr.rel (0) target = $region21
    $region20: #{tpu_custom_call.1} parent=1 // pred_region
      %50 = dma.done [#allocation6], 131072
    $region21: #{tpu_custom_call.1} parent=1 // pred_fallthru
      _
    // Predicated region
    $region22: #{tpu_custom_call.1} parent=1 // pred_check
      _
    $region23: #{tpu_custom_call.1} parent=1 // pred_check_branch
      %52 = sbr.rel (0) target = $region25
    $region24: #{tpu_custom_call.1} parent=1 // pred_region
      %53 = dma.done [#allocation6], 256
    $region25: #{tpu_custom_call.1} parent=1 // pred_fallthru
      _
    %v54 = vld [vmem:[#allocation2] sm:$0xff]
    %v55 = vld [vmem:[#allocation2 + $0x8] sm:$0xff]
    %v56 = vld [vmem:[#allocation2 + $0x10] sm:$0xff]
    %v57 = vld [vmem:[#allocation2 + $0x18] sm:$0xff]
    %v58 = vld [vmem:[#allocation5] sm:$0xff]
    %v59 = vld [vmem:[#allocation5 + $0x8] sm:$0xff]
    %v60 = vld [vmem:[#allocation5 + $0x10] sm:$0xff]
    %v61 = vld [vmem:[#allocation5 + $0x18] sm:$0xff]
    %v62 = vld [vmem:[#allocation5 + $0x20] sm:$0xff]
    %v63 = vld [vmem:[#allocation5 + $0x28] sm:$0xff]
    %v64 = vld [vmem:[#allocation5 + $0x30] sm:$0xff]
    %v65 = vld [vmem:[#allocation5 + $0x38] sm:$0xff]
    %v66 = vld [vmem:[#allocation5 + $0x40] sm:$0xff]
    %v67 = vld [vmem:[#allocation5 + $0x48] sm:$0xff]
    %v68 = vld [vmem:[#allocation5 + $0x50] sm:$0xff]
    %v69 = vld [vmem:[#allocation5 + $0x58] sm:$0xff]
    %v70 = vld [vmem:[#allocation5 + $0x60] sm:$0xff]
    %v71 = vld [vmem:[#allocation5 + $0x68] sm:$0xff]
    %v72 = vld [vmem:[#allocation5 + $0x70] sm:$0xff]
    %v73 = vld [vmem:[#allocation5 + $0x78] sm:$0xff]
    %v74 = vld [vmem:[#allocation5 + $0x80] sm:$0xff]
    %v75 = vld [vmem:[#allocation5 + $0x88] sm:$0xff]
    %v76 = vld [vmem:[#allocation5 + $0x90] sm:$0xff]
    %v77 = vld [vmem:[#allocation5 + $0x98] sm:$0xff]
    %v78 = vld [vmem:[#allocation5 + $0xa0] sm:$0xff]
    %v79 = vld [vmem:[#allocation5 + $0xa8] sm:$0xff]
    %v80 = vld [vmem:[#allocation5 + $0xb0] sm:$0xff]
    %v81 = vld [vmem:[#allocation5 + $0xb8] sm:$0xff]
    %v82 = vld [vmem:[#allocation5 + $0xc0] sm:$0xff]
    %v83 = vld [vmem:[#allocation5 + $0xc8] sm:$0xff]
    %v84 = vld [vmem:[#allocation5 + $0xd0] sm:$0xff]
    %v85 = vld [vmem:[#allocation5 + $0xd8] sm:$0xff]
    %v86 = vld [vmem:[#allocation5 + $0xe0] sm:$0xff]
    %v87 = vld [vmem:[#allocation5 + $0xe8] sm:$0xff]
    %v88 = vld [vmem:[#allocation5 + $0xf0] sm:$0xff]
    %v89 = vld [vmem:[#allocation5 + $0xf8] sm:$0xff]
    %v90 = vld [vmem:[#allocation5 + $0x100] sm:$0xff]
    %v91 = vld [vmem:[#allocation5 + $0x108] sm:$0xff]
    %v92 = vld [vmem:[#allocation5 + $0x110] sm:$0xff]
    %v93 = vld [vmem:[#allocation5 + $0x118] sm:$0xff]
    %v94 = vld [vmem:[#allocation5 + $0x120] sm:$0xff]
    %v95 = vld [vmem:[#allocation5 + $0x128] sm:$0xff]
    %v96 = vld [vmem:[#allocation5 + $0x130] sm:$0xff]
    %v97 = vld [vmem:[#allocation5 + $0x138] sm:$0xff]
    %v98 = vld [vmem:[#allocation5 + $0x140] sm:$0xff]
    %v99 = vld [vmem:[#allocation5 + $0x148] sm:$0xff]
    %v100 = vld [vmem:[#allocation5 + $0x150] sm:$0xff]
    %v101 = vld [vmem:[#allocation5 + $0x158] sm:$0xff]
    %v102 = vld [vmem:[#allocation5 + $0x160] sm:$0xff]
    %v103 = vld [vmem:[#allocation5 + $0x168] sm:$0xff]
    %v104 = vld [vmem:[#allocation5 + $0x170] sm:$0xff]
    %v105 = vld [vmem:[#allocation5 + $0x178] sm:$0xff]
    %v106 = vld [vmem:[#allocation5 + $0x180] sm:$0xff]
    %v107 = vld [vmem:[#allocation5 + $0x188] sm:$0xff]
    %v108 = vld [vmem:[#allocation5 + $0x190] sm:$0xff]
    %v109 = vld [vmem:[#allocation5 + $0x198] sm:$0xff]
    %v110 = vld [vmem:[#allocation5 + $0x1a0] sm:$0xff]
    %v111 = vld [vmem:[#allocation5 + $0x1a8] sm:$0xff]
    %v112 = vld [vmem:[#allocation5 + $0x1b0] sm:$0xff]
    %v113 = vld [vmem:[#allocation5 + $0x1b8] sm:$0xff]
    %v114 = vld [vmem:[#allocation5 + $0x1c0] sm:$0xff]
    %v115 = vld [vmem:[#allocation5 + $0x1c8] sm:$0xff]
    %v116 = vld [vmem:[#allocation5 + $0x1d0] sm:$0xff]
    %v117 = vld [vmem:[#allocation5 + $0x1d8] sm:$0xff]
    %v118 = vld [vmem:[#allocation5 + $0x1e0] sm:$0xff]
    %v119 = vld [vmem:[#allocation5 + $0x1e8] sm:$0xff]
    %v120 = vld [vmem:[#allocation5 + $0x1f0] sm:$0xff]
    %v121 = vld [vmem:[#allocation5 + $0x1f8] sm:$0xff]
    %v122 = vld [vmem:[#allocation5 + $0x200] sm:$0xff]
    %v123 = vld [vmem:[#allocation5 + $0x208] sm:$0xff]
    %v124 = vld [vmem:[#allocation5 + $0x210] sm:$0xff]
    %v125 = vld [vmem:[#allocation5 + $0x218] sm:$0xff]
    %v126 = vld [vmem:[#allocation5 + $0x220] sm:$0xff]
    %v127 = vld [vmem:[#allocation5 + $0x228] sm:$0xff]
    %v128 = vld [vmem:[#allocation5 + $0x230] sm:$0xff]
    %v129 = vld [vmem:[#allocation5 + $0x238] sm:$0xff]
    %v130 = vld [vmem:[#allocation5 + $0x240] sm:$0xff]
    %v131 = vld [vmem:[#allocation5 + $0x248] sm:$0xff]
    %v132 = vld [vmem:[#allocation5 + $0x250] sm:$0xff]
    %v133 = vld [vmem:[#allocation5 + $0x258] sm:$0xff]
    %v134 = vld [vmem:[#allocation5 + $0x260] sm:$0xff]
    %v135 = vld [vmem:[#allocation5 + $0x268] sm:$0xff]
    %v136 = vld [vmem:[#allocation5 + $0x270] sm:$0xff]
    %v137 = vld [vmem:[#allocation5 + $0x278] sm:$0xff]
    %v138 = vld [vmem:[#allocation5 + $0x280] sm:$0xff]
    %v139 = vld [vmem:[#allocation5 + $0x288] sm:$0xff]
    %v140 = vld [vmem:[#allocation5 + $0x290] sm:$0xff]
    %v141 = vld [vmem:[#allocation5 + $0x298] sm:$0xff]
    %v142 = vld [vmem:[#allocation5 + $0x2a0] sm:$0xff]
    %v143 = vld [vmem:[#allocation5 + $0x2a8] sm:$0xff]
    %v144 = vld [vmem:[#allocation5 + $0x2b0] sm:$0xff]
    %v145 = vld [vmem:[#allocation5 + $0x2b8] sm:$0xff]
    %v146 = vld [vmem:[#allocation5 + $0x2c0] sm:$0xff]
    %v147 = vld [vmem:[#allocation5 + $0x2c8] sm:$0xff]
    %v148 = vld [vmem:[#allocation5 + $0x2d0] sm:$0xff]
    %v149 = vld [vmem:[#allocation5 + $0x2d8] sm:$0xff]
    %v150 = vld [vmem:[#allocation5 + $0x2e0] sm:$0xff]
    %v151 = vld [vmem:[#allocation5 + $0x2e8] sm:$0xff]
    %v152 = vld [vmem:[#allocation5 + $0x2f0] sm:$0xff]
    %v153 = vld [vmem:[#allocation5 + $0x2f8] sm:$0xff]
    %v154 = vld [vmem:[#allocation5 + $0x300] sm:$0xff]
    %v155 = vld [vmem:[#allocation5 + $0x308] sm:$0xff]
    %v156 = vld [vmem:[#allocation5 + $0x310] sm:$0xff]
    %v157 = vld [vmem:[#allocation5 + $0x318] sm:$0xff]
    %v158 = vld [vmem:[#allocation5 + $0x320] sm:$0xff]
    %v159 = vld [vmem:[#allocation5 + $0x328] sm:$0xff]
    %v160 = vld [vmem:[#allocation5 + $0x330] sm:$0xff]
    %v161 = vld [vmem:[#allocation5 + $0x338] sm:$0xff]
    %v162 = vld [vmem:[#allocation5 + $0x340] sm:$0xff]
    %v163 = vld [vmem:[#allocation5 + $0x348] sm:$0xff]
    %v164 = vld [vmem:[#allocation5 + $0x350] sm:$0xff]
    %v165 = vld [vmem:[#allocation5 + $0x358] sm:$0xff]
    %v166 = vld [vmem:[#allocation5 + $0x360] sm:$0xff]
    %v167 = vld [vmem:[#allocation5 + $0x368] sm:$0xff]
    %v168 = vld [vmem:[#allocation5 + $0x370] sm:$0xff]
    %v169 = vld [vmem:[#allocation5 + $0x378] sm:$0xff]
    %v170 = vld [vmem:[#allocation5 + $0x380] sm:$0xff]
    %v171 = vld [vmem:[#allocation5 + $0x388] sm:$0xff]
    %v172 = vld [vmem:[#allocation5 + $0x390] sm:$0xff]
    %v173 = vld [vmem:[#allocation5 + $0x398] sm:$0xff]
    %v174 = vld [vmem:[#allocation5 + $0x3a0] sm:$0xff]
    %v175 = vld [vmem:[#allocation5 + $0x3a8] sm:$0xff]
    %v176 = vld [vmem:[#allocation5 + $0x3b0] sm:$0xff]
    %v177 = vld [vmem:[#allocation5 + $0x3b8] sm:$0xff]
    %v178 = vld [vmem:[#allocation5 + $0x3c0] sm:$0xff]
    %v179 = vld [vmem:[#allocation5 + $0x3c8] sm:$0xff]
    %v180 = vld [vmem:[#allocation5 + $0x3d0] sm:$0xff]
    %v181 = vld [vmem:[#allocation5 + $0x3d8] sm:$0xff]
    %v182 = vld [vmem:[#allocation5 + $0x3e0] sm:$0xff]
    %v183 = vld [vmem:[#allocation5 + $0x3e8] sm:$0xff]
    %v184 = vld [vmem:[#allocation5 + $0x3f0] sm:$0xff]
    %v185 = vld [vmem:[#allocation5 + $0x3f8] sm:$0xff]
    %v186 = vld [vmem:[#allocation5 + $0x400] sm:$0xff]
    %v187 = vld [vmem:[#allocation5 + $0x408] sm:$0xff]
    %v188 = vld [vmem:[#allocation5 + $0x410] sm:$0xff]
    %v189 = vld [vmem:[#allocation5 + $0x418] sm:$0xff]
    %v190 = vld [vmem:[#allocation5 + $0x420] sm:$0xff]
    %v191 = vld [vmem:[#allocation5 + $0x428] sm:$0xff]
    %v192 = vld [vmem:[#allocation5 + $0x430] sm:$0xff]
    %v193 = vld [vmem:[#allocation5 + $0x438] sm:$0xff]
    %v194 = vld [vmem:[#allocation5 + $0x440] sm:$0xff]
    %v195 = vld [vmem:[#allocation5 + $0x448] sm:$0xff]
    %v196 = vld [vmem:[#allocation5 + $0x450] sm:$0xff]
    %v197 = vld [vmem:[#allocation5 + $0x458] sm:$0xff]
    %v198 = vld [vmem:[#allocation5 + $0x460] sm:$0xff]
    %v199 = vld [vmem:[#allocation5 + $0x468] sm:$0xff]
    %v200 = vld [vmem:[#allocation5 + $0x470] sm:$0xff]
    %v201 = vld [vmem:[#allocation5 + $0x478] sm:$0xff]
    %v202 = vld [vmem:[#allocation5 + $0x480] sm:$0xff]
    %v203 = vld [vmem:[#allocation5 + $0x488] sm:$0xff]
    %v204 = vld [vmem:[#allocation5 + $0x490] sm:$0xff]
    %v205 = vld [vmem:[#allocation5 + $0x498] sm:$0xff]
    %v206 = vld [vmem:[#allocation5 + $0x4a0] sm:$0xff]
    %v207 = vld [vmem:[#allocation5 + $0x4a8] sm:$0xff]
    %v208 = vld [vmem:[#allocation5 + $0x4b0] sm:$0xff]
    %v209 = vld [vmem:[#allocation5 + $0x4b8] sm:$0xff]
    %v210 = vld [vmem:[#allocation5 + $0x4c0] sm:$0xff]
    %v211 = vld [vmem:[#allocation5 + $0x4c8] sm:$0xff]
    %v212 = vld [vmem:[#allocation5 + $0x4d0] sm:$0xff]
    %v213 = vld [vmem:[#allocation5 + $0x4d8] sm:$0xff]
    %v214 = vld [vmem:[#allocation5 + $0x4e0] sm:$0xff]
    %v215 = vld [vmem:[#allocation5 + $0x4e8] sm:$0xff]
    %v216 = vld [vmem:[#allocation5 + $0x4f0] sm:$0xff]
    %v217 = vld [vmem:[#allocation5 + $0x4f8] sm:$0xff]
    %v218 = vld [vmem:[#allocation5 + $0x500] sm:$0xff]
    %v219 = vld [vmem:[#allocation5 + $0x508] sm:$0xff]
    %v220 = vld [vmem:[#allocation5 + $0x510] sm:$0xff]
    %v221 = vld [vmem:[#allocation5 + $0x518] sm:$0xff]
    %v222 = vld [vmem:[#allocation5 + $0x520] sm:$0xff]
    %v223 = vld [vmem:[#allocation5 + $0x528] sm:$0xff]
    %v224 = vld [vmem:[#allocation5 + $0x530] sm:$0xff]
    %v225 = vld [vmem:[#allocation5 + $0x538] sm:$0xff]
    %v226 = vld [vmem:[#allocation5 + $0x540] sm:$0xff]
    %v227 = vld [vmem:[#allocation5 + $0x548] sm:$0xff]
    %v228 = vld [vmem:[#allocation5 + $0x550] sm:$0xff]
    %v229 = vld [vmem:[#allocation5 + $0x558] sm:$0xff]
    %v230 = vld [vmem:[#allocation5 + $0x560] sm:$0xff]
    %v231 = vld [vmem:[#allocation5 + $0x568] sm:$0xff]
    %v232 = vld [vmem:[#allocation5 + $0x570] sm:$0xff]
    %v233 = vld [vmem:[#allocation5 + $0x578] sm:$0xff]
    %v234 = vld [vmem:[#allocation5 + $0x580] sm:$0xff]
    %v235 = vld [vmem:[#allocation5 + $0x588] sm:$0xff]
    %v236 = vld [vmem:[#allocation5 + $0x590] sm:$0xff]
    %v237 = vld [vmem:[#allocation5 + $0x598] sm:$0xff]
    %v238 = vld [vmem:[#allocation5 + $0x5a0] sm:$0xff]
    %v239 = vld [vmem:[#allocation5 + $0x5a8] sm:$0xff]
    %v240 = vld [vmem:[#allocation5 + $0x5b0] sm:$0xff]
    %v241 = vld [vmem:[#allocation5 + $0x5b8] sm:$0xff]
    %v242 = vld [vmem:[#allocation5 + $0x5c0] sm:$0xff]
    %v243 = vld [vmem:[#allocation5 + $0x5c8] sm:$0xff]
    %v244 = vld [vmem:[#allocation5 + $0x5d0] sm:$0xff]
    %v245 = vld [vmem:[#allocation5 + $0x5d8] sm:$0xff]
    %v246 = vld [vmem:[#allocation5 + $0x5e0] sm:$0xff]
    %v247 = vld [vmem:[#allocation5 + $0x5e8] sm:$0xff]
    %v248 = vld [vmem:[#allocation5 + $0x5f0] sm:$0xff]
    %v249 = vld [vmem:[#allocation5 + $0x5f8] sm:$0xff]
    %v250 = vld [vmem:[#allocation5 + $0x600] sm:$0xff]
    %v251 = vld [vmem:[#allocation5 + $0x608] sm:$0xff]
    %v252 = vld [vmem:[#allocation5 + $0x610] sm:$0xff]
    %v253 = vld [vmem:[#allocation5 + $0x618] sm:$0xff]
    %v254 = vld [vmem:[#allocation5 + $0x620] sm:$0xff]
    %v255 = vld [vmem:[#allocation5 + $0x628] sm:$0xff]
    %v256 = vld [vmem:[#allocation5 + $0x630] sm:$0xff]
    %v257 = vld [vmem:[#allocation5 + $0x638] sm:$0xff]
    %v258 = vld [vmem:[#allocation5 + $0x640] sm:$0xff]
    %v259 = vld [vmem:[#allocation5 + $0x648] sm:$0xff]
    %v260 = vld [vmem:[#allocation5 + $0x650] sm:$0xff]
    %v261 = vld [vmem:[#allocation5 + $0x658] sm:$0xff]
    %v262 = vld [vmem:[#allocation5 + $0x660] sm:$0xff]
    %v263 = vld [vmem:[#allocation5 + $0x668] sm:$0xff]
    %v264 = vld [vmem:[#allocation5 + $0x670] sm:$0xff]
    %v265 = vld [vmem:[#allocation5 + $0x678] sm:$0xff]
    %v266 = vld [vmem:[#allocation5 + $0x680] sm:$0xff]
    %v267 = vld [vmem:[#allocation5 + $0x688] sm:$0xff]
    %v268 = vld [vmem:[#allocation5 + $0x690] sm:$0xff]
    %v269 = vld [vmem:[#allocation5 + $0x698] sm:$0xff]
    %v270 = vld [vmem:[#allocation5 + $0x6a0] sm:$0xff]
    %v271 = vld [vmem:[#allocation5 + $0x6a8] sm:$0xff]
    %v272 = vld [vmem:[#allocation5 + $0x6b0] sm:$0xff]
    %v273 = vld [vmem:[#allocation5 + $0x6b8] sm:$0xff]
    %v274 = vld [vmem:[#allocation5 + $0x6c0] sm:$0xff]
    %v275 = vld [vmem:[#allocation5 + $0x6c8] sm:$0xff]
    %v276 = vld [vmem:[#allocation5 + $0x6d0] sm:$0xff]
    %v277 = vld [vmem:[#allocation5 + $0x6d8] sm:$0xff]
    %v278 = vld [vmem:[#allocation5 + $0x6e0] sm:$0xff]
    %v279 = vld [vmem:[#allocation5 + $0x6e8] sm:$0xff]
    %v280 = vld [vmem:[#allocation5 + $0x6f0] sm:$0xff]
    %v281 = vld [vmem:[#allocation5 + $0x6f8] sm:$0xff]
    %v282 = vld [vmem:[#allocation5 + $0x700] sm:$0xff]
    %v283 = vld [vmem:[#allocation5 + $0x708] sm:$0xff]
    %v284 = vld [vmem:[#allocation5 + $0x710] sm:$0xff]
    %v285 = vld [vmem:[#allocation5 + $0x718] sm:$0xff]
    %v286 = vld [vmem:[#allocation5 + $0x720] sm:$0xff]
    %v287 = vld [vmem:[#allocation5 + $0x728] sm:$0xff]
    %v288 = vld [vmem:[#allocation5 + $0x730] sm:$0xff]
    %v289 = vld [vmem:[#allocation5 + $0x738] sm:$0xff]
    %v290 = vld [vmem:[#allocation5 + $0x740] sm:$0xff]
    %v291 = vld [vmem:[#allocation5 + $0x748] sm:$0xff]
    %v292 = vld [vmem:[#allocation5 + $0x750] sm:$0xff]
    %v293 = vld [vmem:[#allocation5 + $0x758] sm:$0xff]
    %v294 = vld [vmem:[#allocation5 + $0x760] sm:$0xff]
    %v295 = vld [vmem:[#allocation5 + $0x768] sm:$0xff]
    %v296 = vld [vmem:[#allocation5 + $0x770] sm:$0xff]
    %v297 = vld [vmem:[#allocation5 + $0x778] sm:$0xff]
    %v298 = vld [vmem:[#allocation5 + $0x780] sm:$0xff]
    %v299 = vld [vmem:[#allocation5 + $0x788] sm:$0xff]
    %v300 = vld [vmem:[#allocation5 + $0x790] sm:$0xff]
    %v301 = vld [vmem:[#allocation5 + $0x798] sm:$0xff]
    %v302 = vld [vmem:[#allocation5 + $0x7a0] sm:$0xff]
    %v303 = vld [vmem:[#allocation5 + $0x7a8] sm:$0xff]
    %v304 = vld [vmem:[#allocation5 + $0x7b0] sm:$0xff]
    %v305 = vld [vmem:[#allocation5 + $0x7b8] sm:$0xff]
    %v306 = vld [vmem:[#allocation5 + $0x7c0] sm:$0xff]
    %v307 = vld [vmem:[#allocation5 + $0x7c8] sm:$0xff]
    %v308 = vld [vmem:[#allocation5 + $0x7d0] sm:$0xff]
    %v309 = vld [vmem:[#allocation5 + $0x7d8] sm:$0xff]
    %v310 = vld [vmem:[#allocation5 + $0x7e0] sm:$0xff]
    %v311 = vld [vmem:[#allocation5 + $0x7e8] sm:$0xff]
    %v312 = vld [vmem:[#allocation5 + $0x7f0] sm:$0xff]
    %v313 = vld [vmem:[#allocation5 + $0x7f8] sm:$0xff]
    %v314 = vld [vmem:[#allocation7] sm:$0xf]
    %v316 = vlaneseq
    %v317 = vshrl.u32 %v316, 7
    %v318 = vsub.s32 0, %v317
    %v319 = vrot.slane %v314, %v318
    %v320 = vlaneseq
    %v321 = vshrl.u32 %v320, 7
    %v322 = vsub.s32 1, %v321
    %v323 = vrot.slane %v314, %v322
    %v324 = vlaneseq
    %v325 = vshrl.u32 %v324, 7
    %v326 = vsub.s32 2, %v325
    %v327 = vrot.slane %v314, %v326
    %v328 = vlaneseq
    %v329 = vshrl.u32 %v328, 7
    %v330 = vsub.s32 3, %v329
    %v331 = vrot.slane %v314, %v330
    %336 = vmatprep.subr.mxu0 %v119
    %337 = vmatpush1.msra.mxu0 %v118
    %338 = vmatprep.subr.mxu0 %v115
    %339 = vmatpush1.msra.mxu0 %v114
    %340 = vmatprep.subr.mxu0 %v111
    %341 = vmatpush1.msra.mxu0 %v110
    %342 = vmatprep.subr.mxu0 %v107
    %343 = vmatpush1.msra.mxu0 %v106
    %344 = vmatprep.subr.mxu0 %v103
    %345 = vmatpush1.msra.mxu0 %v102
    %346 = vmatprep.subr.mxu0 %v99
    %347 = vmatpush1.msra.mxu0 %v98
    %348 = vmatprep.subr.mxu0 %v95
    %349 = vmatpush1.msra.mxu0 %v94
    %350 = vmatprep.subr.mxu0 %v91
    %351 = vmatpush1.msra.mxu0 %v90
    %352 = vmatprep.subr.mxu0 %v87
    %353 = vmatpush1.msra.mxu0 %v86
    %354 = vmatprep.subr.mxu0 %v83
    %355 = vmatpush1.msra.mxu0 %v82
    %356 = vmatprep.subr.mxu0 %v79
    %357 = vmatpush1.msra.mxu0 %v78
    %358 = vmatprep.subr.mxu0 %v75
    %359 = vmatpush1.msra.mxu0 %v74
    %360 = vmatprep.subr.mxu0 %v71
    %361 = vmatpush1.msra.mxu0 %v70
    %362 = vmatprep.subr.mxu0 %v67
    %363 = vmatpush1.msra.mxu0 %v66
    %364 = vmatprep.subr.mxu0 %v63
    %365 = vmatpush1.msra.mxu0 %v62
    %366 = vmatprep.subr.mxu0 %v59
    %367 = vmatpush1.msra.mxu0 %v58
    %368 = vmatprep.subr.mxu0 %v183
    %369 = vmatpush2.msra.mxu0 %v182
    %370 = vmatprep.subr.mxu0 %v179
    %371 = vmatpush2.msra.mxu0 %v178
    %372 = vmatprep.subr.mxu0 %v175
    %373 = vmatpush2.msra.mxu0 %v174
    %374 = vmatprep.subr.mxu0 %v171
    %375 = vmatpush2.msra.mxu0 %v170
    %376 = vmatprep.subr.mxu0 %v167
    %377 = vmatpush2.msra.mxu0 %v166
    %378 = vmatprep.subr.mxu0 %v163
    %379 = vmatpush2.msra.mxu0 %v162
    %380 = vmatprep.subr.mxu0 %v159
    %381 = vmatpush2.msra.mxu0 %v158
    %382 = vmatprep.subr.mxu0 %v155
    %383 = vmatpush2.msra.mxu0 %v154
    %384 = vmatprep.subr.mxu0 %v151
    %385 = vmatpush2.msra.mxu0 %v150
    %386 = vmatprep.subr.mxu0 %v147
    %387 = vmatpush2.msra.mxu0 %v146
    %388 = vmatprep.subr.mxu0 %v143
    %389 = vmatpush2.msra.mxu0 %v142
    %390 = vmatprep.subr.mxu0 %v139
    %391 = vmatpush2.msra.mxu0 %v138
    %392 = vmatprep.subr.mxu0 %v135
    %393 = vmatpush2.msra.mxu0 %v134
    %394 = vmatprep.subr.mxu0 %v131
    %395 = vmatpush2.msra.mxu0 %v130
    %396 = vmatprep.subr.mxu0 %v127
    %397 = vmatpush2.msra.mxu0 %v126
    %398 = vmatprep.subr.mxu0 %v123
    %399 = vmatpush2.msra.mxu0 %v122
    %400 = vmatprep.mubr.f32.mxu0 %v55
    %401 = vmatmul.mubr.f32.gmra.mxu0 %v54
    %v402 = vpop.f32.mrf.mxu0
    %v403 = vadd.f32 %v319, %v402
    %v404 = vpop.f32.mrf.mxu0
    %v405 = vadd.f32 %v323, %v404
    %406 = vdwg.mxu0
    %407 = vmatprep.subr.mxu0 %v247
    %408 = vmatpush1.msra.mxu0 %v246
    %409 = vmatprep.subr.mxu0 %v243
    %410 = vmatpush1.msra.mxu0 %v242
    %411 = vmatprep.subr.mxu0 %v239
    %412 = vmatpush1.msra.mxu0 %v238
    %413 = vmatprep.subr.mxu0 %v235
    %414 = vmatpush1.msra.mxu0 %v234
    %415 = vmatprep.subr.mxu0 %v231
    %416 = vmatpush1.msra.mxu0 %v230
    %417 = vmatprep.subr.mxu0 %v227
    %418 = vmatpush1.msra.mxu0 %v226
    %419 = vmatprep.subr.mxu0 %v223
    %420 = vmatpush1.msra.mxu0 %v222
    %421 = vmatprep.subr.mxu0 %v219
    %422 = vmatpush1.msra.mxu0 %v218
    %423 = vmatprep.subr.mxu0 %v215
    %424 = vmatpush1.msra.mxu0 %v214
    %425 = vmatprep.subr.mxu0 %v211
    %426 = vmatpush1.msra.mxu0 %v210
    %427 = vmatprep.subr.mxu0 %v207
    %428 = vmatpush1.msra.mxu0 %v206
    %429 = vmatprep.subr.mxu0 %v203
    %430 = vmatpush1.msra.mxu0 %v202
    %431 = vmatprep.subr.mxu0 %v199
    %432 = vmatpush1.msra.mxu0 %v198
    %433 = vmatprep.subr.mxu0 %v195
    %434 = vmatpush1.msra.mxu0 %v194
    %435 = vmatprep.subr.mxu0 %v191
    %436 = vmatpush1.msra.mxu0 %v190
    %437 = vmatprep.subr.mxu0 %v187
    %438 = vmatpush1.msra.mxu0 %v186
    %439 = vmatprep.subr.mxu0 %v311
    %440 = vmatpush2.msra.mxu0 %v310
    %441 = vmatprep.subr.mxu0 %v307
    %442 = vmatpush2.msra.mxu0 %v306
    %443 = vmatprep.subr.mxu0 %v303
    %444 = vmatpush2.msra.mxu0 %v302
    %445 = vmatprep.subr.mxu0 %v299
    %446 = vmatpush2.msra.mxu0 %v298
    %447 = vmatprep.subr.mxu0 %v295
    %448 = vmatpush2.msra.mxu0 %v294
    %449 = vmatprep.subr.mxu0 %v291
    %450 = vmatpush2.msra.mxu0 %v290
    %451 = vmatprep.subr.mxu0 %v287
    %452 = vmatpush2.msra.mxu0 %v286
    %453 = vmatprep.subr.mxu0 %v283
    %454 = vmatpush2.msra.mxu0 %v282
    %455 = vmatprep.subr.mxu0 %v279
    %456 = vmatpush2.msra.mxu0 %v278
    %457 = vmatprep.subr.mxu0 %v275
    %458 = vmatpush2.msra.mxu0 %v274
    %459 = vmatprep.subr.mxu0 %v271
    %460 = vmatpush2.msra.mxu0 %v270
    %461 = vmatprep.subr.mxu0 %v267
    %462 = vmatpush2.msra.mxu0 %v266
    %463 = vmatprep.subr.mxu0 %v263
    %464 = vmatpush2.msra.mxu0 %v262
    %465 = vmatprep.subr.mxu0 %v259
    %466 = vmatpush2.msra.mxu0 %v258
    %467 = vmatprep.subr.mxu0 %v255
    %468 = vmatpush2.msra.mxu0 %v254
    %469 = vmatprep.subr.mxu0 %v251
    %470 = vmatpush2.msra.mxu0 %v250
    %471 = vmatprep.mubr.f32.mxu0 %v57
    %472 = vmatmul.mubr.f32.gmra.mxu0 %v56
    %v473 = vpop.f32.mrf.mxu0
    %v474 = vadd.f32 %v403, %v473
    %v475 = vpop.f32.mrf.mxu0
    %v476 = vadd.f32 %v405, %v475
    %477 = vdwg.mxu0
    %478 = vmatprep.subr.mxu0 %v121
    %479 = vmatpush1.msra.mxu0 %v120
    %480 = vmatprep.subr.mxu0 %v117
    %481 = vmatpush1.msra.mxu0 %v116
    %482 = vmatprep.subr.mxu0 %v113
    %483 = vmatpush1.msra.mxu0 %v112
    %484 = vmatprep.subr.mxu0 %v109
    %485 = vmatpush1.msra.mxu0 %v108
    %486 = vmatprep.subr.mxu0 %v105
    %487 = vmatpush1.msra.mxu0 %v104
    %488 = vmatprep.subr.mxu0 %v101
    %489 = vmatpush1.msra.mxu0 %v100
    %490 = vmatprep.subr.mxu0 %v97
    %491 = vmatpush1.msra.mxu0 %v96
    %492 = vmatprep.subr.mxu0 %v93
    %493 = vmatpush1.msra.mxu0 %v92
    %494 = vmatprep.subr.mxu0 %v89
    %495 = vmatpush1.msra.mxu0 %v88
    %496 = vmatprep.subr.mxu0 %v85
    %497 = vmatpush1.msra.mxu0 %v84
    %498 = vmatprep.subr.mxu0 %v81
    %499 = vmatpush1.msra.mxu0 %v80
    %500 = vmatprep.subr.mxu0 %v77
    %501 = vmatpush1.msra.mxu0 %v76
    %502 = vmatprep.subr.mxu0 %v73
    %503 = vmatpush1.msra.mxu0 %v72
    %504 = vmatprep.subr.mxu0 %v69
    %505 = vmatpush1.msra.mxu0 %v68
    %506 = vmatprep.subr.mxu0 %v65
    %507 = vmatpush1.msra.mxu0 %v64
    %508 = vmatprep.subr.mxu0 %v61
    %509 = vmatpush1.msra.mxu0 %v60
    %510 = vmatprep.subr.mxu0 %v185
    %511 = vmatpush2.msra.mxu0 %v184
    %512 = vmatprep.subr.mxu0 %v181
    %513 = vmatpush2.msra.mxu0 %v180
    %514 = vmatprep.subr.mxu0 %v177
    %515 = vmatpush2.msra.mxu0 %v176
    %516 = vmatprep.subr.mxu0 %v173
    %517 = vmatpush2.msra.mxu0 %v172
    %518 = vmatprep.subr.mxu0 %v169
    %519 = vmatpush2.msra.mxu0 %v168
    %520 = vmatprep.subr.mxu0 %v165
    %521 = vmatpush2.msra.mxu0 %v164
    %522 = vmatprep.subr.mxu0 %v161
    %523 = vmatpush2.msra.mxu0 %v160
    %524 = vmatprep.subr.mxu0 %v157
    %525 = vmatpush2.msra.mxu0 %v156
    %526 = vmatprep.subr.mxu0 %v153
    %527 = vmatpush2.msra.mxu0 %v152
    %528 = vmatprep.subr.mxu0 %v149
    %529 = vmatpush2.msra.mxu0 %v148
    %530 = vmatprep.subr.mxu0 %v145
    %531 = vmatpush2.msra.mxu0 %v144
    %532 = vmatprep.subr.mxu0 %v141
    %533 = vmatpush2.msra.mxu0 %v140
    %534 = vmatprep.subr.mxu0 %v137
    %535 = vmatpush2.msra.mxu0 %v136
    %536 = vmatprep.subr.mxu0 %v133
    %537 = vmatpush2.msra.mxu0 %v132
    %538 = vmatprep.subr.mxu0 %v129
    %539 = vmatpush2.msra.mxu0 %v128
    %540 = vmatprep.subr.mxu0 %v125
    %541 = vmatpush2.msra.mxu0 %v124
    %542 = vmatprep.mubr.f32.mxu0 %v55
    %543 = vmatmul.mubr.f32.gmra.mxu0 %v54
    %v544 = vpop.f32.mrf.mxu0
    %v545 = vadd.f32 %v327, %v544
    %v546 = vpop.f32.mrf.mxu0
    %v547 = vadd.f32 %v331, %v546
    %548 = vdwg.mxu0
    %549 = vmatprep.subr.mxu0 %v249
    %550 = vmatpush1.msra.mxu0 %v248
    %551 = vmatprep.subr.mxu0 %v245
    %552 = vmatpush1.msra.mxu0 %v244
    %553 = vmatprep.subr.mxu0 %v241
    %554 = vmatpush1.msra.mxu0 %v240
    %555 = vmatprep.subr.mxu0 %v237
    %556 = vmatpush1.msra.mxu0 %v236
    %557 = vmatprep.subr.mxu0 %v233
    %558 = vmatpush1.msra.mxu0 %v232
    %559 = vmatprep.subr.mxu0 %v229
    %560 = vmatpush1.msra.mxu0 %v228
    %561 = vmatprep.subr.mxu0 %v225
    %562 = vmatpush1.msra.mxu0 %v224
    %563 = vmatprep.subr.mxu0 %v221
    %564 = vmatpush1.msra.mxu0 %v220
    %565 = vmatprep.subr.mxu0 %v217
    %566 = vmatpush1.msra.mxu0 %v216
    %567 = vmatprep.subr.mxu0 %v213
    %568 = vmatpush1.msra.mxu0 %v212
    %569 = vmatprep.subr.mxu0 %v209
    %570 = vmatpush1.msra.mxu0 %v208
    %571 = vmatprep.subr.mxu0 %v205
    %572 = vmatpush1.msra.mxu0 %v204
    %573 = vmatprep.subr.mxu0 %v201
    %574 = vmatpush1.msra.mxu0 %v200
    %575 = vmatprep.subr.mxu0 %v197
    %576 = vmatpush1.msra.mxu0 %v196
    %577 = vmatprep.subr.mxu0 %v193
    %578 = vmatpush1.msra.mxu0 %v192
    %579 = vmatprep.subr.mxu0 %v189
    %580 = vmatpush1.msra.mxu0 %v188
    %581 = vmatprep.subr.mxu0 %v313
    %582 = vmatpush2.msra.mxu0 %v312
    %583 = vmatprep.subr.mxu0 %v309
    %584 = vmatpush2.msra.mxu0 %v308
    %585 = vmatprep.subr.mxu0 %v305
    %586 = vmatpush2.msra.mxu0 %v304
    %587 = vmatprep.subr.mxu0 %v301
    %588 = vmatpush2.msra.mxu0 %v300
    %589 = vmatprep.subr.mxu0 %v297
    %590 = vmatpush2.msra.mxu0 %v296
    %591 = vmatprep.subr.mxu0 %v293
    %592 = vmatpush2.msra.mxu0 %v292
    %593 = vmatprep.subr.mxu0 %v289
    %594 = vmatpush2.msra.mxu0 %v288
    %595 = vmatprep.subr.mxu0 %v285
    %596 = vmatpush2.msra.mxu0 %v284
    %597 = vmatprep.subr.mxu0 %v281
    %598 = vmatpush2.msra.mxu0 %v280
    %599 = vmatprep.subr.mxu0 %v277
    %600 = vmatpush2.msra.mxu0 %v276
    %601 = vmatprep.subr.mxu0 %v273
    %602 = vmatpush2.msra.mxu0 %v272
    %603 = vmatprep.subr.mxu0 %v269
    %604 = vmatpush2.msra.mxu0 %v268
    %605 = vmatprep.subr.mxu0 %v265
    %606 = vmatpush2.msra.mxu0 %v264
    %607 = vmatprep.subr.mxu0 %v261
    %608 = vmatpush2.msra.mxu0 %v260
    %609 = vmatprep.subr.mxu0 %v257
    %610 = vmatpush2.msra.mxu0 %v256
    %611 = vmatprep.subr.mxu0 %v253
    %612 = vmatpush2.msra.mxu0 %v252
    %613 = vmatprep.mubr.f32.mxu0 %v57
    %614 = vmatmul.mubr.f32.gmra.mxu0 %v56
    %v615 = vpop.f32.mrf.mxu0
    %v616 = vadd.f32 %v545, %v615
    %v617 = vpop.f32.mrf.mxu0
    %v618 = vadd.f32 %v547, %v617
    %619 = vdwg.mxu0
    %vm620 = vcmp.ge.f32.partialorder %v474, 0.0
    %vm621 = vcmp.ge.f32.partialorder %v476, 0.0
    %vm622 = vcmp.ge.f32.partialorder %v616, 0.0
    %vm623 = vcmp.ge.f32.partialorder %v618, 0.0
    %v624 = vmul.f32 %v474, 0.2
    %v625 = vmul.f32 %v476, 0.2
    %v626 = vmul.f32 %v616, 0.2
    %v627 = vmul.f32 %v618, 0.2
    %v628 = vsel %vm620, %v474, %v624
    %v629 = vsel %vm621, %v476, %v625
    %v630 = vsel %vm622, %v616, %v626
    %v631 = vsel %vm623, %v618, %v627
    %s632 = scalar_lea.vmem [#allocation5], 2048
    %v633 = vld [vmem:[%s632] sm:$0xff]
    %v634 = vld [vmem:[%s632 + $0x8] sm:$0xff]
    %v635 = vld [vmem:[%s632 + $0x10] sm:$0xff]
    %v636 = vld [vmem:[%s632 + $0x18] sm:$0xff]
    %v637 = vld [vmem:[%s632 + $0x20] sm:$0xff]
    %v638 = vld [vmem:[%s632 + $0x28] sm:$0xff]
    %v639 = vld [vmem:[%s632 + $0x30] sm:$0xff]
    %v640 = vld [vmem:[%s632 + $0x38] sm:$0xff]
    %v641 = vld [vmem:[%s632 + $0x40] sm:$0xff]
    %v642 = vld [vmem:[%s632 + $0x48] sm:$0xff]
    %v643 = vld [vmem:[%s632 + $0x50] sm:$0xff]
    %v644 = vld [vmem:[%s632 + $0x58] sm:$0xff]
    %v645 = vld [vmem:[%s632 + $0x60] sm:$0xff]
    %v646 = vld [vmem:[%s632 + $0x68] sm:$0xff]
    %v647 = vld [vmem:[%s632 + $0x70] sm:$0xff]
    %v648 = vld [vmem:[%s632 + $0x78] sm:$0xff]
    %v649 = vld [vmem:[%s632 + $0x80] sm:$0xff]
    %v650 = vld [vmem:[%s632 + $0x88] sm:$0xff]
    %v651 = vld [vmem:[%s632 + $0x90] sm:$0xff]
    %v652 = vld [vmem:[%s632 + $0x98] sm:$0xff]
    %v653 = vld [vmem:[%s632 + $0xa0] sm:$0xff]
    %v654 = vld [vmem:[%s632 + $0xa8] sm:$0xff]
    %v655 = vld [vmem:[%s632 + $0xb0] sm:$0xff]
    %v656 = vld [vmem:[%s632 + $0xb8] sm:$0xff]
    %v657 = vld [vmem:[%s632 + $0xc0] sm:$0xff]
    %v658 = vld [vmem:[%s632 + $0xc8] sm:$0xff]
    %v659 = vld [vmem:[%s632 + $0xd0] sm:$0xff]
    %v660 = vld [vmem:[%s632 + $0xd8] sm:$0xff]
    %v661 = vld [vmem:[%s632 + $0xe0] sm:$0xff]
    %v662 = vld [vmem:[%s632 + $0xe8] sm:$0xff]
    %v663 = vld [vmem:[%s632 + $0xf0] sm:$0xff]
    %v664 = vld [vmem:[%s632 + $0xf8] sm:$0xff]
    %v665 = vld [vmem:[%s632 + $0x100] sm:$0xff]
    %v666 = vld [vmem:[%s632 + $0x108] sm:$0xff]
    %v667 = vld [vmem:[%s632 + $0x110] sm:$0xff]
    %v668 = vld [vmem:[%s632 + $0x118] sm:$0xff]
    %v669 = vld [vmem:[%s632 + $0x120] sm:$0xff]
    %v670 = vld [vmem:[%s632 + $0x128] sm:$0xff]
    %v671 = vld [vmem:[%s632 + $0x130] sm:$0xff]
    %v672 = vld [vmem:[%s632 + $0x138] sm:$0xff]
    %v673 = vld [vmem:[%s632 + $0x140] sm:$0xff]
    %v674 = vld [vmem:[%s632 + $0x148] sm:$0xff]
    %v675 = vld [vmem:[%s632 + $0x150] sm:$0xff]
    %v676 = vld [vmem:[%s632 + $0x158] sm:$0xff]
    %v677 = vld [vmem:[%s632 + $0x160] sm:$0xff]
    %v678 = vld [vmem:[%s632 + $0x168] sm:$0xff]
    %v679 = vld [vmem:[%s632 + $0x170] sm:$0xff]
    %v680 = vld [vmem:[%s632 + $0x178] sm:$0xff]
    %v681 = vld [vmem:[%s632 + $0x180] sm:$0xff]
    %v682 = vld [vmem:[%s632 + $0x188] sm:$0xff]
    %v683 = vld [vmem:[%s632 + $0x190] sm:$0xff]
    %v684 = vld [vmem:[%s632 + $0x198] sm:$0xff]
    %v685 = vld [vmem:[%s632 + $0x1a0] sm:$0xff]
    %v686 = vld [vmem:[%s632 + $0x1a8] sm:$0xff]
    %v687 = vld [vmem:[%s632 + $0x1b0] sm:$0xff]
    %v688 = vld [vmem:[%s632 + $0x1b8] sm:$0xff]
    %v689 = vld [vmem:[%s632 + $0x1c0] sm:$0xff]
    %v690 = vld [vmem:[%s632 + $0x1c8] sm:$0xff]
    %v691 = vld [vmem:[%s632 + $0x1d0] sm:$0xff]
    %v692 = vld [vmem:[%s632 + $0x1d8] sm:$0xff]
    %v693 = vld [vmem:[%s632 + $0x1e0] sm:$0xff]
    %v694 = vld [vmem:[%s632 + $0x1e8] sm:$0xff]
    %v695 = vld [vmem:[%s632 + $0x1f0] sm:$0xff]
    %v696 = vld [vmem:[%s632 + $0x1f8] sm:$0xff]
    %v697 = vld [vmem:[%s632 + $0x200] sm:$0xff]
    %v698 = vld [vmem:[%s632 + $0x208] sm:$0xff]
    %v699 = vld [vmem:[%s632 + $0x210] sm:$0xff]
    %v700 = vld [vmem:[%s632 + $0x218] sm:$0xff]
    %v701 = vld [vmem:[%s632 + $0x220] sm:$0xff]
    %v702 = vld [vmem:[%s632 + $0x228] sm:$0xff]
    %v703 = vld [vmem:[%s632 + $0x230] sm:$0xff]
    %v704 = vld [vmem:[%s632 + $0x238] sm:$0xff]
    %v705 = vld [vmem:[%s632 + $0x240] sm:$0xff]
    %v706 = vld [vmem:[%s632 + $0x248] sm:$0xff]
    %v707 = vld [vmem:[%s632 + $0x250] sm:$0xff]
    %v708 = vld [vmem:[%s632 + $0x258] sm:$0xff]
    %v709 = vld [vmem:[%s632 + $0x260] sm:$0xff]
    %v710 = vld [vmem:[%s632 + $0x268] sm:$0xff]
    %v711 = vld [vmem:[%s632 + $0x270] sm:$0xff]
    %v712 = vld [vmem:[%s632 + $0x278] sm:$0xff]
    %v713 = vld [vmem:[%s632 + $0x280] sm:$0xff]
    %v714 = vld [vmem:[%s632 + $0x288] sm:$0xff]
    %v715 = vld [vmem:[%s632 + $0x290] sm:$0xff]
    %v716 = vld [vmem:[%s632 + $0x298] sm:$0xff]
    %v717 = vld [vmem:[%s632 + $0x2a0] sm:$0xff]
    %v718 = vld [vmem:[%s632 + $0x2a8] sm:$0xff]
    %v719 = vld [vmem:[%s632 + $0x2b0] sm:$0xff]
    %v720 = vld [vmem:[%s632 + $0x2b8] sm:$0xff]
    %v721 = vld [vmem:[%s632 + $0x2c0] sm:$0xff]
    %v722 = vld [vmem:[%s632 + $0x2c8] sm:$0xff]
    %v723 = vld [vmem:[%s632 + $0x2d0] sm:$0xff]
    %v724 = vld [vmem:[%s632 + $0x2d8] sm:$0xff]
    %v725 = vld [vmem:[%s632 + $0x2e0] sm:$0xff]
    %v726 = vld [vmem:[%s632 + $0x2e8] sm:$0xff]
    %v727 = vld [vmem:[%s632 + $0x2f0] sm:$0xff]
    %v728 = vld [vmem:[%s632 + $0x2f8] sm:$0xff]
    %v729 = vld [vmem:[%s632 + $0x300] sm:$0xff]
    %v730 = vld [vmem:[%s632 + $0x308] sm:$0xff]
    %v731 = vld [vmem:[%s632 + $0x310] sm:$0xff]
    %v732 = vld [vmem:[%s632 + $0x318] sm:$0xff]
    %v733 = vld [vmem:[%s632 + $0x320] sm:$0xff]
    %v734 = vld [vmem:[%s632 + $0x328] sm:$0xff]
    %v735 = vld [vmem:[%s632 + $0x330] sm:$0xff]
    %v736 = vld [vmem:[%s632 + $0x338] sm:$0xff]
    %v737 = vld [vmem:[%s632 + $0x340] sm:$0xff]
    %v738 = vld [vmem:[%s632 + $0x348] sm:$0xff]
    %v739 = vld [vmem:[%s632 + $0x350] sm:$0xff]
    %v740 = vld [vmem:[%s632 + $0x358] sm:$0xff]
    %v741 = vld [vmem:[%s632 + $0x360] sm:$0xff]
    %v742 = vld [vmem:[%s632 + $0x368] sm:$0xff]
    %v743 = vld [vmem:[%s632 + $0x370] sm:$0xff]
    %v744 = vld [vmem:[%s632 + $0x378] sm:$0xff]
    %v745 = vld [vmem:[%s632 + $0x380] sm:$0xff]
    %v746 = vld [vmem:[%s632 + $0x388] sm:$0xff]
    %v747 = vld [vmem:[%s632 + $0x390] sm:$0xff]
    %v748 = vld [vmem:[%s632 + $0x398] sm:$0xff]
    %v749 = vld [vmem:[%s632 + $0x3a0] sm:$0xff]
    %v750 = vld [vmem:[%s632 + $0x3a8] sm:$0xff]
    %v751 = vld [vmem:[%s632 + $0x3b0] sm:$0xff]
    %v752 = vld [vmem:[%s632 + $0x3b8] sm:$0xff]
    %v753 = vld [vmem:[%s632 + $0x3c0] sm:$0xff]
    %v754 = vld [vmem:[%s632 + $0x3c8] sm:$0xff]
    %v755 = vld [vmem:[%s632 + $0x3d0] sm:$0xff]
    %v756 = vld [vmem:[%s632 + $0x3d8] sm:$0xff]
    %v757 = vld [vmem:[%s632 + $0x3e0] sm:$0xff]
    %v758 = vld [vmem:[%s632 + $0x3e8] sm:$0xff]
    %v759 = vld [vmem:[%s632 + $0x3f0] sm:$0xff]
    %v760 = vld [vmem:[%s632 + $0x3f8] sm:$0xff]
    %v761 = vld [vmem:[%s632 + $0x400] sm:$0xff]
    %v762 = vld [vmem:[%s632 + $0x408] sm:$0xff]
    %v763 = vld [vmem:[%s632 + $0x410] sm:$0xff]
    %v764 = vld [vmem:[%s632 + $0x418] sm:$0xff]
    %v765 = vld [vmem:[%s632 + $0x420] sm:$0xff]
    %v766 = vld [vmem:[%s632 + $0x428] sm:$0xff]
    %v767 = vld [vmem:[%s632 + $0x430] sm:$0xff]
    %v768 = vld [vmem:[%s632 + $0x438] sm:$0xff]
    %v769 = vld [vmem:[%s632 + $0x440] sm:$0xff]
    %v770 = vld [vmem:[%s632 + $0x448] sm:$0xff]
    %v771 = vld [vmem:[%s632 + $0x450] sm:$0xff]
    %v772 = vld [vmem:[%s632 + $0x458] sm:$0xff]
    %v773 = vld [vmem:[%s632 + $0x460] sm:$0xff]
    %v774 = vld [vmem:[%s632 + $0x468] sm:$0xff]
    %v775 = vld [vmem:[%s632 + $0x470] sm:$0xff]
    %v776 = vld [vmem:[%s632 + $0x478] sm:$0xff]
    %v777 = vld [vmem:[%s632 + $0x480] sm:$0xff]
    %v778 = vld [vmem:[%s632 + $0x488] sm:$0xff]
    %v779 = vld [vmem:[%s632 + $0x490] sm:$0xff]
    %v780 = vld [vmem:[%s632 + $0x498] sm:$0xff]
    %v781 = vld [vmem:[%s632 + $0x4a0] sm:$0xff]
    %v782 = vld [vmem:[%s632 + $0x4a8] sm:$0xff]
    %v783 = vld [vmem:[%s632 + $0x4b0] sm:$0xff]
    %v784 = vld [vmem:[%s632 + $0x4b8] sm:$0xff]
    %v785 = vld [vmem:[%s632 + $0x4c0] sm:$0xff]
    %v786 = vld [vmem:[%s632 + $0x4c8] sm:$0xff]
    %v787 = vld [vmem:[%s632 + $0x4d0] sm:$0xff]
    %v788 = vld [vmem:[%s632 + $0x4d8] sm:$0xff]
    %v789 = vld [vmem:[%s632 + $0x4e0] sm:$0xff]
    %v790 = vld [vmem:[%s632 + $0x4e8] sm:$0xff]
    %v791 = vld [vmem:[%s632 + $0x4f0] sm:$0xff]
    %v792 = vld [vmem:[%s632 + $0x4f8] sm:$0xff]
    %v793 = vld [vmem:[%s632 + $0x500] sm:$0xff]
    %v794 = vld [vmem:[%s632 + $0x508] sm:$0xff]
    %v795 = vld [vmem:[%s632 + $0x510] sm:$0xff]
    %v796 = vld [vmem:[%s632 + $0x518] sm:$0xff]
    %v797 = vld [vmem:[%s632 + $0x520] sm:$0xff]
    %v798 = vld [vmem:[%s632 + $0x528] sm:$0xff]
    %v799 = vld [vmem:[%s632 + $0x530] sm:$0xff]
    %v800 = vld [vmem:[%s632 + $0x538] sm:$0xff]
    %v801 = vld [vmem:[%s632 + $0x540] sm:$0xff]
    %v802 = vld [vmem:[%s632 + $0x548] sm:$0xff]
    %v803 = vld [vmem:[%s632 + $0x550] sm:$0xff]
    %v804 = vld [vmem:[%s632 + $0x558] sm:$0xff]
    %v805 = vld [vmem:[%s632 + $0x560] sm:$0xff]
    %v806 = vld [vmem:[%s632 + $0x568] sm:$0xff]
    %v807 = vld [vmem:[%s632 + $0x570] sm:$0xff]
    %v808 = vld [vmem:[%s632 + $0x578] sm:$0xff]
    %v809 = vld [vmem:[%s632 + $0x580] sm:$0xff]
    %v810 = vld [vmem:[%s632 + $0x588] sm:$0xff]
    %v811 = vld [vmem:[%s632 + $0x590] sm:$0xff]
    %v812 = vld [vmem:[%s632 + $0x598] sm:$0xff]
    %v813 = vld [vmem:[%s632 + $0x5a0] sm:$0xff]
    %v814 = vld [vmem:[%s632 + $0x5a8] sm:$0xff]
    %v815 = vld [vmem:[%s632 + $0x5b0] sm:$0xff]
    %v816 = vld [vmem:[%s632 + $0x5b8] sm:$0xff]
    %v817 = vld [vmem:[%s632 + $0x5c0] sm:$0xff]
    %v818 = vld [vmem:[%s632 + $0x5c8] sm:$0xff]
    %v819 = vld [vmem:[%s632 + $0x5d0] sm:$0xff]
    %v820 = vld [vmem:[%s632 + $0x5d8] sm:$0xff]
    %v821 = vld [vmem:[%s632 + $0x5e0] sm:$0xff]
    %v822 = vld [vmem:[%s632 + $0x5e8] sm:$0xff]
    %v823 = vld [vmem:[%s632 + $0x5f0] sm:$0xff]
    %v824 = vld [vmem:[%s632 + $0x5f8] sm:$0xff]
    %v825 = vld [vmem:[%s632 + $0x600] sm:$0xff]
    %v826 = vld [vmem:[%s632 + $0x608] sm:$0xff]
    %v827 = vld [vmem:[%s632 + $0x610] sm:$0xff]
    %v828 = vld [vmem:[%s632 + $0x618] sm:$0xff]
    %v829 = vld [vmem:[%s632 + $0x620] sm:$0xff]
    %v830 = vld [vmem:[%s632 + $0x628] sm:$0xff]
    %v831 = vld [vmem:[%s632 + $0x630] sm:$0xff]
    %v832 = vld [vmem:[%s632 + $0x638] sm:$0xff]
    %v833 = vld [vmem:[%s632 + $0x640] sm:$0xff]
    %v834 = vld [vmem:[%s632 + $0x648] sm:$0xff]
    %v835 = vld [vmem:[%s632 + $0x650] sm:$0xff]
    %v836 = vld [vmem:[%s632 + $0x658] sm:$0xff]
    %v837 = vld [vmem:[%s632 + $0x660] sm:$0xff]
    %v838 = vld [vmem:[%s632 + $0x668] sm:$0xff]
    %v839 = vld [vmem:[%s632 + $0x670] sm:$0xff]
    %v840 = vld [vmem:[%s632 + $0x678] sm:$0xff]
    %v841 = vld [vmem:[%s632 + $0x680] sm:$0xff]
    %v842 = vld [vmem:[%s632 + $0x688] sm:$0xff]
    %v843 = vld [vmem:[%s632 + $0x690] sm:$0xff]
    %v844 = vld [vmem:[%s632 + $0x698] sm:$0xff]
    %v845 = vld [vmem:[%s632 + $0x6a0] sm:$0xff]
    %v846 = vld [vmem:[%s632 + $0x6a8] sm:$0xff]
    %v847 = vld [vmem:[%s632 + $0x6b0] sm:$0xff]
    %v848 = vld [vmem:[%s632 + $0x6b8] sm:$0xff]
    %v849 = vld [vmem:[%s632 + $0x6c0] sm:$0xff]
    %v850 = vld [vmem:[%s632 + $0x6c8] sm:$0xff]
    %v851 = vld [vmem:[%s632 + $0x6d0] sm:$0xff]
    %v852 = vld [vmem:[%s632 + $0x6d8] sm:$0xff]
    %v853 = vld [vmem:[%s632 + $0x6e0] sm:$0xff]
    %v854 = vld [vmem:[%s632 + $0x6e8] sm:$0xff]
    %v855 = vld [vmem:[%s632 + $0x6f0] sm:$0xff]
    %v856 = vld [vmem:[%s632 + $0x6f8] sm:$0xff]
    %v857 = vld [vmem:[%s632 + $0x700] sm:$0xff]
    %v858 = vld [vmem:[%s632 + $0x708] sm:$0xff]
    %v859 = vld [vmem:[%s632 + $0x710] sm:$0xff]
    %v860 = vld [vmem:[%s632 + $0x718] sm:$0xff]
    %v861 = vld [vmem:[%s632 + $0x720] sm:$0xff]
    %v862 = vld [vmem:[%s632 + $0x728] sm:$0xff]
    %v863 = vld [vmem:[%s632 + $0x730] sm:$0xff]
    %v864 = vld [vmem:[%s632 + $0x738] sm:$0xff]
    %v865 = vld [vmem:[%s632 + $0x740] sm:$0xff]
    %v866 = vld [vmem:[%s632 + $0x748] sm:$0xff]
    %v867 = vld [vmem:[%s632 + $0x750] sm:$0xff]
    %v868 = vld [vmem:[%s632 + $0x758] sm:$0xff]
    %v869 = vld [vmem:[%s632 + $0x760] sm:$0xff]
    %v870 = vld [vmem:[%s632 + $0x768] sm:$0xff]
    %v871 = vld [vmem:[%s632 + $0x770] sm:$0xff]
    %v872 = vld [vmem:[%s632 + $0x778] sm:$0xff]
    %v873 = vld [vmem:[%s632 + $0x780] sm:$0xff]
    %v874 = vld [vmem:[%s632 + $0x788] sm:$0xff]
    %v875 = vld [vmem:[%s632 + $0x790] sm:$0xff]
    %v876 = vld [vmem:[%s632 + $0x798] sm:$0xff]
    %v877 = vld [vmem:[%s632 + $0x7a0] sm:$0xff]
    %v878 = vld [vmem:[%s632 + $0x7a8] sm:$0xff]
    %v879 = vld [vmem:[%s632 + $0x7b0] sm:$0xff]
    %v880 = vld [vmem:[%s632 + $0x7b8] sm:$0xff]
    %v881 = vld [vmem:[%s632 + $0x7c0] sm:$0xff]
    %v882 = vld [vmem:[%s632 + $0x7c8] sm:$0xff]
    %v883 = vld [vmem:[%s632 + $0x7d0] sm:$0xff]
    %v884 = vld [vmem:[%s632 + $0x7d8] sm:$0xff]
    %v885 = vld [vmem:[%s632 + $0x7e0] sm:$0xff]
    %v886 = vld [vmem:[%s632 + $0x7e8] sm:$0xff]
    %v887 = vld [vmem:[%s632 + $0x7f0] sm:$0xff]
    %v888 = vld [vmem:[%s632 + $0x7f8] sm:$0xff]
    %s889 = scalar_lea.vmem [#allocation7], 4
    %v890 = vld [vmem:[%s889] sm:$0xf]
    %v892 = vlaneseq
    %v893 = vshrl.u32 %v892, 7
    %v894 = vsub.s32 0, %v893
    %v895 = vrot.slane %v890, %v894
    %v896 = vlaneseq
    %v897 = vshrl.u32 %v896, 7
    %v898 = vsub.s32 1, %v897
    %v899 = vrot.slane %v890, %v898
    %v900 = vlaneseq
    %v901 = vshrl.u32 %v900, 7
    %v902 = vsub.s32 2, %v901
    %v903 = vrot.slane %v890, %v902
    %v904 = vlaneseq
    %v905 = vshrl.u32 %v904, 7
    %v906 = vsub.s32 3, %v905
    %v907 = vrot.slane %v890, %v906
    %912 = vmatprep.subr.mxu0 %v694
    %913 = vmatpush1.msra.mxu0 %v693
    %914 = vmatprep.subr.mxu0 %v690
    %915 = vmatpush1.msra.mxu0 %v689
    %916 = vmatprep.subr.mxu0 %v686
    %917 = vmatpush1.msra.mxu0 %v685
    %918 = vmatprep.subr.mxu0 %v682
    %919 = vmatpush1.msra.mxu0 %v681
    %920 = vmatprep.subr.mxu0 %v678
    %921 = vmatpush1.msra.mxu0 %v677
    %922 = vmatprep.subr.mxu0 %v674
    %923 = vmatpush1.msra.mxu0 %v673
    %924 = vmatprep.subr.mxu0 %v670
    %925 = vmatpush1.msra.mxu0 %v669
    %926 = vmatprep.subr.mxu0 %v666
    %927 = vmatpush1.msra.mxu0 %v665
    %928 = vmatprep.subr.mxu0 %v662
    %929 = vmatpush1.msra.mxu0 %v661
    %930 = vmatprep.subr.mxu0 %v658
    %931 = vmatpush1.msra.mxu0 %v657
    %932 = vmatprep.subr.mxu0 %v654
    %933 = vmatpush1.msra.mxu0 %v653
    %934 = vmatprep.subr.mxu0 %v650
    %935 = vmatpush1.msra.mxu0 %v649
    %936 = vmatprep.subr.mxu0 %v646
    %937 = vmatpush1.msra.mxu0 %v645
    %938 = vmatprep.subr.mxu0 %v642
    %939 = vmatpush1.msra.mxu0 %v641
    %940 = vmatprep.subr.mxu0 %v638
    %941 = vmatpush1.msra.mxu0 %v637
    %942 = vmatprep.subr.mxu0 %v634
    %943 = vmatpush1.msra.mxu0 %v633
    %944 = vmatprep.subr.mxu0 %v758
    %945 = vmatpush2.msra.mxu0 %v757
    %946 = vmatprep.subr.mxu0 %v754
    %947 = vmatpush2.msra.mxu0 %v753
    %948 = vmatprep.subr.mxu0 %v750
    %949 = vmatpush2.msra.mxu0 %v749
    %950 = vmatprep.subr.mxu0 %v746
    %951 = vmatpush2.msra.mxu0 %v745
    %952 = vmatprep.subr.mxu0 %v742
    %953 = vmatpush2.msra.mxu0 %v741
    %954 = vmatprep.subr.mxu0 %v738
    %955 = vmatpush2.msra.mxu0 %v737
    %956 = vmatprep.subr.mxu0 %v734
    %957 = vmatpush2.msra.mxu0 %v733
    %958 = vmatprep.subr.mxu0 %v730
    %959 = vmatpush2.msra.mxu0 %v729
    %960 = vmatprep.subr.mxu0 %v726
    %961 = vmatpush2.msra.mxu0 %v725
    %962 = vmatprep.subr.mxu0 %v722
    %963 = vmatpush2.msra.mxu0 %v721
    %964 = vmatprep.subr.mxu0 %v718
    %965 = vmatpush2.msra.mxu0 %v717
    %966 = vmatprep.subr.mxu0 %v714
    %967 = vmatpush2.msra.mxu0 %v713
    %968 = vmatprep.subr.mxu0 %v710
    %969 = vmatpush2.msra.mxu0 %v709
    %970 = vmatprep.subr.mxu0 %v706
    %971 = vmatpush2.msra.mxu0 %v705
    %972 = vmatprep.subr.mxu0 %v702
    %973 = vmatpush2.msra.mxu0 %v701
    %974 = vmatprep.subr.mxu0 %v698
    %975 = vmatpush2.msra.mxu0 %v697
    %976 = vmatprep.mubr.f32.mxu0 %v629
    %977 = vmatmul.mubr.f32.gmra.mxu0 %v628
    %v978 = vpop.f32.mrf.mxu0
    %v979 = vadd.f32 %v895, %v978
    %v980 = vpop.f32.mrf.mxu0
    %v981 = vadd.f32 %v899, %v980
    %982 = vdwg.mxu0
    %983 = vmatprep.subr.mxu0 %v822
    %984 = vmatpush1.msra.mxu0 %v821
    %985 = vmatprep.subr.mxu0 %v818
    %986 = vmatpush1.msra.mxu0 %v817
    %987 = vmatprep.subr.mxu0 %v814
    %988 = vmatpush1.msra.mxu0 %v813
    %989 = vmatprep.subr.mxu0 %v810
    %990 = vmatpush1.msra.mxu0 %v809
    %991 = vmatprep.subr.mxu0 %v806
    %992 = vmatpush1.msra.mxu0 %v805
    %993 = vmatprep.subr.mxu0 %v802
    %994 = vmatpush1.msra.mxu0 %v801
    %995 = vmatprep.subr.mxu0 %v798
    %996 = vmatpush1.msra.mxu0 %v797
    %997 = vmatprep.subr.mxu0 %v794
    %998 = vmatpush1.msra.mxu0 %v793
    %999 = vmatprep.subr.mxu0 %v790
    %1000 = vmatpush1.msra.mxu0 %v789
    %1001 = vmatprep.subr.mxu0 %v786
    %1002 = vmatpush1.msra.mxu0 %v785
    %1003 = vmatprep.subr.mxu0 %v782
    %1004 = vmatpush1.msra.mxu0 %v781
    %1005 = vmatprep.subr.mxu0 %v778
    %1006 = vmatpush1.msra.mxu0 %v777
    %1007 = vmatprep.subr.mxu0 %v774
    %1008 = vmatpush1.msra.mxu0 %v773
    %1009 = vmatprep.subr.mxu0 %v770
    %1010 = vmatpush1.msra.mxu0 %v769
    %1011 = vmatprep.subr.mxu0 %v766
    %1012 = vmatpush1.msra.mxu0 %v765
    %1013 = vmatprep.subr.mxu0 %v762
    %1014 = vmatpush1.msra.mxu0 %v761
    %1015 = vmatprep.subr.mxu0 %v886
    %1016 = vmatpush2.msra.mxu0 %v885
    %1017 = vmatprep.subr.mxu0 %v882
    %1018 = vmatpush2.msra.mxu0 %v881
    %1019 = vmatprep.subr.mxu0 %v878
    %1020 = vmatpush2.msra.mxu0 %v877
    %1021 = vmatprep.subr.mxu0 %v874
    %1022 = vmatpush2.msra.mxu0 %v873
    %1023 = vmatprep.subr.mxu0 %v870
    %1024 = vmatpush2.msra.mxu0 %v869
    %1025 = vmatprep.subr.mxu0 %v866
    %1026 = vmatpush2.msra.mxu0 %v865
    %1027 = vmatprep.subr.mxu0 %v862
    %1028 = vmatpush2.msra.mxu0 %v861
    %1029 = vmatprep.subr.mxu0 %v858
    %1030 = vmatpush2.msra.mxu0 %v857
    %1031 = vmatprep.subr.mxu0 %v854
    %1032 = vmatpush2.msra.mxu0 %v853
    %1033 = vmatprep.subr.mxu0 %v850
    %1034 = vmatpush2.msra.mxu0 %v849
    %1035 = vmatprep.subr.mxu0 %v846
    %1036 = vmatpush2.msra.mxu0 %v845
    %1037 = vmatprep.subr.mxu0 %v842
    %1038 = vmatpush2.msra.mxu0 %v841
    %1039 = vmatprep.subr.mxu0 %v838
    %1040 = vmatpush2.msra.mxu0 %v837
    %1041 = vmatprep.subr.mxu0 %v834
    %1042 = vmatpush2.msra.mxu0 %v833
    %1043 = vmatprep.subr.mxu0 %v830
    %1044 = vmatpush2.msra.mxu0 %v829
    %1045 = vmatprep.subr.mxu0 %v826
    %1046 = vmatpush2.msra.mxu0 %v825
    %1047 = vmatprep.mubr.f32.mxu0 %v631
    %1048 = vmatmul.mubr.f32.gmra.mxu0 %v630
    %v1049 = vpop.f32.mrf.mxu0
    %v1050 = vadd.f32 %v979, %v1049
    %v1051 = vpop.f32.mrf.mxu0
    %v1052 = vadd.f32 %v981, %v1051
    %1053 = vdwg.mxu0
    %1054 = vmatprep.subr.mxu0 %v696
    %1055 = vmatpush1.msra.mxu0 %v695
    %1056 = vmatprep.subr.mxu0 %v692
    %1057 = vmatpush1.msra.mxu0 %v691
    %1058 = vmatprep.subr.mxu0 %v688
    %1059 = vmatpush1.msra.mxu0 %v687
    %1060 = vmatprep.subr.mxu0 %v684
    %1061 = vmatpush1.msra.mxu0 %v683
    %1062 = vmatprep.subr.mxu0 %v680
    %1063 = vmatpush1.msra.mxu0 %v679
    %1064 = vmatprep.subr.mxu0 %v676
    %1065 = vmatpush1.msra.mxu0 %v675
    %1066 = vmatprep.subr.mxu0 %v672
    %1067 = vmatpush1.msra.mxu0 %v671
    %1068 = vmatprep.subr.mxu0 %v668
    %1069 = vmatpush1.msra.mxu0 %v667
    %1070 = vmatprep.subr.mxu0 %v664
    %1071 = vmatpush1.msra.mxu0 %v663
    %1072 = vmatprep.subr.mxu0 %v660
    %1073 = vmatpush1.msra.mxu0 %v659
    %1074 = vmatprep.subr.mxu0 %v656
    %1075 = vmatpush1.msra.mxu0 %v655
    %1076 = vmatprep.subr.mxu0 %v652
    %1077 = vmatpush1.msra.mxu0 %v651
    %1078 = vmatprep.subr.mxu0 %v648
    %1079 = vmatpush1.msra.mxu0 %v647
    %1080 = vmatprep.subr.mxu0 %v644
    %1081 = vmatpush1.msra.mxu0 %v643
    %1082 = vmatprep.subr.mxu0 %v640
    %1083 = vmatpush1.msra.mxu0 %v639
    %1084 = vmatprep.subr.mxu0 %v636
    %1085 = vmatpush1.msra.mxu0 %v635
    %1086 = vmatprep.subr.mxu0 %v760
    %1087 = vmatpush2.msra.mxu0 %v759
    %1088 = vmatprep.subr.mxu0 %v756
    %1089 = vmatpush2.msra.mxu0 %v755
    %1090 = vmatprep.subr.mxu0 %v752
    %1091 = vmatpush2.msra.mxu0 %v751
    %1092 = vmatprep.subr.mxu0 %v748
    %1093 = vmatpush2.msra.mxu0 %v747
    %1094 = vmatprep.subr.mxu0 %v744
    %1095 = vmatpush2.msra.mxu0 %v743
    %1096 = vmatprep.subr.mxu0 %v740
    %1097 = vmatpush2.msra.mxu0 %v739
    %1098 = vmatprep.subr.mxu0 %v736
    %1099 = vmatpush2.msra.mxu0 %v735
    %1100 = vmatprep.subr.mxu0 %v732
    %1101 = vmatpush2.msra.mxu0 %v731
    %1102 = vmatprep.subr.mxu0 %v728
    %1103 = vmatpush2.msra.mxu0 %v727
    %1104 = vmatprep.subr.mxu0 %v724
    %1105 = vmatpush2.msra.mxu0 %v723
    %1106 = vmatprep.subr.mxu0 %v720
    %1107 = vmatpush2.msra.mxu0 %v719
    %1108 = vmatprep.subr.mxu0 %v716
    %1109 = vmatpush2.msra.mxu0 %v715
    %1110 = vmatprep.subr.mxu0 %v712
    %1111 = vmatpush2.msra.mxu0 %v711
    %1112 = vmatprep.subr.mxu0 %v708
    %1113 = vmatpush2.msra.mxu0 %v707
    %1114 = vmatprep.subr.mxu0 %v704
    %1115 = vmatpush2.msra.mxu0 %v703
    %1116 = vmatprep.subr.mxu0 %v700
    %1117 = vmatpush2.msra.mxu0 %v699
    %1118 = vmatprep.mubr.f32.mxu0 %v629
    %1119 = vmatmul.mubr.f32.gmra.mxu0 %v628
    %v1120 = vpop.f32.mrf.mxu0
    %v1121 = vadd.f32 %v903, %v1120
    %v1122 = vpop.f32.mrf.mxu0
    %v1123 = vadd.f32 %v907, %v1122
    %1124 = vdwg.mxu0
    %1125 = vmatprep.subr.mxu0 %v824
    %1126 = vmatpush1.msra.mxu0 %v823
    %1127 = vmatprep.subr.mxu0 %v820
    %1128 = vmatpush1.msra.mxu0 %v819
    %1129 = vmatprep.subr.mxu0 %v816
    %1130 = vmatpush1.msra.mxu0 %v815
    %1131 = vmatprep.subr.mxu0 %v812
    %1132 = vmatpush1.msra.mxu0 %v811
    %1133 = vmatprep.subr.mxu0 %v808
    %1134 = vmatpush1.msra.mxu0 %v807
    %1135 = vmatprep.subr.mxu0 %v804
    %1136 = vmatpush1.msra.mxu0 %v803
    %1137 = vmatprep.subr.mxu0 %v800
    %1138 = vmatpush1.msra.mxu0 %v799
    %1139 = vmatprep.subr.mxu0 %v796
    %1140 = vmatpush1.msra.mxu0 %v795
    %1141 = vmatprep.subr.mxu0 %v792
    %1142 = vmatpush1.msra.mxu0 %v791
    %1143 = vmatprep.subr.mxu0 %v788
    %1144 = vmatpush1.msra.mxu0 %v787
    %1145 = vmatprep.subr.mxu0 %v784
    %1146 = vmatpush1.msra.mxu0 %v783
    %1147 = vmatprep.subr.mxu0 %v780
    %1148 = vmatpush1.msra.mxu0 %v779
    %1149 = vmatprep.subr.mxu0 %v776
    %1150 = vmatpush1.msra.mxu0 %v775
    %1151 = vmatprep.subr.mxu0 %v772
    %1152 = vmatpush1.msra.mxu0 %v771
    %1153 = vmatprep.subr.mxu0 %v768
    %1154 = vmatpush1.msra.mxu0 %v767
    %1155 = vmatprep.subr.mxu0 %v764
    %1156 = vmatpush1.msra.mxu0 %v763
    %1157 = vmatprep.subr.mxu0 %v888
    %1158 = vmatpush2.msra.mxu0 %v887
    %1159 = vmatprep.subr.mxu0 %v884
    %1160 = vmatpush2.msra.mxu0 %v883
    %1161 = vmatprep.subr.mxu0 %v880
    %1162 = vmatpush2.msra.mxu0 %v879
    %1163 = vmatprep.subr.mxu0 %v876
    %1164 = vmatpush2.msra.mxu0 %v875
    %1165 = vmatprep.subr.mxu0 %v872
    %1166 = vmatpush2.msra.mxu0 %v871
    %1167 = vmatprep.subr.mxu0 %v868
    %1168 = vmatpush2.msra.mxu0 %v867
    %1169 = vmatprep.subr.mxu0 %v864
    %1170 = vmatpush2.msra.mxu0 %v863
    %1171 = vmatprep.subr.mxu0 %v860
    %1172 = vmatpush2.msra.mxu0 %v859
    %1173 = vmatprep.subr.mxu0 %v856
    %1174 = vmatpush2.msra.mxu0 %v855
    %1175 = vmatprep.subr.mxu0 %v852
    %1176 = vmatpush2.msra.mxu0 %v851
    %1177 = vmatprep.subr.mxu0 %v848
    %1178 = vmatpush2.msra.mxu0 %v847
    %1179 = vmatprep.subr.mxu0 %v844
    %1180 = vmatpush2.msra.mxu0 %v843
    %1181 = vmatprep.subr.mxu0 %v840
    %1182 = vmatpush2.msra.mxu0 %v839
    %1183 = vmatprep.subr.mxu0 %v836
    %1184 = vmatpush2.msra.mxu0 %v835
    %1185 = vmatprep.subr.mxu0 %v832
    %1186 = vmatpush2.msra.mxu0 %v831
    %1187 = vmatprep.subr.mxu0 %v828
    %1188 = vmatpush2.msra.mxu0 %v827
    %1189 = vmatprep.mubr.f32.mxu0 %v631
    %1190 = vmatmul.mubr.f32.gmra.mxu0 %v630
    %v1191 = vpop.f32.mrf.mxu0
    %v1192 = vadd.f32 %v1121, %v1191
    %v1193 = vpop.f32.mrf.mxu0
    %v1194 = vadd.f32 %v1123, %v1193
    %1195 = vdwg.mxu0
    %vm1196 = vcmp.ge.f32.partialorder %v1050, 0.0
    %vm1197 = vcmp.ge.f32.partialorder %v1052, 0.0
    %vm1198 = vcmp.ge.f32.partialorder %v1192, 0.0
    %vm1199 = vcmp.ge.f32.partialorder %v1194, 0.0
    %v1200 = vmul.f32 %v1050, 0.2
    %v1201 = vmul.f32 %v1052, 0.2
    %v1202 = vmul.f32 %v1192, 0.2
    %v1203 = vmul.f32 %v1194, 0.2
    %v1204 = vsel %vm1196, %v1050, %v1200
    %v1205 = vsel %vm1197, %v1052, %v1201
    %v1206 = vsel %vm1198, %v1192, %v1202
    %v1207 = vsel %vm1199, %v1194, %v1203
    %s1208 = scalar_lea.vmem [#allocation5], 4096
    %v1209 = vld [vmem:[%s1208] sm:$0xff]
    %v1210 = vld [vmem:[%s1208 + $0x8] sm:$0xff]
    %v1211 = vld [vmem:[%s1208 + $0x10] sm:$0xff]
    %v1212 = vld [vmem:[%s1208 + $0x18] sm:$0xff]
    %v1213 = vld [vmem:[%s1208 + $0x20] sm:$0xff]
    %v1214 = vld [vmem:[%s1208 + $0x28] sm:$0xff]
    %v1215 = vld [vmem:[%s1208 + $0x30] sm:$0xff]
    %v1216 = vld [vmem:[%s1208 + $0x38] sm:$0xff]
    %v1217 = vld [vmem:[%s1208 + $0x40] sm:$0xff]
    %v1218 = vld [vmem:[%s1208 + $0x48] sm:$0xff]
    %v1219 = vld [vmem:[%s1208 + $0x50] sm:$0xff]
    %v1220 = vld [vmem:[%s1208 + $0x58] sm:$0xff]
    %v1221 = vld [vmem:[%s1208 + $0x60] sm:$0xff]
    %v1222 = vld [vmem:[%s1208 + $0x68] sm:$0xff]
    %v1223 = vld [vmem:[%s1208 + $0x70] sm:$0xff]
    %v1224 = vld [vmem:[%s1208 + $0x78] sm:$0xff]
    %v1225 = vld [vmem:[%s1208 + $0x80] sm:$0xff]
    %v1226 = vld [vmem:[%s1208 + $0x88] sm:$0xff]
    %v1227 = vld [vmem:[%s1208 + $0x90] sm:$0xff]
    %v1228 = vld [vmem:[%s1208 + $0x98] sm:$0xff]
    %v1229 = vld [vmem:[%s1208 + $0xa0] sm:$0xff]
    %v1230 = vld [vmem:[%s1208 + $0xa8] sm:$0xff]
    %v1231 = vld [vmem:[%s1208 + $0xb0] sm:$0xff]
    %v1232 = vld [vmem:[%s1208 + $0xb8] sm:$0xff]
    %v1233 = vld [vmem:[%s1208 + $0xc0] sm:$0xff]
    %v1234 = vld [vmem:[%s1208 + $0xc8] sm:$0xff]
    %v1235 = vld [vmem:[%s1208 + $0xd0] sm:$0xff]
    %v1236 = vld [vmem:[%s1208 + $0xd8] sm:$0xff]
    %v1237 = vld [vmem:[%s1208 + $0xe0] sm:$0xff]
    %v1238 = vld [vmem:[%s1208 + $0xe8] sm:$0xff]
    %v1239 = vld [vmem:[%s1208 + $0xf0] sm:$0xff]
    %v1240 = vld [vmem:[%s1208 + $0xf8] sm:$0xff]
    %v1241 = vld [vmem:[%s1208 + $0x100] sm:$0xff]
    %v1242 = vld [vmem:[%s1208 + $0x108] sm:$0xff]
    %v1243 = vld [vmem:[%s1208 + $0x110] sm:$0xff]
    %v1244 = vld [vmem:[%s1208 + $0x118] sm:$0xff]
    %v1245 = vld [vmem:[%s1208 + $0x120] sm:$0xff]
    %v1246 = vld [vmem:[%s1208 + $0x128] sm:$0xff]
    %v1247 = vld [vmem:[%s1208 + $0x130] sm:$0xff]
    %v1248 = vld [vmem:[%s1208 + $0x138] sm:$0xff]
    %v1249 = vld [vmem:[%s1208 + $0x140] sm:$0xff]
    %v1250 = vld [vmem:[%s1208 + $0x148] sm:$0xff]
    %v1251 = vld [vmem:[%s1208 + $0x150] sm:$0xff]
    %v1252 = vld [vmem:[%s1208 + $0x158] sm:$0xff]
    %v1253 = vld [vmem:[%s1208 + $0x160] sm:$0xff]
    %v1254 = vld [vmem:[%s1208 + $0x168] sm:$0xff]
    %v1255 = vld [vmem:[%s1208 + $0x170] sm:$0xff]
    %v1256 = vld [vmem:[%s1208 + $0x178] sm:$0xff]
    %v1257 = vld [vmem:[%s1208 + $0x180] sm:$0xff]
    %v1258 = vld [vmem:[%s1208 + $0x188] sm:$0xff]
    %v1259 = vld [vmem:[%s1208 + $0x190] sm:$0xff]
    %v1260 = vld [vmem:[%s1208 + $0x198] sm:$0xff]
    %v1261 = vld [vmem:[%s1208 + $0x1a0] sm:$0xff]
    %v1262 = vld [vmem:[%s1208 + $0x1a8] sm:$0xff]
    %v1263 = vld [vmem:[%s1208 + $0x1b0] sm:$0xff]
    %v1264 = vld [vmem:[%s1208 + $0x1b8] sm:$0xff]
    %v1265 = vld [vmem:[%s1208 + $0x1c0] sm:$0xff]
    %v1266 = vld [vmem:[%s1208 + $0x1c8] sm:$0xff]
    %v1267 = vld [vmem:[%s1208 + $0x1d0] sm:$0xff]
    %v1268 = vld [vmem:[%s1208 + $0x1d8] sm:$0xff]
    %v1269 = vld [vmem:[%s1208 + $0x1e0] sm:$0xff]
    %v1270 = vld [vmem:[%s1208 + $0x1e8] sm:$0xff]
    %v1271 = vld [vmem:[%s1208 + $0x1f0] sm:$0xff]
    %v1272 = vld [vmem:[%s1208 + $0x1f8] sm:$0xff]
    %v1273 = vld [vmem:[%s1208 + $0x200] sm:$0xff]
    %v1274 = vld [vmem:[%s1208 + $0x208] sm:$0xff]
    %v1275 = vld [vmem:[%s1208 + $0x210] sm:$0xff]
    %v1276 = vld [vmem:[%s1208 + $0x218] sm:$0xff]
    %v1277 = vld [vmem:[%s1208 + $0x220] sm:$0xff]
    %v1278 = vld [vmem:[%s1208 + $0x228] sm:$0xff]
    %v1279 = vld [vmem:[%s1208 + $0x230] sm:$0xff]
    %v1280 = vld [vmem:[%s1208 + $0x238] sm:$0xff]
    %v1281 = vld [vmem:[%s1208 + $0x240] sm:$0xff]
    %v1282 = vld [vmem:[%s1208 + $0x248] sm:$0xff]
    %v1283 = vld [vmem:[%s1208 + $0x250] sm:$0xff]
    %v1284 = vld [vmem:[%s1208 + $0x258] sm:$0xff]
    %v1285 = vld [vmem:[%s1208 + $0x260] sm:$0xff]
    %v1286 = vld [vmem:[%s1208 + $0x268] sm:$0xff]
    %v1287 = vld [vmem:[%s1208 + $0x270] sm:$0xff]
    %v1288 = vld [vmem:[%s1208 + $0x278] sm:$0xff]
    %v1289 = vld [vmem:[%s1208 + $0x280] sm:$0xff]
    %v1290 = vld [vmem:[%s1208 + $0x288] sm:$0xff]
    %v1291 = vld [vmem:[%s1208 + $0x290] sm:$0xff]
    %v1292 = vld [vmem:[%s1208 + $0x298] sm:$0xff]
    %v1293 = vld [vmem:[%s1208 + $0x2a0] sm:$0xff]
    %v1294 = vld [vmem:[%s1208 + $0x2a8] sm:$0xff]
    %v1295 = vld [vmem:[%s1208 + $0x2b0] sm:$0xff]
    %v1296 = vld [vmem:[%s1208 + $0x2b8] sm:$0xff]
    %v1297 = vld [vmem:[%s1208 + $0x2c0] sm:$0xff]
    %v1298 = vld [vmem:[%s1208 + $0x2c8] sm:$0xff]
    %v1299 = vld [vmem:[%s1208 + $0x2d0] sm:$0xff]
    %v1300 = vld [vmem:[%s1208 + $0x2d8] sm:$0xff]
    %v1301 = vld [vmem:[%s1208 + $0x2e0] sm:$0xff]
    %v1302 = vld [vmem:[%s1208 + $0x2e8] sm:$0xff]
    %v1303 = vld [vmem:[%s1208 + $0x2f0] sm:$0xff]
    %v1304 = vld [vmem:[%s1208 + $0x2f8] sm:$0xff]
    %v1305 = vld [vmem:[%s1208 + $0x300] sm:$0xff]
    %v1306 = vld [vmem:[%s1208 + $0x308] sm:$0xff]
    %v1307 = vld [vmem:[%s1208 + $0x310] sm:$0xff]
    %v1308 = vld [vmem:[%s1208 + $0x318] sm:$0xff]
    %v1309 = vld [vmem:[%s1208 + $0x320] sm:$0xff]
    %v1310 = vld [vmem:[%s1208 + $0x328] sm:$0xff]
    %v1311 = vld [vmem:[%s1208 + $0x330] sm:$0xff]
    %v1312 = vld [vmem:[%s1208 + $0x338] sm:$0xff]
    %v1313 = vld [vmem:[%s1208 + $0x340] sm:$0xff]
    %v1314 = vld [vmem:[%s1208 + $0x348] sm:$0xff]
    %v1315 = vld [vmem:[%s1208 + $0x350] sm:$0xff]
    %v1316 = vld [vmem:[%s1208 + $0x358] sm:$0xff]
    %v1317 = vld [vmem:[%s1208 + $0x360] sm:$0xff]
    %v1318 = vld [vmem:[%s1208 + $0x368] sm:$0xff]
    %v1319 = vld [vmem:[%s1208 + $0x370] sm:$0xff]
    %v1320 = vld [vmem:[%s1208 + $0x378] sm:$0xff]
    %v1321 = vld [vmem:[%s1208 + $0x380] sm:$0xff]
    %v1322 = vld [vmem:[%s1208 + $0x388] sm:$0xff]
    %v1323 = vld [vmem:[%s1208 + $0x390] sm:$0xff]
    %v1324 = vld [vmem:[%s1208 + $0x398] sm:$0xff]
    %v1325 = vld [vmem:[%s1208 + $0x3a0] sm:$0xff]
    %v1326 = vld [vmem:[%s1208 + $0x3a8] sm:$0xff]
    %v1327 = vld [vmem:[%s1208 + $0x3b0] sm:$0xff]
    %v1328 = vld [vmem:[%s1208 + $0x3b8] sm:$0xff]
    %v1329 = vld [vmem:[%s1208 + $0x3c0] sm:$0xff]
    %v1330 = vld [vmem:[%s1208 + $0x3c8] sm:$0xff]
    %v1331 = vld [vmem:[%s1208 + $0x3d0] sm:$0xff]
    %v1332 = vld [vmem:[%s1208 + $0x3d8] sm:$0xff]
    %v1333 = vld [vmem:[%s1208 + $0x3e0] sm:$0xff]
    %v1334 = vld [vmem:[%s1208 + $0x3e8] sm:$0xff]
    %v1335 = vld [vmem:[%s1208 + $0x3f0] sm:$0xff]
    %v1336 = vld [vmem:[%s1208 + $0x3f8] sm:$0xff]
    %v1337 = vld [vmem:[%s1208 + $0x400] sm:$0xff]
    %v1338 = vld [vmem:[%s1208 + $0x408] sm:$0xff]
    %v1339 = vld [vmem:[%s1208 + $0x410] sm:$0xff]
    %v1340 = vld [vmem:[%s1208 + $0x418] sm:$0xff]
    %v1341 = vld [vmem:[%s1208 + $0x420] sm:$0xff]
    %v1342 = vld [vmem:[%s1208 + $0x428] sm:$0xff]
    %v1343 = vld [vmem:[%s1208 + $0x430] sm:$0xff]
    %v1344 = vld [vmem:[%s1208 + $0x438] sm:$0xff]
    %v1345 = vld [vmem:[%s1208 + $0x440] sm:$0xff]
    %v1346 = vld [vmem:[%s1208 + $0x448] sm:$0xff]
    %v1347 = vld [vmem:[%s1208 + $0x450] sm:$0xff]
    %v1348 = vld [vmem:[%s1208 + $0x458] sm:$0xff]
    %v1349 = vld [vmem:[%s1208 + $0x460] sm:$0xff]
    %v1350 = vld [vmem:[%s1208 + $0x468] sm:$0xff]
    %v1351 = vld [vmem:[%s1208 + $0x470] sm:$0xff]
    %v1352 = vld [vmem:[%s1208 + $0x478] sm:$0xff]
    %v1353 = vld [vmem:[%s1208 + $0x480] sm:$0xff]
    %v1354 = vld [vmem:[%s1208 + $0x488] sm:$0xff]
    %v1355 = vld [vmem:[%s1208 + $0x490] sm:$0xff]
    %v1356 = vld [vmem:[%s1208 + $0x498] sm:$0xff]
    %v1357 = vld [vmem:[%s1208 + $0x4a0] sm:$0xff]
    %v1358 = vld [vmem:[%s1208 + $0x4a8] sm:$0xff]
    %v1359 = vld [vmem:[%s1208 + $0x4b0] sm:$0xff]
    %v1360 = vld [vmem:[%s1208 + $0x4b8] sm:$0xff]
    %v1361 = vld [vmem:[%s1208 + $0x4c0] sm:$0xff]
    %v1362 = vld [vmem:[%s1208 + $0x4c8] sm:$0xff]
    %v1363 = vld [vmem:[%s1208 + $0x4d0] sm:$0xff]
    %v1364 = vld [vmem:[%s1208 + $0x4d8] sm:$0xff]
    %v1365 = vld [vmem:[%s1208 + $0x4e0] sm:$0xff]
    %v1366 = vld [vmem:[%s1208 + $0x4e8] sm:$0xff]
    %v1367 = vld [vmem:[%s1208 + $0x4f0] sm:$0xff]
    %v1368 = vld [vmem:[%s1208 + $0x4f8] sm:$0xff]
    %v1369 = vld [vmem:[%s1208 + $0x500] sm:$0xff]
    %v1370 = vld [vmem:[%s1208 + $0x508] sm:$0xff]
    %v1371 = vld [vmem:[%s1208 + $0x510] sm:$0xff]
    %v1372 = vld [vmem:[%s1208 + $0x518] sm:$0xff]
    %v1373 = vld [vmem:[%s1208 + $0x520] sm:$0xff]
    %v1374 = vld [vmem:[%s1208 + $0x528] sm:$0xff]
    %v1375 = vld [vmem:[%s1208 + $0x530] sm:$0xff]
    %v1376 = vld [vmem:[%s1208 + $0x538] sm:$0xff]
    %v1377 = vld [vmem:[%s1208 + $0x540] sm:$0xff]
    %v1378 = vld [vmem:[%s1208 + $0x548] sm:$0xff]
    %v1379 = vld [vmem:[%s1208 + $0x550] sm:$0xff]
    %v1380 = vld [vmem:[%s1208 + $0x558] sm:$0xff]
    %v1381 = vld [vmem:[%s1208 + $0x560] sm:$0xff]
    %v1382 = vld [vmem:[%s1208 + $0x568] sm:$0xff]
    %v1383 = vld [vmem:[%s1208 + $0x570] sm:$0xff]
    %v1384 = vld [vmem:[%s1208 + $0x578] sm:$0xff]
    %v1385 = vld [vmem:[%s1208 + $0x580] sm:$0xff]
    %v1386 = vld [vmem:[%s1208 + $0x588] sm:$0xff]
    %v1387 = vld [vmem:[%s1208 + $0x590] sm:$0xff]
    %v1388 = vld [vmem:[%s1208 + $0x598] sm:$0xff]
    %v1389 = vld [vmem:[%s1208 + $0x5a0] sm:$0xff]
    %v1390 = vld [vmem:[%s1208 + $0x5a8] sm:$0xff]
    %v1391 = vld [vmem:[%s1208 + $0x5b0] sm:$0xff]
    %v1392 = vld [vmem:[%s1208 + $0x5b8] sm:$0xff]
    %v1393 = vld [vmem:[%s1208 + $0x5c0] sm:$0xff]
    %v1394 = vld [vmem:[%s1208 + $0x5c8] sm:$0xff]
    %v1395 = vld [vmem:[%s1208 + $0x5d0] sm:$0xff]
    %v1396 = vld [vmem:[%s1208 + $0x5d8] sm:$0xff]
    %v1397 = vld [vmem:[%s1208 + $0x5e0] sm:$0xff]
    %v1398 = vld [vmem:[%s1208 + $0x5e8] sm:$0xff]
    %v1399 = vld [vmem:[%s1208 + $0x5f0] sm:$0xff]
    %v1400 = vld [vmem:[%s1208 + $0x5f8] sm:$0xff]
    %v1401 = vld [vmem:[%s1208 + $0x600] sm:$0xff]
    %v1402 = vld [vmem:[%s1208 + $0x608] sm:$0xff]
    %v1403 = vld [vmem:[%s1208 + $0x610] sm:$0xff]
    %v1404 = vld [vmem:[%s1208 + $0x618] sm:$0xff]
    %v1405 = vld [vmem:[%s1208 + $0x620] sm:$0xff]
    %v1406 = vld [vmem:[%s1208 + $0x628] sm:$0xff]
    %v1407 = vld [vmem:[%s1208 + $0x630] sm:$0xff]
    %v1408 = vld [vmem:[%s1208 + $0x638] sm:$0xff]
    %v1409 = vld [vmem:[%s1208 + $0x640] sm:$0xff]
    %v1410 = vld [vmem:[%s1208 + $0x648] sm:$0xff]
    %v1411 = vld [vmem:[%s1208 + $0x650] sm:$0xff]
    %v1412 = vld [vmem:[%s1208 + $0x658] sm:$0xff]
    %v1413 = vld [vmem:[%s1208 + $0x660] sm:$0xff]
    %v1414 = vld [vmem:[%s1208 + $0x668] sm:$0xff]
    %v1415 = vld [vmem:[%s1208 + $0x670] sm:$0xff]
    %v1416 = vld [vmem:[%s1208 + $0x678] sm:$0xff]
    %v1417 = vld [vmem:[%s1208 + $0x680] sm:$0xff]
    %v1418 = vld [vmem:[%s1208 + $0x688] sm:$0xff]
    %v1419 = vld [vmem:[%s1208 + $0x690] sm:$0xff]
    %v1420 = vld [vmem:[%s1208 + $0x698] sm:$0xff]
    %v1421 = vld [vmem:[%s1208 + $0x6a0] sm:$0xff]
    %v1422 = vld [vmem:[%s1208 + $0x6a8] sm:$0xff]
    %v1423 = vld [vmem:[%s1208 + $0x6b0] sm:$0xff]
    %v1424 = vld [vmem:[%s1208 + $0x6b8] sm:$0xff]
    %v1425 = vld [vmem:[%s1208 + $0x6c0] sm:$0xff]
    %v1426 = vld [vmem:[%s1208 + $0x6c8] sm:$0xff]
    %v1427 = vld [vmem:[%s1208 + $0x6d0] sm:$0xff]
    %v1428 = vld [vmem:[%s1208 + $0x6d8] sm:$0xff]
    %v1429 = vld [vmem:[%s1208 + $0x6e0] sm:$0xff]
    %v1430 = vld [vmem:[%s1208 + $0x6e8] sm:$0xff]
    %v1431 = vld [vmem:[%s1208 + $0x6f0] sm:$0xff]
    %v1432 = vld [vmem:[%s1208 + $0x6f8] sm:$0xff]
    %v1433 = vld [vmem:[%s1208 + $0x700] sm:$0xff]
    %v1434 = vld [vmem:[%s1208 + $0x708] sm:$0xff]
    %v1435 = vld [vmem:[%s1208 + $0x710] sm:$0xff]
    %v1436 = vld [vmem:[%s1208 + $0x718] sm:$0xff]
    %v1437 = vld [vmem:[%s1208 + $0x720] sm:$0xff]
    %v1438 = vld [vmem:[%s1208 + $0x728] sm:$0xff]
    %v1439 = vld [vmem:[%s1208 + $0x730] sm:$0xff]
    %v1440 = vld [vmem:[%s1208 + $0x738] sm:$0xff]
    %v1441 = vld [vmem:[%s1208 + $0x740] sm:$0xff]
    %v1442 = vld [vmem:[%s1208 + $0x748] sm:$0xff]
    %v1443 = vld [vmem:[%s1208 + $0x750] sm:$0xff]
    %v1444 = vld [vmem:[%s1208 + $0x758] sm:$0xff]
    %v1445 = vld [vmem:[%s1208 + $0x760] sm:$0xff]
    %v1446 = vld [vmem:[%s1208 + $0x768] sm:$0xff]
    %v1447 = vld [vmem:[%s1208 + $0x770] sm:$0xff]
    %v1448 = vld [vmem:[%s1208 + $0x778] sm:$0xff]
    %v1449 = vld [vmem:[%s1208 + $0x780] sm:$0xff]
    %v1450 = vld [vmem:[%s1208 + $0x788] sm:$0xff]
    %v1451 = vld [vmem:[%s1208 + $0x790] sm:$0xff]
    %v1452 = vld [vmem:[%s1208 + $0x798] sm:$0xff]
    %v1453 = vld [vmem:[%s1208 + $0x7a0] sm:$0xff]
    %v1454 = vld [vmem:[%s1208 + $0x7a8] sm:$0xff]
    %v1455 = vld [vmem:[%s1208 + $0x7b0] sm:$0xff]
    %v1456 = vld [vmem:[%s1208 + $0x7b8] sm:$0xff]
    %v1457 = vld [vmem:[%s1208 + $0x7c0] sm:$0xff]
    %v1458 = vld [vmem:[%s1208 + $0x7c8] sm:$0xff]
    %v1459 = vld [vmem:[%s1208 + $0x7d0] sm:$0xff]
    %v1460 = vld [vmem:[%s1208 + $0x7d8] sm:$0xff]
    %v1461 = vld [vmem:[%s1208 + $0x7e0] sm:$0xff]
    %v1462 = vld [vmem:[%s1208 + $0x7e8] sm:$0xff]
    %v1463 = vld [vmem:[%s1208 + $0x7f0] sm:$0xff]
    %v1464 = vld [vmem:[%s1208 + $0x7f8] sm:$0xff]
    %s1465 = scalar_lea.vmem [#allocation7], 8
    %v1466 = vld [vmem:[%s1465] sm:$0xf]
    %v1468 = vlaneseq
    %v1469 = vshrl.u32 %v1468, 7
    %v1470 = vsub.s32 0, %v1469
    %v1471 = vrot.slane %v1466, %v1470
    %v1472 = vlaneseq
    %v1473 = vshrl.u32 %v1472, 7
    %v1474 = vsub.s32 1, %v1473
    %v1475 = vrot.slane %v1466, %v1474
    %v1476 = vlaneseq
    %v1477 = vshrl.u32 %v1476, 7
    %v1478 = vsub.s32 2, %v1477
    %v1479 = vrot.slane %v1466, %v1478
    %v1480 = vlaneseq
    %v1481 = vshrl.u32 %v1480, 7
    %v1482 = vsub.s32 3, %v1481
    %v1483 = vrot.slane %v1466, %v1482
    %1488 = vmatprep.subr.mxu0 %v1270
    %1489 = vmatpush1.msra.mxu0 %v1269
    %1490 = vmatprep.subr.mxu0 %v1266
    %1491 = vmatpush1.msra.mxu0 %v1265
    %1492 = vmatprep.subr.mxu0 %v1262
    %1493 = vmatpush1.msra.mxu0 %v1261
    %1494 = vmatprep.subr.mxu0 %v1258
    %1495 = vmatpush1.msra.mxu0 %v1257
    %1496 = vmatprep.subr.mxu0 %v1254
    %1497 = vmatpush1.msra.mxu0 %v1253
    %1498 = vmatprep.subr.mxu0 %v1250
    %1499 = vmatpush1.msra.mxu0 %v1249
    %1500 = vmatprep.subr.mxu0 %v1246
    %1501 = vmatpush1.msra.mxu0 %v1245
    %1502 = vmatprep.subr.mxu0 %v1242
    %1503 = vmatpush1.msra.mxu0 %v1241
    %1504 = vmatprep.subr.mxu0 %v1238
    %1505 = vmatpush1.msra.mxu0 %v1237
    %1506 = vmatprep.subr.mxu0 %v1234
    %1507 = vmatpush1.msra.mxu0 %v1233
    %1508 = vmatprep.subr.mxu0 %v1230
    %1509 = vmatpush1.msra.mxu0 %v1229
    %1510 = vmatprep.subr.mxu0 %v1226
    %1511 = vmatpush1.msra.mxu0 %v1225
    %1512 = vmatprep.subr.mxu0 %v1222
    %1513 = vmatpush1.msra.mxu0 %v1221
    %1514 = vmatprep.subr.mxu0 %v1218
    %1515 = vmatpush1.msra.mxu0 %v1217
    %1516 = vmatprep.subr.mxu0 %v1214
    %1517 = vmatpush1.msra.mxu0 %v1213
    %1518 = vmatprep.subr.mxu0 %v1210
    %1519 = vmatpush1.msra.mxu0 %v1209
    %1520 = vmatprep.subr.mxu0 %v1334
    %1521 = vmatpush2.msra.mxu0 %v1333
    %1522 = vmatprep.subr.mxu0 %v1330
    %1523 = vmatpush2.msra.mxu0 %v1329
    %1524 = vmatprep.subr.mxu0 %v1326
    %1525 = vmatpush2.msra.mxu0 %v1325
    %1526 = vmatprep.subr.mxu0 %v1322
    %1527 = vmatpush2.msra.mxu0 %v1321
    %1528 = vmatprep.subr.mxu0 %v1318
    %1529 = vmatpush2.msra.mxu0 %v1317
    %1530 = vmatprep.subr.mxu0 %v1314
    %1531 = vmatpush2.msra.mxu0 %v1313
    %1532 = vmatprep.subr.mxu0 %v1310
    %1533 = vmatpush2.msra.mxu0 %v1309
    %1534 = vmatprep.subr.mxu0 %v1306
    %1535 = vmatpush2.msra.mxu0 %v1305
    %1536 = vmatprep.subr.mxu0 %v1302
    %1537 = vmatpush2.msra.mxu0 %v1301
    %1538 = vmatprep.subr.mxu0 %v1298
    %1539 = vmatpush2.msra.mxu0 %v1297
    %1540 = vmatprep.subr.mxu0 %v1294
    %1541 = vmatpush2.msra.mxu0 %v1293
    %1542 = vmatprep.subr.mxu0 %v1290
    %1543 = vmatpush2.msra.mxu0 %v1289
    %1544 = vmatprep.subr.mxu0 %v1286
    %1545 = vmatpush2.msra.mxu0 %v1285
    %1546 = vmatprep.subr.mxu0 %v1282
    %1547 = vmatpush2.msra.mxu0 %v1281
    %1548 = vmatprep.subr.mxu0 %v1278
    %1549 = vmatpush2.msra.mxu0 %v1277
    %1550 = vmatprep.subr.mxu0 %v1274
    %1551 = vmatpush2.msra.mxu0 %v1273
    %1552 = vmatprep.mubr.f32.mxu0 %v1205
    %1553 = vmatmul.mubr.f32.gmra.mxu0 %v1204
    %v1554 = vpop.f32.mrf.mxu0
    %v1555 = vadd.f32 %v1471, %v1554
    %v1556 = vpop.f32.mrf.mxu0
    %v1557 = vadd.f32 %v1475, %v1556
    %1558 = vdwg.mxu0
    %1559 = vmatprep.subr.mxu0 %v1398
    %1560 = vmatpush1.msra.mxu0 %v1397
    %1561 = vmatprep.subr.mxu0 %v1394
    %1562 = vmatpush1.msra.mxu0 %v1393
    %1563 = vmatprep.subr.mxu0 %v1390
    %1564 = vmatpush1.msra.mxu0 %v1389
    %1565 = vmatprep.subr.mxu0 %v1386
    %1566 = vmatpush1.msra.mxu0 %v1385
    %1567 = vmatprep.subr.mxu0 %v1382
    %1568 = vmatpush1.msra.mxu0 %v1381
    %1569 = vmatprep.subr.mxu0 %v1378
    %1570 = vmatpush1.msra.mxu0 %v1377
    %1571 = vmatprep.subr.mxu0 %v1374
    %1572 = vmatpush1.msra.mxu0 %v1373
    %1573 = vmatprep.subr.mxu0 %v1370
    %1574 = vmatpush1.msra.mxu0 %v1369
    %1575 = vmatprep.subr.mxu0 %v1366
    %1576 = vmatpush1.msra.mxu0 %v1365
    %1577 = vmatprep.subr.mxu0 %v1362
    %1578 = vmatpush1.msra.mxu0 %v1361
    %1579 = vmatprep.subr.mxu0 %v1358
    %1580 = vmatpush1.msra.mxu0 %v1357
    %1581 = vmatprep.subr.mxu0 %v1354
    %1582 = vmatpush1.msra.mxu0 %v1353
    %1583 = vmatprep.subr.mxu0 %v1350
    %1584 = vmatpush1.msra.mxu0 %v1349
    %1585 = vmatprep.subr.mxu0 %v1346
    %1586 = vmatpush1.msra.mxu0 %v1345
    %1587 = vmatprep.subr.mxu0 %v1342
    %1588 = vmatpush1.msra.mxu0 %v1341
    %1589 = vmatprep.subr.mxu0 %v1338
    %1590 = vmatpush1.msra.mxu0 %v1337
    %1591 = vmatprep.subr.mxu0 %v1462
    %1592 = vmatpush2.msra.mxu0 %v1461
    %1593 = vmatprep.subr.mxu0 %v1458
    %1594 = vmatpush2.msra.mxu0 %v1457
    %1595 = vmatprep.subr.mxu0 %v1454
    %1596 = vmatpush2.msra.mxu0 %v1453
    %1597 = vmatprep.subr.mxu0 %v1450
    %1598 = vmatpush2.msra.mxu0 %v1449
    %1599 = vmatprep.subr.mxu0 %v1446
    %1600 = vmatpush2.msra.mxu0 %v1445
    %1601 = vmatprep.subr.mxu0 %v1442
    %1602 = vmatpush2.msra.mxu0 %v1441
    %1603 = vmatprep.subr.mxu0 %v1438
    %1604 = vmatpush2.msra.mxu0 %v1437
    %1605 = vmatprep.subr.mxu0 %v1434
    %1606 = vmatpush2.msra.mxu0 %v1433
    %1607 = vmatprep.subr.mxu0 %v1430
    %1608 = vmatpush2.msra.mxu0 %v1429
    %1609 = vmatprep.subr.mxu0 %v1426
    %1610 = vmatpush2.msra.mxu0 %v1425
    %1611 = vmatprep.subr.mxu0 %v1422
    %1612 = vmatpush2.msra.mxu0 %v1421
    %1613 = vmatprep.subr.mxu0 %v1418
    %1614 = vmatpush2.msra.mxu0 %v1417
    %1615 = vmatprep.subr.mxu0 %v1414
    %1616 = vmatpush2.msra.mxu0 %v1413
    %1617 = vmatprep.subr.mxu0 %v1410
    %1618 = vmatpush2.msra.mxu0 %v1409
    %1619 = vmatprep.subr.mxu0 %v1406
    %1620 = vmatpush2.msra.mxu0 %v1405
    %1621 = vmatprep.subr.mxu0 %v1402
    %1622 = vmatpush2.msra.mxu0 %v1401
    %1623 = vmatprep.mubr.f32.mxu0 %v1207
    %1624 = vmatmul.mubr.f32.gmra.mxu0 %v1206
    %v1625 = vpop.f32.mrf.mxu0
    %v1626 = vadd.f32 %v1555, %v1625
    %v1627 = vpop.f32.mrf.mxu0
    %v1628 = vadd.f32 %v1557, %v1627
    %1629 = vdwg.mxu0
    %1630 = vmatprep.subr.mxu0 %v1272
    %1631 = vmatpush1.msra.mxu0 %v1271
    %1632 = vmatprep.subr.mxu0 %v1268
    %1633 = vmatpush1.msra.mxu0 %v1267
    %1634 = vmatprep.subr.mxu0 %v1264
    %1635 = vmatpush1.msra.mxu0 %v1263
    %1636 = vmatprep.subr.mxu0 %v1260
    %1637 = vmatpush1.msra.mxu0 %v1259
    %1638 = vmatprep.subr.mxu0 %v1256
    %1639 = vmatpush1.msra.mxu0 %v1255
    %1640 = vmatprep.subr.mxu0 %v1252
    %1641 = vmatpush1.msra.mxu0 %v1251
    %1642 = vmatprep.subr.mxu0 %v1248
    %1643 = vmatpush1.msra.mxu0 %v1247
    %1644 = vmatprep.subr.mxu0 %v1244
    %1645 = vmatpush1.msra.mxu0 %v1243
    %1646 = vmatprep.subr.mxu0 %v1240
    %1647 = vmatpush1.msra.mxu0 %v1239
    %1648 = vmatprep.subr.mxu0 %v1236
    %1649 = vmatpush1.msra.mxu0 %v1235
    %1650 = vmatprep.subr.mxu0 %v1232
    %1651 = vmatpush1.msra.mxu0 %v1231
    %1652 = vmatprep.subr.mxu0 %v1228
    %1653 = vmatpush1.msra.mxu0 %v1227
    %1654 = vmatprep.subr.mxu0 %v1224
    %1655 = vmatpush1.msra.mxu0 %v1223
    %1656 = vmatprep.subr.mxu0 %v1220
    %1657 = vmatpush1.msra.mxu0 %v1219
    %1658 = vmatprep.subr.mxu0 %v1216
    %1659 = vmatpush1.msra.mxu0 %v1215
    %1660 = vmatprep.subr.mxu0 %v1212
    %1661 = vmatpush1.msra.mxu0 %v1211
    %1662 = vmatprep.subr.mxu0 %v1336
    %1663 = vmatpush2.msra.mxu0 %v1335
    %1664 = vmatprep.subr.mxu0 %v1332
    %1665 = vmatpush2.msra.mxu0 %v1331
    %1666 = vmatprep.subr.mxu0 %v1328
    %1667 = vmatpush2.msra.mxu0 %v1327
    %1668 = vmatprep.subr.mxu0 %v1324
    %1669 = vmatpush2.msra.mxu0 %v1323
    %1670 = vmatprep.subr.mxu0 %v1320
    %1671 = vmatpush2.msra.mxu0 %v1319
    %1672 = vmatprep.subr.mxu0 %v1316
    %1673 = vmatpush2.msra.mxu0 %v1315
    %1674 = vmatprep.subr.mxu0 %v1312
    %1675 = vmatpush2.msra.mxu0 %v1311
    %1676 = vmatprep.subr.mxu0 %v1308
    %1677 = vmatpush2.msra.mxu0 %v1307
    %1678 = vmatprep.subr.mxu0 %v1304
    %1679 = vmatpush2.msra.mxu0 %v1303
    %1680 = vmatprep.subr.mxu0 %v1300
    %1681 = vmatpush2.msra.mxu0 %v1299
    %1682 = vmatprep.subr.mxu0 %v1296
    %1683 = vmatpush2.msra.mxu0 %v1295
    %1684 = vmatprep.subr.mxu0 %v1292
    %1685 = vmatpush2.msra.mxu0 %v1291
    %1686 = vmatprep.subr.mxu0 %v1288
    %1687 = vmatpush2.msra.mxu0 %v1287
    %1688 = vmatprep.subr.mxu0 %v1284
    %1689 = vmatpush2.msra.mxu0 %v1283
    %1690 = vmatprep.subr.mxu0 %v1280
    %1691 = vmatpush2.msra.mxu0 %v1279
    %1692 = vmatprep.subr.mxu0 %v1276
    %1693 = vmatpush2.msra.mxu0 %v1275
    %1694 = vmatprep.mubr.f32.mxu0 %v1205
    %1695 = vmatmul.mubr.f32.gmra.mxu0 %v1204
    %v1696 = vpop.f32.mrf.mxu0
    %v1697 = vadd.f32 %v1479, %v1696
    %v1698 = vpop.f32.mrf.mxu0
    %v1699 = vadd.f32 %v1483, %v1698
    %1700 = vdwg.mxu0
    %1701 = vmatprep.subr.mxu0 %v1400
    %1702 = vmatpush1.msra.mxu0 %v1399
    %1703 = vmatprep.subr.mxu0 %v1396
    %1704 = vmatpush1.msra.mxu0 %v1395
    %1705 = vmatprep.subr.mxu0 %v1392
    %1706 = vmatpush1.msra.mxu0 %v1391
    %1707 = vmatprep.subr.mxu0 %v1388
    %1708 = vmatpush1.msra.mxu0 %v1387
    %1709 = vmatprep.subr.mxu0 %v1384
    %1710 = vmatpush1.msra.mxu0 %v1383
    %1711 = vmatprep.subr.mxu0 %v1380
    %1712 = vmatpush1.msra.mxu0 %v1379
    %1713 = vmatprep.subr.mxu0 %v1376
    %1714 = vmatpush1.msra.mxu0 %v1375
    %1715 = vmatprep.subr.mxu0 %v1372
    %1716 = vmatpush1.msra.mxu0 %v1371
    %1717 = vmatprep.subr.mxu0 %v1368
    %1718 = vmatpush1.msra.mxu0 %v1367
    %1719 = vmatprep.subr.mxu0 %v1364
    %1720 = vmatpush1.msra.mxu0 %v1363
    %1721 = vmatprep.subr.mxu0 %v1360
    %1722 = vmatpush1.msra.mxu0 %v1359
    %1723 = vmatprep.subr.mxu0 %v1356
    %1724 = vmatpush1.msra.mxu0 %v1355
    %1725 = vmatprep.subr.mxu0 %v1352
    %1726 = vmatpush1.msra.mxu0 %v1351
    %1727 = vmatprep.subr.mxu0 %v1348
    %1728 = vmatpush1.msra.mxu0 %v1347
    %1729 = vmatprep.subr.mxu0 %v1344
    %1730 = vmatpush1.msra.mxu0 %v1343
    %1731 = vmatprep.subr.mxu0 %v1340
    %1732 = vmatpush1.msra.mxu0 %v1339
    %1733 = vmatprep.subr.mxu0 %v1464
    %1734 = vmatpush2.msra.mxu0 %v1463
    %1735 = vmatprep.subr.mxu0 %v1460
    %1736 = vmatpush2.msra.mxu0 %v1459
    %1737 = vmatprep.subr.mxu0 %v1456
    %1738 = vmatpush2.msra.mxu0 %v1455
    %1739 = vmatprep.subr.mxu0 %v1452
    %1740 = vmatpush2.msra.mxu0 %v1451
    %1741 = vmatprep.subr.mxu0 %v1448
    %1742 = vmatpush2.msra.mxu0 %v1447
    %1743 = vmatprep.subr.mxu0 %v1444
    %1744 = vmatpush2.msra.mxu0 %v1443
    %1745 = vmatprep.subr.mxu0 %v1440
    %1746 = vmatpush2.msra.mxu0 %v1439
    %1747 = vmatprep.subr.mxu0 %v1436
    %1748 = vmatpush2.msra.mxu0 %v1435
    %1749 = vmatprep.subr.mxu0 %v1432
    %1750 = vmatpush2.msra.mxu0 %v1431
    %1751 = vmatprep.subr.mxu0 %v1428
    %1752 = vmatpush2.msra.mxu0 %v1427
    %1753 = vmatprep.subr.mxu0 %v1424
    %1754 = vmatpush2.msra.mxu0 %v1423
    %1755 = vmatprep.subr.mxu0 %v1420
    %1756 = vmatpush2.msra.mxu0 %v1419
    %1757 = vmatprep.subr.mxu0 %v1416
    %1758 = vmatpush2.msra.mxu0 %v1415
    %1759 = vmatprep.subr.mxu0 %v1412
    %1760 = vmatpush2.msra.mxu0 %v1411
    %1761 = vmatprep.subr.mxu0 %v1408
    %1762 = vmatpush2.msra.mxu0 %v1407
    %1763 = vmatprep.subr.mxu0 %v1404
    %1764 = vmatpush2.msra.mxu0 %v1403
    %1765 = vmatprep.mubr.f32.mxu0 %v1207
    %1766 = vmatmul.mubr.f32.gmra.mxu0 %v1206
    %v1767 = vpop.f32.mrf.mxu0
    %v1768 = vadd.f32 %v1697, %v1767
    %v1769 = vpop.f32.mrf.mxu0
    %v1770 = vadd.f32 %v1699, %v1769
    %1771 = vdwg.mxu0
    %vm1772 = vcmp.ge.f32.partialorder %v1626, 0.0
    %vm1773 = vcmp.ge.f32.partialorder %v1628, 0.0
    %vm1774 = vcmp.ge.f32.partialorder %v1768, 0.0
    %vm1775 = vcmp.ge.f32.partialorder %v1770, 0.0
    %v1776 = vmul.f32 %v1626, 0.2
    %v1777 = vmul.f32 %v1628, 0.2
    %v1778 = vmul.f32 %v1768, 0.2
    %v1779 = vmul.f32 %v1770, 0.2
    %v1780 = vsel %vm1772, %v1626, %v1776
    %v1781 = vsel %vm1773, %v1628, %v1777
    %v1782 = vsel %vm1774, %v1768, %v1778
    %v1783 = vsel %vm1775, %v1770, %v1779
    %s1784 = scalar_lea.vmem [#allocation5], 6144
    %v1785 = vld [vmem:[%s1784] sm:$0xff]
    %v1786 = vld [vmem:[%s1784 + $0x8] sm:$0xff]
    %v1787 = vld [vmem:[%s1784 + $0x10] sm:$0xff]
    %v1788 = vld [vmem:[%s1784 + $0x18] sm:$0xff]
    %v1789 = vld [vmem:[%s1784 + $0x20] sm:$0xff]
    %v1790 = vld [vmem:[%s1784 + $0x28] sm:$0xff]
    %v1791 = vld [vmem:[%s1784 + $0x30] sm:$0xff]
    %v1792 = vld [vmem:[%s1784 + $0x38] sm:$0xff]
    %v1793 = vld [vmem:[%s1784 + $0x40] sm:$0xff]
    %v1794 = vld [vmem:[%s1784 + $0x48] sm:$0xff]
    %v1795 = vld [vmem:[%s1784 + $0x50] sm:$0xff]
    %v1796 = vld [vmem:[%s1784 + $0x58] sm:$0xff]
    %v1797 = vld [vmem:[%s1784 + $0x60] sm:$0xff]
    %v1798 = vld [vmem:[%s1784 + $0x68] sm:$0xff]
    %v1799 = vld [vmem:[%s1784 + $0x70] sm:$0xff]
    %v1800 = vld [vmem:[%s1784 + $0x78] sm:$0xff]
    %v1801 = vld [vmem:[%s1784 + $0x80] sm:$0xff]
    %v1802 = vld [vmem:[%s1784 + $0x88] sm:$0xff]
    %v1803 = vld [vmem:[%s1784 + $0x90] sm:$0xff]
    %v1804 = vld [vmem:[%s1784 + $0x98] sm:$0xff]
    %v1805 = vld [vmem:[%s1784 + $0xa0] sm:$0xff]
    %v1806 = vld [vmem:[%s1784 + $0xa8] sm:$0xff]
    %v1807 = vld [vmem:[%s1784 + $0xb0] sm:$0xff]
    %v1808 = vld [vmem:[%s1784 + $0xb8] sm:$0xff]
    %v1809 = vld [vmem:[%s1784 + $0xc0] sm:$0xff]
    %v1810 = vld [vmem:[%s1784 + $0xc8] sm:$0xff]
    %v1811 = vld [vmem:[%s1784 + $0xd0] sm:$0xff]
    %v1812 = vld [vmem:[%s1784 + $0xd8] sm:$0xff]
    %v1813 = vld [vmem:[%s1784 + $0xe0] sm:$0xff]
    %v1814 = vld [vmem:[%s1784 + $0xe8] sm:$0xff]
    %v1815 = vld [vmem:[%s1784 + $0xf0] sm:$0xff]
    %v1816 = vld [vmem:[%s1784 + $0xf8] sm:$0xff]
    %v1817 = vld [vmem:[%s1784 + $0x100] sm:$0xff]
    %v1818 = vld [vmem:[%s1784 + $0x108] sm:$0xff]
    %v1819 = vld [vmem:[%s1784 + $0x110] sm:$0xff]
    %v1820 = vld [vmem:[%s1784 + $0x118] sm:$0xff]
    %v1821 = vld [vmem:[%s1784 + $0x120] sm:$0xff]
    %v1822 = vld [vmem:[%s1784 + $0x128] sm:$0xff]
    %v1823 = vld [vmem:[%s1784 + $0x130] sm:$0xff]
    %v1824 = vld [vmem:[%s1784 + $0x138] sm:$0xff]
    %v1825 = vld [vmem:[%s1784 + $0x140] sm:$0xff]
    %v1826 = vld [vmem:[%s1784 + $0x148] sm:$0xff]
    %v1827 = vld [vmem:[%s1784 + $0x150] sm:$0xff]
    %v1828 = vld [vmem:[%s1784 + $0x158] sm:$0xff]
    %v1829 = vld [vmem:[%s1784 + $0x160] sm:$0xff]
    %v1830 = vld [vmem:[%s1784 + $0x168] sm:$0xff]
    %v1831 = vld [vmem:[%s1784 + $0x170] sm:$0xff]
    %v1832 = vld [vmem:[%s1784 + $0x178] sm:$0xff]
    %v1833 = vld [vmem:[%s1784 + $0x180] sm:$0xff]
    %v1834 = vld [vmem:[%s1784 + $0x188] sm:$0xff]
    %v1835 = vld [vmem:[%s1784 + $0x190] sm:$0xff]
    %v1836 = vld [vmem:[%s1784 + $0x198] sm:$0xff]
    %v1837 = vld [vmem:[%s1784 + $0x1a0] sm:$0xff]
    %v1838 = vld [vmem:[%s1784 + $0x1a8] sm:$0xff]
    %v1839 = vld [vmem:[%s1784 + $0x1b0] sm:$0xff]
    %v1840 = vld [vmem:[%s1784 + $0x1b8] sm:$0xff]
    %v1841 = vld [vmem:[%s1784 + $0x1c0] sm:$0xff]
    %v1842 = vld [vmem:[%s1784 + $0x1c8] sm:$0xff]
    %v1843 = vld [vmem:[%s1784 + $0x1d0] sm:$0xff]
    %v1844 = vld [vmem:[%s1784 + $0x1d8] sm:$0xff]
    %v1845 = vld [vmem:[%s1784 + $0x1e0] sm:$0xff]
    %v1846 = vld [vmem:[%s1784 + $0x1e8] sm:$0xff]
    %v1847 = vld [vmem:[%s1784 + $0x1f0] sm:$0xff]
    %v1848 = vld [vmem:[%s1784 + $0x1f8] sm:$0xff]
    %v1849 = vld [vmem:[%s1784 + $0x200] sm:$0xff]
    %v1850 = vld [vmem:[%s1784 + $0x208] sm:$0xff]
    %v1851 = vld [vmem:[%s1784 + $0x210] sm:$0xff]
    %v1852 = vld [vmem:[%s1784 + $0x218] sm:$0xff]
    %v1853 = vld [vmem:[%s1784 + $0x220] sm:$0xff]
    %v1854 = vld [vmem:[%s1784 + $0x228] sm:$0xff]
    %v1855 = vld [vmem:[%s1784 + $0x230] sm:$0xff]
    %v1856 = vld [vmem:[%s1784 + $0x238] sm:$0xff]
    %v1857 = vld [vmem:[%s1784 + $0x240] sm:$0xff]
    %v1858 = vld [vmem:[%s1784 + $0x248] sm:$0xff]
    %v1859 = vld [vmem:[%s1784 + $0x250] sm:$0xff]
    %v1860 = vld [vmem:[%s1784 + $0x258] sm:$0xff]
    %v1861 = vld [vmem:[%s1784 + $0x260] sm:$0xff]
    %v1862 = vld [vmem:[%s1784 + $0x268] sm:$0xff]
    %v1863 = vld [vmem:[%s1784 + $0x270] sm:$0xff]
    %v1864 = vld [vmem:[%s1784 + $0x278] sm:$0xff]
    %v1865 = vld [vmem:[%s1784 + $0x280] sm:$0xff]
    %v1866 = vld [vmem:[%s1784 + $0x288] sm:$0xff]
    %v1867 = vld [vmem:[%s1784 + $0x290] sm:$0xff]
    %v1868 = vld [vmem:[%s1784 + $0x298] sm:$0xff]
    %v1869 = vld [vmem:[%s1784 + $0x2a0] sm:$0xff]
    %v1870 = vld [vmem:[%s1784 + $0x2a8] sm:$0xff]
    %v1871 = vld [vmem:[%s1784 + $0x2b0] sm:$0xff]
    %v1872 = vld [vmem:[%s1784 + $0x2b8] sm:$0xff]
    %v1873 = vld [vmem:[%s1784 + $0x2c0] sm:$0xff]
    %v1874 = vld [vmem:[%s1784 + $0x2c8] sm:$0xff]
    %v1875 = vld [vmem:[%s1784 + $0x2d0] sm:$0xff]
    %v1876 = vld [vmem:[%s1784 + $0x2d8] sm:$0xff]
    %v1877 = vld [vmem:[%s1784 + $0x2e0] sm:$0xff]
    %v1878 = vld [vmem:[%s1784 + $0x2e8] sm:$0xff]
    %v1879 = vld [vmem:[%s1784 + $0x2f0] sm:$0xff]
    %v1880 = vld [vmem:[%s1784 + $0x2f8] sm:$0xff]
    %v1881 = vld [vmem:[%s1784 + $0x300] sm:$0xff]
    %v1882 = vld [vmem:[%s1784 + $0x308] sm:$0xff]
    %v1883 = vld [vmem:[%s1784 + $0x310] sm:$0xff]
    %v1884 = vld [vmem:[%s1784 + $0x318] sm:$0xff]
    %v1885 = vld [vmem:[%s1784 + $0x320] sm:$0xff]
    %v1886 = vld [vmem:[%s1784 + $0x328] sm:$0xff]
    %v1887 = vld [vmem:[%s1784 + $0x330] sm:$0xff]
    %v1888 = vld [vmem:[%s1784 + $0x338] sm:$0xff]
    %v1889 = vld [vmem:[%s1784 + $0x340] sm:$0xff]
    %v1890 = vld [vmem:[%s1784 + $0x348] sm:$0xff]
    %v1891 = vld [vmem:[%s1784 + $0x350] sm:$0xff]
    %v1892 = vld [vmem:[%s1784 + $0x358] sm:$0xff]
    %v1893 = vld [vmem:[%s1784 + $0x360] sm:$0xff]
    %v1894 = vld [vmem:[%s1784 + $0x368] sm:$0xff]
    %v1895 = vld [vmem:[%s1784 + $0x370] sm:$0xff]
    %v1896 = vld [vmem:[%s1784 + $0x378] sm:$0xff]
    %v1897 = vld [vmem:[%s1784 + $0x380] sm:$0xff]
    %v1898 = vld [vmem:[%s1784 + $0x388] sm:$0xff]
    %v1899 = vld [vmem:[%s1784 + $0x390] sm:$0xff]
    %v1900 = vld [vmem:[%s1784 + $0x398] sm:$0xff]
    %v1901 = vld [vmem:[%s1784 + $0x3a0] sm:$0xff]
    %v1902 = vld [vmem:[%s1784 + $0x3a8] sm:$0xff]
    %v1903 = vld [vmem:[%s1784 + $0x3b0] sm:$0xff]
    %v1904 = vld [vmem:[%s1784 + $0x3b8] sm:$0xff]
    %v1905 = vld [vmem:[%s1784 + $0x3c0] sm:$0xff]
    %v1906 = vld [vmem:[%s1784 + $0x3c8] sm:$0xff]
    %v1907 = vld [vmem:[%s1784 + $0x3d0] sm:$0xff]
    %v1908 = vld [vmem:[%s1784 + $0x3d8] sm:$0xff]
    %v1909 = vld [vmem:[%s1784 + $0x3e0] sm:$0xff]
    %v1910 = vld [vmem:[%s1784 + $0x3e8] sm:$0xff]
    %v1911 = vld [vmem:[%s1784 + $0x3f0] sm:$0xff]
    %v1912 = vld [vmem:[%s1784 + $0x3f8] sm:$0xff]
    %v1913 = vld [vmem:[%s1784 + $0x400] sm:$0xff]
    %v1914 = vld [vmem:[%s1784 + $0x408] sm:$0xff]
    %v1915 = vld [vmem:[%s1784 + $0x410] sm:$0xff]
    %v1916 = vld [vmem:[%s1784 + $0x418] sm:$0xff]
    %v1917 = vld [vmem:[%s1784 + $0x420] sm:$0xff]
    %v1918 = vld [vmem:[%s1784 + $0x428] sm:$0xff]
    %v1919 = vld [vmem:[%s1784 + $0x430] sm:$0xff]
    %v1920 = vld [vmem:[%s1784 + $0x438] sm:$0xff]
    %v1921 = vld [vmem:[%s1784 + $0x440] sm:$0xff]
    %v1922 = vld [vmem:[%s1784 + $0x448] sm:$0xff]
    %v1923 = vld [vmem:[%s1784 + $0x450] sm:$0xff]
    %v1924 = vld [vmem:[%s1784 + $0x458] sm:$0xff]
    %v1925 = vld [vmem:[%s1784 + $0x460] sm:$0xff]
    %v1926 = vld [vmem:[%s1784 + $0x468] sm:$0xff]
    %v1927 = vld [vmem:[%s1784 + $0x470] sm:$0xff]
    %v1928 = vld [vmem:[%s1784 + $0x478] sm:$0xff]
    %v1929 = vld [vmem:[%s1784 + $0x480] sm:$0xff]
    %v1930 = vld [vmem:[%s1784 + $0x488] sm:$0xff]
    %v1931 = vld [vmem:[%s1784 + $0x490] sm:$0xff]
    %v1932 = vld [vmem:[%s1784 + $0x498] sm:$0xff]
    %v1933 = vld [vmem:[%s1784 + $0x4a0] sm:$0xff]
    %v1934 = vld [vmem:[%s1784 + $0x4a8] sm:$0xff]
    %v1935 = vld [vmem:[%s1784 + $0x4b0] sm:$0xff]
    %v1936 = vld [vmem:[%s1784 + $0x4b8] sm:$0xff]
    %v1937 = vld [vmem:[%s1784 + $0x4c0] sm:$0xff]
    %v1938 = vld [vmem:[%s1784 + $0x4c8] sm:$0xff]
    %v1939 = vld [vmem:[%s1784 + $0x4d0] sm:$0xff]
    %v1940 = vld [vmem:[%s1784 + $0x4d8] sm:$0xff]
    %v1941 = vld [vmem:[%s1784 + $0x4e0] sm:$0xff]
    %v1942 = vld [vmem:[%s1784 + $0x4e8] sm:$0xff]
    %v1943 = vld [vmem:[%s1784 + $0x4f0] sm:$0xff]
    %v1944 = vld [vmem:[%s1784 + $0x4f8] sm:$0xff]
    %v1945 = vld [vmem:[%s1784 + $0x500] sm:$0xff]
    %v1946 = vld [vmem:[%s1784 + $0x508] sm:$0xff]
    %v1947 = vld [vmem:[%s1784 + $0x510] sm:$0xff]
    %v1948 = vld [vmem:[%s1784 + $0x518] sm:$0xff]
    %v1949 = vld [vmem:[%s1784 + $0x520] sm:$0xff]
    %v1950 = vld [vmem:[%s1784 + $0x528] sm:$0xff]
    %v1951 = vld [vmem:[%s1784 + $0x530] sm:$0xff]
    %v1952 = vld [vmem:[%s1784 + $0x538] sm:$0xff]
    %v1953 = vld [vmem:[%s1784 + $0x540] sm:$0xff]
    %v1954 = vld [vmem:[%s1784 + $0x548] sm:$0xff]
    %v1955 = vld [vmem:[%s1784 + $0x550] sm:$0xff]
    %v1956 = vld [vmem:[%s1784 + $0x558] sm:$0xff]
    %v1957 = vld [vmem:[%s1784 + $0x560] sm:$0xff]
    %v1958 = vld [vmem:[%s1784 + $0x568] sm:$0xff]
    %v1959 = vld [vmem:[%s1784 + $0x570] sm:$0xff]
    %v1960 = vld [vmem:[%s1784 + $0x578] sm:$0xff]
    %v1961 = vld [vmem:[%s1784 + $0x580] sm:$0xff]
    %v1962 = vld [vmem:[%s1784 + $0x588] sm:$0xff]
    %v1963 = vld [vmem:[%s1784 + $0x590] sm:$0xff]
    %v1964 = vld [vmem:[%s1784 + $0x598] sm:$0xff]
    %v1965 = vld [vmem:[%s1784 + $0x5a0] sm:$0xff]
    %v1966 = vld [vmem:[%s1784 + $0x5a8] sm:$0xff]
    %v1967 = vld [vmem:[%s1784 + $0x5b0] sm:$0xff]
    %v1968 = vld [vmem:[%s1784 + $0x5b8] sm:$0xff]
    %v1969 = vld [vmem:[%s1784 + $0x5c0] sm:$0xff]
    %v1970 = vld [vmem:[%s1784 + $0x5c8] sm:$0xff]
    %v1971 = vld [vmem:[%s1784 + $0x5d0] sm:$0xff]
    %v1972 = vld [vmem:[%s1784 + $0x5d8] sm:$0xff]
    %v1973 = vld [vmem:[%s1784 + $0x5e0] sm:$0xff]
    %v1974 = vld [vmem:[%s1784 + $0x5e8] sm:$0xff]
    %v1975 = vld [vmem:[%s1784 + $0x5f0] sm:$0xff]
    %v1976 = vld [vmem:[%s1784 + $0x5f8] sm:$0xff]
    %v1977 = vld [vmem:[%s1784 + $0x600] sm:$0xff]
    %v1978 = vld [vmem:[%s1784 + $0x608] sm:$0xff]
    %v1979 = vld [vmem:[%s1784 + $0x610] sm:$0xff]
    %v1980 = vld [vmem:[%s1784 + $0x618] sm:$0xff]
    %v1981 = vld [vmem:[%s1784 + $0x620] sm:$0xff]
    %v1982 = vld [vmem:[%s1784 + $0x628] sm:$0xff]
    %v1983 = vld [vmem:[%s1784 + $0x630] sm:$0xff]
    %v1984 = vld [vmem:[%s1784 + $0x638] sm:$0xff]
    %v1985 = vld [vmem:[%s1784 + $0x640] sm:$0xff]
    %v1986 = vld [vmem:[%s1784 + $0x648] sm:$0xff]
    %v1987 = vld [vmem:[%s1784 + $0x650] sm:$0xff]
    %v1988 = vld [vmem:[%s1784 + $0x658] sm:$0xff]
    %v1989 = vld [vmem:[%s1784 + $0x660] sm:$0xff]
    %v1990 = vld [vmem:[%s1784 + $0x668] sm:$0xff]
    %v1991 = vld [vmem:[%s1784 + $0x670] sm:$0xff]
    %v1992 = vld [vmem:[%s1784 + $0x678] sm:$0xff]
    %v1993 = vld [vmem:[%s1784 + $0x680] sm:$0xff]
    %v1994 = vld [vmem:[%s1784 + $0x688] sm:$0xff]
    %v1995 = vld [vmem:[%s1784 + $0x690] sm:$0xff]
    %v1996 = vld [vmem:[%s1784 + $0x698] sm:$0xff]
    %v1997 = vld [vmem:[%s1784 + $0x6a0] sm:$0xff]
    %v1998 = vld [vmem:[%s1784 + $0x6a8] sm:$0xff]
    %v1999 = vld [vmem:[%s1784 + $0x6b0] sm:$0xff]
    %v2000 = vld [vmem:[%s1784 + $0x6b8] sm:$0xff]
    %v2001 = vld [vmem:[%s1784 + $0x6c0] sm:$0xff]
    %v2002 = vld [vmem:[%s1784 + $0x6c8] sm:$0xff]
    %v2003 = vld [vmem:[%s1784 + $0x6d0] sm:$0xff]
    %v2004 = vld [vmem:[%s1784 + $0x6d8] sm:$0xff]
    %v2005 = vld [vmem:[%s1784 + $0x6e0] sm:$0xff]
    %v2006 = vld [vmem:[%s1784 + $0x6e8] sm:$0xff]
    %v2007 = vld [vmem:[%s1784 + $0x6f0] sm:$0xff]
    %v2008 = vld [vmem:[%s1784 + $0x6f8] sm:$0xff]
    %v2009 = vld [vmem:[%s1784 + $0x700] sm:$0xff]
    %v2010 = vld [vmem:[%s1784 + $0x708] sm:$0xff]
    %v2011 = vld [vmem:[%s1784 + $0x710] sm:$0xff]
    %v2012 = vld [vmem:[%s1784 + $0x718] sm:$0xff]
    %v2013 = vld [vmem:[%s1784 + $0x720] sm:$0xff]
    %v2014 = vld [vmem:[%s1784 + $0x728] sm:$0xff]
    %v2015 = vld [vmem:[%s1784 + $0x730] sm:$0xff]
    %v2016 = vld [vmem:[%s1784 + $0x738] sm:$0xff]
    %v2017 = vld [vmem:[%s1784 + $0x740] sm:$0xff]
    %v2018 = vld [vmem:[%s1784 + $0x748] sm:$0xff]
    %v2019 = vld [vmem:[%s1784 + $0x750] sm:$0xff]
    %v2020 = vld [vmem:[%s1784 + $0x758] sm:$0xff]
    %v2021 = vld [vmem:[%s1784 + $0x760] sm:$0xff]
    %v2022 = vld [vmem:[%s1784 + $0x768] sm:$0xff]
    %v2023 = vld [vmem:[%s1784 + $0x770] sm:$0xff]
    %v2024 = vld [vmem:[%s1784 + $0x778] sm:$0xff]
    %v2025 = vld [vmem:[%s1784 + $0x780] sm:$0xff]
    %v2026 = vld [vmem:[%s1784 + $0x788] sm:$0xff]
    %v2027 = vld [vmem:[%s1784 + $0x790] sm:$0xff]
    %v2028 = vld [vmem:[%s1784 + $0x798] sm:$0xff]
    %v2029 = vld [vmem:[%s1784 + $0x7a0] sm:$0xff]
    %v2030 = vld [vmem:[%s1784 + $0x7a8] sm:$0xff]
    %v2031 = vld [vmem:[%s1784 + $0x7b0] sm:$0xff]
    %v2032 = vld [vmem:[%s1784 + $0x7b8] sm:$0xff]
    %v2033 = vld [vmem:[%s1784 + $0x7c0] sm:$0xff]
    %v2034 = vld [vmem:[%s1784 + $0x7c8] sm:$0xff]
    %v2035 = vld [vmem:[%s1784 + $0x7d0] sm:$0xff]
    %v2036 = vld [vmem:[%s1784 + $0x7d8] sm:$0xff]
    %v2037 = vld [vmem:[%s1784 + $0x7e0] sm:$0xff]
    %v2038 = vld [vmem:[%s1784 + $0x7e8] sm:$0xff]
    %v2039 = vld [vmem:[%s1784 + $0x7f0] sm:$0xff]
    %v2040 = vld [vmem:[%s1784 + $0x7f8] sm:$0xff]
    %s2041 = scalar_lea.vmem [#allocation7], 12
    %v2042 = vld [vmem:[%s2041] sm:$0xf]
    %v2044 = vlaneseq
    %v2045 = vshrl.u32 %v2044, 7
    %v2046 = vsub.s32 0, %v2045
    %v2047 = vrot.slane %v2042, %v2046
    %v2048 = vlaneseq
    %v2049 = vshrl.u32 %v2048, 7
    %v2050 = vsub.s32 1, %v2049
    %v2051 = vrot.slane %v2042, %v2050
    %v2052 = vlaneseq
    %v2053 = vshrl.u32 %v2052, 7
    %v2054 = vsub.s32 2, %v2053
    %v2055 = vrot.slane %v2042, %v2054
    %v2056 = vlaneseq
    %v2057 = vshrl.u32 %v2056, 7
    %v2058 = vsub.s32 3, %v2057
    %v2059 = vrot.slane %v2042, %v2058
    %2064 = vmatprep.subr.mxu0 %v1846
    %2065 = vmatpush1.msra.mxu0 %v1845
    %2066 = vmatprep.subr.mxu0 %v1842
    %2067 = vmatpush1.msra.mxu0 %v1841
    %2068 = vmatprep.subr.mxu0 %v1838
    %2069 = vmatpush1.msra.mxu0 %v1837
    %2070 = vmatprep.subr.mxu0 %v1834
    %2071 = vmatpush1.msra.mxu0 %v1833
    %2072 = vmatprep.subr.mxu0 %v1830
    %2073 = vmatpush1.msra.mxu0 %v1829
    %2074 = vmatprep.subr.mxu0 %v1826
    %2075 = vmatpush1.msra.mxu0 %v1825
    %2076 = vmatprep.subr.mxu0 %v1822
    %2077 = vmatpush1.msra.mxu0 %v1821
    %2078 = vmatprep.subr.mxu0 %v1818
    %2079 = vmatpush1.msra.mxu0 %v1817
    %2080 = vmatprep.subr.mxu0 %v1814
    %2081 = vmatpush1.msra.mxu0 %v1813
    %2082 = vmatprep.subr.mxu0 %v1810
    %2083 = vmatpush1.msra.mxu0 %v1809
    %2084 = vmatprep.subr.mxu0 %v1806
    %2085 = vmatpush1.msra.mxu0 %v1805
    %2086 = vmatprep.subr.mxu0 %v1802
    %2087 = vmatpush1.msra.mxu0 %v1801
    %2088 = vmatprep.subr.mxu0 %v1798
    %2089 = vmatpush1.msra.mxu0 %v1797
    %2090 = vmatprep.subr.mxu0 %v1794
    %2091 = vmatpush1.msra.mxu0 %v1793
    %2092 = vmatprep.subr.mxu0 %v1790
    %2093 = vmatpush1.msra.mxu0 %v1789
    %2094 = vmatprep.subr.mxu0 %v1786
    %2095 = vmatpush1.msra.mxu0 %v1785
    %2096 = vmatprep.subr.mxu0 %v1910
    %2097 = vmatpush2.msra.mxu0 %v1909
    %2098 = vmatprep.subr.mxu0 %v1906
    %2099 = vmatpush2.msra.mxu0 %v1905
    %2100 = vmatprep.subr.mxu0 %v1902
    %2101 = vmatpush2.msra.mxu0 %v1901
    %2102 = vmatprep.subr.mxu0 %v1898
    %2103 = vmatpush2.msra.mxu0 %v1897
    %2104 = vmatprep.subr.mxu0 %v1894
    %2105 = vmatpush2.msra.mxu0 %v1893
    %2106 = vmatprep.subr.mxu0 %v1890
    %2107 = vmatpush2.msra.mxu0 %v1889
    %2108 = vmatprep.subr.mxu0 %v1886
    %2109 = vmatpush2.msra.mxu0 %v1885
    %2110 = vmatprep.subr.mxu0 %v1882
    %2111 = vmatpush2.msra.mxu0 %v1881
    %2112 = vmatprep.subr.mxu0 %v1878
    %2113 = vmatpush2.msra.mxu0 %v1877
    %2114 = vmatprep.subr.mxu0 %v1874
    %2115 = vmatpush2.msra.mxu0 %v1873
    %2116 = vmatprep.subr.mxu0 %v1870
    %2117 = vmatpush2.msra.mxu0 %v1869
    %2118 = vmatprep.subr.mxu0 %v1866
    %2119 = vmatpush2.msra.mxu0 %v1865
    %2120 = vmatprep.subr.mxu0 %v1862
    %2121 = vmatpush2.msra.mxu0 %v1861
    %2122 = vmatprep.subr.mxu0 %v1858
    %2123 = vmatpush2.msra.mxu0 %v1857
    %2124 = vmatprep.subr.mxu0 %v1854
    %2125 = vmatpush2.msra.mxu0 %v1853
    %2126 = vmatprep.subr.mxu0 %v1850
    %2127 = vmatpush2.msra.mxu0 %v1849
    %2128 = vmatprep.mubr.f32.mxu0 %v1781
    %2129 = vmatmul.mubr.f32.gmra.mxu0 %v1780
    %v2130 = vpop.f32.mrf.mxu0
    %v2131 = vadd.f32 %v2047, %v2130
    %v2132 = vpop.f32.mrf.mxu0
    %v2133 = vadd.f32 %v2051, %v2132
    %2134 = vdwg.mxu0
    %2135 = vmatprep.subr.mxu0 %v1974
    %2136 = vmatpush1.msra.mxu0 %v1973
    %2137 = vmatprep.subr.mxu0 %v1970
    %2138 = vmatpush1.msra.mxu0 %v1969
    %2139 = vmatprep.subr.mxu0 %v1966
    %2140 = vmatpush1.msra.mxu0 %v1965
    %2141 = vmatprep.subr.mxu0 %v1962
    %2142 = vmatpush1.msra.mxu0 %v1961
    %2143 = vmatprep.subr.mxu0 %v1958
    %2144 = vmatpush1.msra.mxu0 %v1957
    %2145 = vmatprep.subr.mxu0 %v1954
    %2146 = vmatpush1.msra.mxu0 %v1953
    %2147 = vmatprep.subr.mxu0 %v1950
    %2148 = vmatpush1.msra.mxu0 %v1949
    %2149 = vmatprep.subr.mxu0 %v1946
    %2150 = vmatpush1.msra.mxu0 %v1945
    %2151 = vmatprep.subr.mxu0 %v1942
    %2152 = vmatpush1.msra.mxu0 %v1941
    %2153 = vmatprep.subr.mxu0 %v1938
    %2154 = vmatpush1.msra.mxu0 %v1937
    %2155 = vmatprep.subr.mxu0 %v1934
    %2156 = vmatpush1.msra.mxu0 %v1933
    %2157 = vmatprep.subr.mxu0 %v1930
    %2158 = vmatpush1.msra.mxu0 %v1929
    %2159 = vmatprep.subr.mxu0 %v1926
    %2160 = vmatpush1.msra.mxu0 %v1925
    %2161 = vmatprep.subr.mxu0 %v1922
    %2162 = vmatpush1.msra.mxu0 %v1921
    %2163 = vmatprep.subr.mxu0 %v1918
    %2164 = vmatpush1.msra.mxu0 %v1917
    %2165 = vmatprep.subr.mxu0 %v1914
    %2166 = vmatpush1.msra.mxu0 %v1913
    %2167 = vmatprep.subr.mxu0 %v2038
    %2168 = vmatpush2.msra.mxu0 %v2037
    %2169 = vmatprep.subr.mxu0 %v2034
    %2170 = vmatpush2.msra.mxu0 %v2033
    %2171 = vmatprep.subr.mxu0 %v2030
    %2172 = vmatpush2.msra.mxu0 %v2029
    %2173 = vmatprep.subr.mxu0 %v2026
    %2174 = vmatpush2.msra.mxu0 %v2025
    %2175 = vmatprep.subr.mxu0 %v2022
    %2176 = vmatpush2.msra.mxu0 %v2021
    %2177 = vmatprep.subr.mxu0 %v2018
    %2178 = vmatpush2.msra.mxu0 %v2017
    %2179 = vmatprep.subr.mxu0 %v2014
    %2180 = vmatpush2.msra.mxu0 %v2013
    %2181 = vmatprep.subr.mxu0 %v2010
    %2182 = vmatpush2.msra.mxu0 %v2009
    %2183 = vmatprep.subr.mxu0 %v2006
    %2184 = vmatpush2.msra.mxu0 %v2005
    %2185 = vmatprep.subr.mxu0 %v2002
    %2186 = vmatpush2.msra.mxu0 %v2001
    %2187 = vmatprep.subr.mxu0 %v1998
    %2188 = vmatpush2.msra.mxu0 %v1997
    %2189 = vmatprep.subr.mxu0 %v1994
    %2190 = vmatpush2.msra.mxu0 %v1993
    %2191 = vmatprep.subr.mxu0 %v1990
    %2192 = vmatpush2.msra.mxu0 %v1989
    %2193 = vmatprep.subr.mxu0 %v1986
    %2194 = vmatpush2.msra.mxu0 %v1985
    %2195 = vmatprep.subr.mxu0 %v1982
    %2196 = vmatpush2.msra.mxu0 %v1981
    %2197 = vmatprep.subr.mxu0 %v1978
    %2198 = vmatpush2.msra.mxu0 %v1977
    %2199 = vmatprep.mubr.f32.mxu0 %v1783
    %2200 = vmatmul.mubr.f32.gmra.mxu0 %v1782
    %v2201 = vpop.f32.mrf.mxu0
    %v2202 = vadd.f32 %v2131, %v2201
    %v2203 = vpop.f32.mrf.mxu0
    %v2204 = vadd.f32 %v2133, %v2203
    %2205 = vdwg.mxu0
    %2206 = vmatprep.subr.mxu0 %v1848
    %2207 = vmatpush1.msra.mxu0 %v1847
    %2208 = vmatprep.subr.mxu0 %v1844
    %2209 = vmatpush1.msra.mxu0 %v1843
    %2210 = vmatprep.subr.mxu0 %v1840
    %2211 = vmatpush1.msra.mxu0 %v1839
    %2212 = vmatprep.subr.mxu0 %v1836
    %2213 = vmatpush1.msra.mxu0 %v1835
    %2214 = vmatprep.subr.mxu0 %v1832
    %2215 = vmatpush1.msra.mxu0 %v1831
    %2216 = vmatprep.subr.mxu0 %v1828
    %2217 = vmatpush1.msra.mxu0 %v1827
    %2218 = vmatprep.subr.mxu0 %v1824
    %2219 = vmatpush1.msra.mxu0 %v1823
    %2220 = vmatprep.subr.mxu0 %v1820
    %2221 = vmatpush1.msra.mxu0 %v1819
    %2222 = vmatprep.subr.mxu0 %v1816
    %2223 = vmatpush1.msra.mxu0 %v1815
    %2224 = vmatprep.subr.mxu0 %v1812
    %2225 = vmatpush1.msra.mxu0 %v1811
    %2226 = vmatprep.subr.mxu0 %v1808
    %2227 = vmatpush1.msra.mxu0 %v1807
    %2228 = vmatprep.subr.mxu0 %v1804
    %2229 = vmatpush1.msra.mxu0 %v1803
    %2230 = vmatprep.subr.mxu0 %v1800
    %2231 = vmatpush1.msra.mxu0 %v1799
    %2232 = vmatprep.subr.mxu0 %v1796
    %2233 = vmatpush1.msra.mxu0 %v1795
    %2234 = vmatprep.subr.mxu0 %v1792
    %2235 = vmatpush1.msra.mxu0 %v1791
    %2236 = vmatprep.subr.mxu0 %v1788
    %2237 = vmatpush1.msra.mxu0 %v1787
    %2238 = vmatprep.subr.mxu0 %v1912
    %2239 = vmatpush2.msra.mxu0 %v1911
    %2240 = vmatprep.subr.mxu0 %v1908
    %2241 = vmatpush2.msra.mxu0 %v1907
    %2242 = vmatprep.subr.mxu0 %v1904
    %2243 = vmatpush2.msra.mxu0 %v1903
    %2244 = vmatprep.subr.mxu0 %v1900
    %2245 = vmatpush2.msra.mxu0 %v1899
    %2246 = vmatprep.subr.mxu0 %v1896
    %2247 = vmatpush2.msra.mxu0 %v1895
    %2248 = vmatprep.subr.mxu0 %v1892
    %2249 = vmatpush2.msra.mxu0 %v1891
    %2250 = vmatprep.subr.mxu0 %v1888
    %2251 = vmatpush2.msra.mxu0 %v1887
    %2252 = vmatprep.subr.mxu0 %v1884
    %2253 = vmatpush2.msra.mxu0 %v1883
    %2254 = vmatprep.subr.mxu0 %v1880
    %2255 = vmatpush2.msra.mxu0 %v1879
    %2256 = vmatprep.subr.mxu0 %v1876
    %2257 = vmatpush2.msra.mxu0 %v1875
    %2258 = vmatprep.subr.mxu0 %v1872
    %2259 = vmatpush2.msra.mxu0 %v1871
    %2260 = vmatprep.subr.mxu0 %v1868
    %2261 = vmatpush2.msra.mxu0 %v1867
    %2262 = vmatprep.subr.mxu0 %v1864
    %2263 = vmatpush2.msra.mxu0 %v1863
    %2264 = vmatprep.subr.mxu0 %v1860
    %2265 = vmatpush2.msra.mxu0 %v1859
    %2266 = vmatprep.subr.mxu0 %v1856
    %2267 = vmatpush2.msra.mxu0 %v1855
    %2268 = vmatprep.subr.mxu0 %v1852
    %2269 = vmatpush2.msra.mxu0 %v1851
    %2270 = vmatprep.mubr.f32.mxu0 %v1781
    %2271 = vmatmul.mubr.f32.gmra.mxu0 %v1780
    %v2272 = vpop.f32.mrf.mxu0
    %v2273 = vadd.f32 %v2055, %v2272
    %v2274 = vpop.f32.mrf.mxu0
    %v2275 = vadd.f32 %v2059, %v2274
    %2276 = vdwg.mxu0
    %2277 = vmatprep.subr.mxu0 %v1976
    %2278 = vmatpush1.msra.mxu0 %v1975
    %2279 = vmatprep.subr.mxu0 %v1972
    %2280 = vmatpush1.msra.mxu0 %v1971
    %2281 = vmatprep.subr.mxu0 %v1968
    %2282 = vmatpush1.msra.mxu0 %v1967
    %2283 = vmatprep.subr.mxu0 %v1964
    %2284 = vmatpush1.msra.mxu0 %v1963
    %2285 = vmatprep.subr.mxu0 %v1960
    %2286 = vmatpush1.msra.mxu0 %v1959
    %2287 = vmatprep.subr.mxu0 %v1956
    %2288 = vmatpush1.msra.mxu0 %v1955
    %2289 = vmatprep.subr.mxu0 %v1952
    %2290 = vmatpush1.msra.mxu0 %v1951
    %2291 = vmatprep.subr.mxu0 %v1948
    %2292 = vmatpush1.msra.mxu0 %v1947
    %2293 = vmatprep.subr.mxu0 %v1944
    %2294 = vmatpush1.msra.mxu0 %v1943
    %2295 = vmatprep.subr.mxu0 %v1940
    %2296 = vmatpush1.msra.mxu0 %v1939
    %2297 = vmatprep.subr.mxu0 %v1936
    %2298 = vmatpush1.msra.mxu0 %v1935
    %2299 = vmatprep.subr.mxu0 %v1932
    %2300 = vmatpush1.msra.mxu0 %v1931
    %2301 = vmatprep.subr.mxu0 %v1928
    %2302 = vmatpush1.msra.mxu0 %v1927
    %2303 = vmatprep.subr.mxu0 %v1924
    %2304 = vmatpush1.msra.mxu0 %v1923
    %2305 = vmatprep.subr.mxu0 %v1920
    %2306 = vmatpush1.msra.mxu0 %v1919
    %2307 = vmatprep.subr.mxu0 %v1916
    %2308 = vmatpush1.msra.mxu0 %v1915
    %2309 = vmatprep.subr.mxu0 %v2040
    %2310 = vmatpush2.msra.mxu0 %v2039
    %2311 = vmatprep.subr.mxu0 %v2036
    %2312 = vmatpush2.msra.mxu0 %v2035
    %2313 = vmatprep.subr.mxu0 %v2032
    %2314 = vmatpush2.msra.mxu0 %v2031
    %2315 = vmatprep.subr.mxu0 %v2028
    %2316 = vmatpush2.msra.mxu0 %v2027
    %2317 = vmatprep.subr.mxu0 %v2024
    %2318 = vmatpush2.msra.mxu0 %v2023
    %2319 = vmatprep.subr.mxu0 %v2020
    %2320 = vmatpush2.msra.mxu0 %v2019
    %2321 = vmatprep.subr.mxu0 %v2016
    %2322 = vmatpush2.msra.mxu0 %v2015
    %2323 = vmatprep.subr.mxu0 %v2012
    %2324 = vmatpush2.msra.mxu0 %v2011
    %2325 = vmatprep.subr.mxu0 %v2008
    %2326 = vmatpush2.msra.mxu0 %v2007
    %2327 = vmatprep.subr.mxu0 %v2004
    %2328 = vmatpush2.msra.mxu0 %v2003
    %2329 = vmatprep.subr.mxu0 %v2000
    %2330 = vmatpush2.msra.mxu0 %v1999
    %2331 = vmatprep.subr.mxu0 %v1996
    %2332 = vmatpush2.msra.mxu0 %v1995
    %2333 = vmatprep.subr.mxu0 %v1992
    %2334 = vmatpush2.msra.mxu0 %v1991
    %2335 = vmatprep.subr.mxu0 %v1988
    %2336 = vmatpush2.msra.mxu0 %v1987
    %2337 = vmatprep.subr.mxu0 %v1984
    %2338 = vmatpush2.msra.mxu0 %v1983
    %2339 = vmatprep.subr.mxu0 %v1980
    %2340 = vmatpush2.msra.mxu0 %v1979
    %2341 = vmatprep.mubr.f32.mxu0 %v1783
    %2342 = vmatmul.mubr.f32.gmra.mxu0 %v1782
    %v2343 = vpop.f32.mrf.mxu0
    %v2344 = vadd.f32 %v2273, %v2343
    %v2345 = vpop.f32.mrf.mxu0
    %v2346 = vadd.f32 %v2275, %v2345
    %2347 = vdwg.mxu0
    %2348 = vst [vmem:[#allocation8] sm:$0xff] %v2202
    %2349 = vst [vmem:[#allocation8 + $0x8] sm:$0xff] %v2204
    %2350 = vst [vmem:[#allocation8 + $0x10] sm:$0xff] %v2344
    %2351 = vst [vmem:[#allocation8 + $0x18] sm:$0xff] %v2346
    // Predicated region
    $region26: #{tpu_custom_call.1} parent=1 // pred_check
      _
    $region27: #{tpu_custom_call.1} parent=1 // pred_check_branch
      %2353 = sbr.rel (0) target = $region29
    $region28: #{tpu_custom_call.1} parent=1 // pred_region
      %s2355 = ssub.s32 512, 512
      %2356 = vsyncadd [#allocation4], %s2355
      %s2358 = sshll.u32 [#allocation8], 4
      %s2359 = int_to_ptr.vmem [resolvable:$true] %s2358
      %2361 = dma.vmem_to_hbm [thread:$0]  %s2359, 512, %s3, [#allocation4]
    $region29: #{tpu_custom_call.1} parent=1 // pred_fallthru
      _
    // Predicated region
    $region30: #{tpu_custom_call.1} parent=1 // pred_check
      _
    $region31: #{tpu_custom_call.1} parent=1 // pred_check_branch
      %2363 = sbr.rel (0) target = $region33
    $region32: #{tpu_custom_call.1} parent=1 // pred_region
      %2364 = dma.done [#allocation4], 512
    $region33: #{tpu_custom_call.1} parent=1 // pred_fallthru
      _
    %2365 = vsyncpa [#allocation3], 1
    %2366 = vsyncpa [#allocation6], 1
    %2367 = vsyncpa [#allocation4], 1

</llo_original>
